<compile_context>
chip_gen: v7x
topology: tpu7x:2x2x1
jax: 0.10.0
libtpu: 0.0.40
codegen_flags: <defaults>
</compile_context>

<pallas_src>
import functools

import jax
import jax.numpy as jnp
import numpy as np
from jax.experimental import pallas as pl
from jax.experimental.pallas import tpu as pltpu

_BN_EPS = 1e-5
_MAX_TM, _MAX_TN, _MAX_TK = 512, 256, 512   # bf16 tiles: ~3 MiB of VMEM buffers


def _round_up(x, m):
    return ((x + m - 1) // m) * m


def _pick_tile(dim, max_tile, mult=128):
    """Largest tile <= max_tile that is a multiple of `mult` and divides `dim`."""
    if dim <= max_tile:
        return dim
    t = (max_tile // mult) * mult
    while t > mult and dim % t != 0:
        t -= mult
    return t


# ---------------------------------------------------------------------------
# Tiled batched matmul kernel with fused scale/shift + activation epilogue
# ---------------------------------------------------------------------------
def _matmul_epilogue_kernel(x_ref, w_ref, scale_ref, shift_ref, o_ref, acc_ref,
                            *, act):
    @pl.when(pl.program_id(3) == 0)
    def _init():
        acc_ref[...] = jnp.zeros_like(acc_ref)

    acc_ref[...] += jnp.dot(x_ref[...], w_ref[...],
                            preferred_element_type=jnp.float32)

    @pl.when(pl.program_id(3) == pl.num_programs(3) - 1)
    def _finish():
        y = acc_ref[...] * scale_ref[...] + shift_ref[...]
        if act == "relu":
            y = jnp.maximum(y, 0.0)
        elif act == "tanh":
            y = jnp.tanh(y)
        o_ref[...] = y.astype(o_ref.dtype)


def fused_matmul(x, w, scale, shift, *, act, out_dtype, m_valid, n_valid):
    """(G, M, K) @ (G, Kp, Np) with fused per-column scale/shift + activation.

    `w`, `scale`, `shift` are expected pre-padded (Kp, Np multiples of 128).
    Returns (G, m_valid, n_valid).
    """
    G, M, K = x.shape
    Gw, Kp, Np = w.shape
    assert Gw == G and K <= Kp and Kp % 128 == 0 and Np % 128 == 0

    Mp = _round_up(max(M, 16), 16)
    tm = Mp if Mp <= _MAX_TM else _MAX_TM
    Mp = _round_up(Mp, tm)
    tk = _pick_tile(Kp, _MAX_TK)
    tn = _pick_tile(Np, _MAX_TN)

    if (Mp, Kp) != (M, K):
        x = jnp.pad(x, ((0, 0), (0, Mp - M), (0, Kp - K)))

    grid = (G, Mp // tm, Np // tn, Kp // tk)
    out_itemsize = np.dtype(out_dtype).itemsize
    cost = pl.CostEstimate(
        flops=2 * G * Mp * Np * Kp,
        transcendentals=G * Mp * Np if act == "tanh" else 0,
        bytes_accessed=(x.size * x.dtype.itemsize + w.size * w.dtype.itemsize
                        + G * Mp * Np * out_itemsize))

    out = pl.pallas_call(
        functools.partial(_matmul_epilogue_kernel, act=act),
        grid=grid,
        in_specs=[
            pl.BlockSpec((None, tm, tk), lambda g, i, j, k: (g, i, k)),
            pl.BlockSpec((None, tk, tn), lambda g, i, j, k: (g, k, j)),
            pl.BlockSpec((1, tn), lambda g, i, j, k: (0, j)),
            pl.BlockSpec((1, tn), lambda g, i, j, k: (0, j)),
        ],
        out_specs=pl.BlockSpec((None, tm, tn), lambda g, i, j, k: (g, i, j)),
        out_shape=jax.ShapeDtypeStruct((G, Mp, Np), out_dtype),
        scratch_shapes=[pltpu.VMEM((tm, tn), jnp.float32)],
        compiler_params=pltpu.CompilerParams(
            dimension_semantics=("parallel", "parallel", "parallel", "arbitrary")),
        cost_estimate=cost,
    )(x, w, scale, shift)
    return out[:, :m_valid, :n_valid]


# ---------------------------------------------------------------------------
# Layer wrappers (NHWC activations)
# ---------------------------------------------------------------------------
def project_layer(z, layer, compute_dtype):
    """ConvT(latent->C1, k4, s1, p0) on a 1x1 latent == one matmul -> (N,4,4,C1)."""
    nb = z.shape[0]
    c1 = layer["cout"]
    x = z.reshape(nb, -1)[None].astype(compute_dtype)              # (1, N, latent)
    y = fused_matmul(x, layer["w"], layer["scale"], layer["shift"],
                     act=layer["act"], out_dtype=layer["out_dtype"],
                     m_valid=nb, n_valid=16 * c1)
    return y[0].reshape(nb, 4, 4, c1)                              # cols = (kh,kw,co)


def deconv2x_layer(x, layer, compute_dtype):
    """ConvT(k4, s2, p1) via sub-pixel decomposition: 4 batched 2x2-tap matmuls."""
    n, h, w_sp, cin = x.shape
    cout = layer["cout"]
    xp = jnp.pad(x, ((0, 0), (1, 1), (1, 1), (0, 0)))              # pad H, W by 1
    subs = []
    for a in (0, 1):
        for b in (0, 1):
            taps = [xp[:, a + di:a + di + h, b + dj:b + dj + w_sp, :]
                    for di in (0, 1) for dj in (0, 1)]
            subs.append(jnp.concatenate(taps, axis=-1))            # (N,H,W,4*Cin)
    xcols = jnp.stack(subs, axis=0).reshape(4, n * h * w_sp, 4 * cin)
    xcols = xcols.astype(compute_dtype)

    y = fused_matmul(xcols, layer["w"], layer["scale"], layer["shift"],
                     act=layer["act"], out_dtype=layer["out_dtype"],
                     m_valid=n * h * w_sp, n_valid=cout)
    # interleave the 4 sub-grids: out[n, 2m+a, 2l+b, :] = y[a, b, n, m, l, :]
    y = y.reshape(2, 2, n, h, w_sp, cout).transpose(2, 3, 0, 4, 1, 5)
    return y.reshape(n, 2 * h, 2 * w_sp, cout)


def generator_forward(z, plan, compute_dtype=jnp.bfloat16):
    x = project_layer(z, plan[0], compute_dtype)
    for layer in plan[1:]:
        x = deconv2x_layer(x, layer, compute_dtype)
    return x.transpose(0, 3, 1, 2)                                 # NHWC -> NCHW


# ---------------------------------------------------------------------------
# Parameter init (PyTorch layout) + one-time kernel-ready "plan"
# ---------------------------------------------------------------------------
def init_generator_params(key, latent_dim, channels, img_size=32,
                          widths=(1024, 512, 256)):
    assert img_size == 32, "only img_size=32 supported (see TODO above)"
    defs = [(latent_dim, widths[0], True),
            (widths[0], widths[1], True),
            (widths[1], widths[2], True),
            (widths[2], channels, False)]
    layers = []
    for cin, cout, has_bn in defs:
        key, kw, kb, k1, k2, k3, k4 = jax.random.split(key, 7)
        wstd = float(np.sqrt(2.0 / (cin * 4.0)))
        w = jax.random.normal(kw, (cin, cout, 4, 4), jnp.float32) * wstd
        b = jax.random.normal(kb, (cout,), jnp.float32) * 0.05
        bn = None
        if has_bn:
            gamma = jax.random.uniform(k1, (cout,), jnp.float32, 0.8, 1.2)
            beta = jax.random.normal(k2, (cout,), jnp.float32) * 0.1
            rmean = jax.random.normal(k3, (cout,), jnp.float32) * 0.1
            rvar = jax.random.uniform(k4, (cout,), jnp.float32, 0.8, 1.2)
            bn = (gamma, beta, rmean, rvar)
        layers.append(dict(w=w, b=b, bn=bn))
    return dict(layers=layers)


def _fold_bn(bias, bn):
    if bn is None:
        return jnp.ones_like(bias), bias.astype(jnp.float32)
    gamma, beta, rmean, rvar = bn
    s = gamma / jnp.sqrt(rvar + _BN_EPS)
    return s, s * (bias - rmean) + beta


def prepare_plan(params, compute_dtype=jnp.bfloat16):
    """Pad / reorder / cast all weights once (outside the hot forward path)."""
    layers = []

    # --- layer 0: latent projection ---------------------------------------
    p0 = params["layers"][0]
    latent, c1 = p0["w"].shape[0], p0["w"].shape[1]
    wm = p0["w"].transpose(0, 2, 3, 1).reshape(latent, 16 * c1)    # cols=(kh,kw,co)
    s, sh = _fold_bn(p0["b"], p0["bn"])
    kp, npad = _round_up(latent, 128), _round_up(16 * c1, 128)
    layers.append(dict(
        w=jnp.zeros((1, kp, npad), compute_dtype)
            .at[0, :latent, :16 * c1].set(wm.astype(compute_dtype)),
        scale=jnp.zeros((1, npad), jnp.float32).at[0, :16 * c1].set(jnp.tile(s, 16)),
        shift=jnp.zeros((1, npad), jnp.float32).at[0, :16 * c1].set(jnp.tile(sh, 16)),
        cout=c1, act="relu", out_dtype=compute_dtype))

    # --- stride-2 deconv layers --------------------------------------------
    for p in params["layers"][1:]:
        w = p["w"]                                                 # (Cin, Cout, 4, 4)
        cin, cout = w.shape[0], w.shape[1]
        mats = []
        for a in (0, 1):
            for b in (0, 1):
                taps = [w[:, :, 3 - a - 2 * di, 3 - b - 2 * dj]
                        for di in (0, 1) for dj in (0, 1)]         # each (Cin, Cout)
                mats.append(jnp.concatenate(taps, axis=0))         # (4*Cin, Cout)
        wsub = jnp.stack(mats, axis=0)                             # (4, 4*Cin, Cout)
        s, sh = _fold_bn(p["b"], p["bn"])
        act = "relu" if p["bn"] is not None else "tanh"
        out_dtype = compute_dtype if p["bn"] is not None else jnp.float32
        kp, npad = _round_up(4 * cin, 128), _round_up(cout, 128)
        layers.append(dict(
            w=jnp.zeros((4, kp, npad), compute_dtype)
                .at[:, :4 * cin, :cout].set(wsub.astype(compute_dtype)),
            scale=jnp.zeros((1, npad), jnp.float32).at[0, :cout].set(s),
            shift=jnp.zeros((1, npad), jnp.float32).at[0, :cout].set(sh),
            cout=cout, act=act, out_dtype=out_dtype))
    return layers


# ---------------------------------------------------------------------------
# Pure-JAX reference (fractionally-strided conv)
# ---------------------------------------------------------------------------
def reference_forward(z, params):
    x = z.reshape(z.shape[0], -1)[:, :, None, None]
    strides, pads = [1, 2, 2, 2], [0, 1, 1, 1]
    for i, layer in enumerate(params["layers"]):
        w, b = layer["w"], layer["b"]
        k, s, p = w.shape[-1], strides[i], pads[i]
        w_conv = jnp.flip(w, (2, 3)).transpose(1, 0, 2, 3)          # OIHW
        x = jax.lax.conv_general_dilated(
            x, w_conv, window_strides=(1, 1),
            padding=[(k - 1 - p, k - 1 - p)] * 2, lhs_dilation=(s, s),
            dimension_numbers=("NCHW", "OIHW", "NCHW"),
            precision=jax.lax.Precision.HIGHEST)
        x = x + b[None, :, None, None]
        if layer["bn"] is not None:
            g, beta, rm, rv = layer["bn"]
            x = (g[None, :, None, None] * (x - rm[None, :, None, None])
                 / jnp.sqrt(rv + _BN_EPS)[None, :, None, None]
                 + beta[None, :, None, None])
            x = jnp.maximum(x, 0.0)
    return jnp.tanh(x)


if __name__ == "__main__":
    key = jax.random.PRNGKey(0)
    key, kz = jax.random.split(key)

    batch, latent_dim, channels, img_size = 2, 8, 3, 32
    widths = (64, 32, 16)          # small stand-in for the module's (1024, 512, 256)

    z = jax.random.normal(kz, (batch, latent_dim, 1, 1), jnp.float32)
    params = init_generator_params(key, latent_dim, channels, img_size, widths)

    # Fast bf16 path (the performance configuration).
    plan_bf16 = prepare_plan(params, jnp.bfloat16)
    fwd_bf16 = jax.jit(lambda zz: generator_forward(zz, plan_bf16, jnp.bfloat16))
    out = jax.block_until_ready(fwd_bf16(z))
    assert out.shape == (batch, channels, img_size, img_size), out.shape

    # f32 path for a tight algorithmic check.
    plan_f32 = prepare_plan(params, jnp.float32)
    fwd_f32 = jax.jit(lambda zz: generator_forward(zz, plan_f32, jnp.float32))
    out_f32 = jax.block_until_ready(fwd_f32(z))

    ref = reference_forward(z, params)
    np.testing.assert_allclose(np.asarray(out_f32), np.asarray(ref),
                               rtol=2e-2, atol=2e-2)
    np.testing.assert_allclose(np.asarray(out), np.asarray(ref),
                               rtol=1e-1, atol=1e-1)
    print("KERNEL_OK")
</pallas_src>

<mosaic_0001>
module attributes {stable_mosaic.version = 11 : i64} {
  func.func @_matmul_epilogue_kernel(%arg0: i32, %arg1: i32, %arg2: i32, %arg3: i32, %arg4: memref<1x16x128xbf16, #tpu.memory_space<vmem>>, %arg5: memref<1x128x256xbf16, #tpu.memory_space<vmem>>, %arg6: memref<1x256xf32, #tpu.memory_space<vmem>>, %arg7: memref<1x256xf32, #tpu.memory_space<vmem>>, %arg8: memref<1x16x256xbf16, #tpu.memory_space<vmem>>, %arg9: memref<16x256xf32, #tpu.memory_space<vmem>>) attributes {dimension_semantics = [#tpu.dimension_semantics<parallel>, #tpu.dimension_semantics<parallel>, #tpu.dimension_semantics<parallel>, #tpu.dimension_semantics<arbitrary>], iteration_bounds = array<i64: 1, 1, 4, 1>, scalar_prefetch = 0 : i64, scratch_operands = 1 : i64, tpu.core_type = #tpu.core_type<tc>, window_params = [{transform_indices = @transform_0, window_bounds = array<i64: 1, 16, 128>}, {transform_indices = @transform_1, window_bounds = array<i64: 1, 128, 256>}, {transform_indices = @transform_2, window_bounds = array<i64: 1, 256>}, {transform_indices = @transform_3, window_bounds = array<i64: 1, 256>}, {transform_indices = @transform_4, window_bounds = array<i64: 1, 16, 256>}]} {
    %c0_i32 = arith.constant 0 : i32
    %0 = arith.cmpi eq, %arg3, %c0_i32 : i32
    %1 = arith.extui %0 : i1 to i32
    %c0_i32_0 = arith.constant 0 : i32
    %2 = arith.cmpi ne, %1, %c0_i32_0 : i32
    scf.if %2 {
      %cst_12 = arith.constant 0.000000e+00 : f32
      %14 = vector.broadcast %cst_12 : f32 to vector<16x256xf32>
      %c0_13 = arith.constant 0 : index
      %c0_14 = arith.constant 0 : index
      %15 = vector.load %arg9[%c0_13, %c0_14] : memref<16x256xf32, #tpu.memory_space<vmem>>, vector<16x256xf32>
      tpu.vector_store %arg9[%c0_13, %c0_14], %14 {strides = array<i32>} : memref<16x256xf32, #tpu.memory_space<vmem>>, vector<16x256xf32>,
    } else {
    }
    %c0 = arith.constant 0 : index
    %c0_1 = arith.constant 0 : index
    %3 = vector.load %arg9[%c0, %c0_1] : memref<16x256xf32, #tpu.memory_space<vmem>>, vector<16x256xf32>
    %c0_2 = arith.constant 0 : index
    %c0_3 = arith.constant 0 : index
    %c0_4 = arith.constant 0 : index
    %4 = vector.load %arg4[%c0_2, %c0_3, %c0_4] : memref<1x16x128xbf16, #tpu.memory_space<vmem>>, vector<1x16x128xbf16>
    %5 = vector.shape_cast %4 : vector<1x16x128xbf16> to vector<16x128xbf16>
    %c0_5 = arith.constant 0 : index
    %c0_6 = arith.constant 0 : index
    %c0_7 = arith.constant 0 : index
    %6 = vector.load %arg5[%c0_5, %c0_6, %c0_7] : memref<1x128x256xbf16, #tpu.memory_space<vmem>>, vector<1x128x256xbf16>
    %7 = vector.shape_cast %6 : vector<1x128x256xbf16> to vector<128x256xbf16>
    %cst = arith.constant dense<0.000000e+00> : vector<16x256xf32>
    %8 = tpu.matmul %5, %7, %cst {dimension_numbers = #tpu.dot_dimension_numbers<[1], [0], [0], [1], [0, 0, 1, 1], [], []>} : vector<16x128xbf16>, vector<128x256xbf16>, vector<16x256xf32> -> vector<16x256xf32>
    %9 = arith.addf %3, %8 : vector<16x256xf32>
    %c0_8 = arith.constant 0 : index
    %c0_9 = arith.constant 0 : index
    %10 = vector.load %arg9[%c0_8, %c0_9] : memref<16x256xf32, #tpu.memory_space<vmem>>, vector<16x256xf32>
    tpu.vector_store %arg9[%c0_8, %c0_9], %9 {strides = array<i32>} : memref<16x256xf32, #tpu.memory_space<vmem>>, vector<16x256xf32>,
    %c0_i32_10 = arith.constant 0 : i32
    %11 = arith.cmpi eq, %arg3, %c0_i32_10 : i32
    %12 = arith.extui %11 : i1 to i32
    %c0_i32_11 = arith.constant 0 : i32
    %13 = arith.cmpi ne, %12, %c0_i32_11 : i32
    scf.if %13 {
      %c0_12 = arith.constant 0 : index
      %c0_13 = arith.constant 0 : index
      %14 = vector.load %arg9[%c0_12, %c0_13] : memref<16x256xf32, #tpu.memory_space<vmem>>, vector<16x256xf32>
      %c0_14 = arith.constant 0 : index
      %c0_15 = arith.constant 0 : index
      %15 = vector.load %arg6[%c0_14, %c0_15] : memref<1x256xf32, #tpu.memory_space<vmem>>, vector<1x256xf32>
      %16 = vector.broadcast %15 : vector<1x256xf32> to vector<16x256xf32>
      %17 = arith.mulf %14, %16 : vector<16x256xf32>
      %c0_16 = arith.constant 0 : index
      %c0_17 = arith.constant 0 : index
      %18 = vector.load %arg7[%c0_16, %c0_17] : memref<1x256xf32, #tpu.memory_space<vmem>>, vector<1x256xf32>
      %19 = vector.broadcast %18 : vector<1x256xf32> to vector<16x256xf32>
      %20 = arith.addf %17, %19 : vector<16x256xf32>
      %cst_18 = arith.constant 0.000000e+00 : f32
      %21 = vector.broadcast %cst_18 : f32 to vector<16x256xf32>
      %22 = arith.maximumf %20, %21 : vector<16x256xf32>
      %23 = arith.truncf %22 : vector<16x256xf32> to vector<16x256xbf16>
      %c0_19 = arith.constant 0 : index
      %c0_20 = arith.constant 0 : index
      %c0_21 = arith.constant 0 : index
      %24 = vector.load %arg8[%c0_19, %c0_20, %c0_21] : memref<1x16x256xbf16, #tpu.memory_space<vmem>>, vector<1x16x256xbf16>
      %25 = vector.shape_cast %24 : vector<1x16x256xbf16> to vector<16x256xbf16>
      %26 = vector.shape_cast %23 : vector<16x256xbf16> to vector<1x16x256xbf16>
      tpu.vector_store %arg8[%c0_19, %c0_20, %c0_21], %26 {strides = array<i32>} : memref<1x16x256xbf16, #tpu.memory_space<vmem>>, vector<1x16x256xbf16>,
    } else {
    }
    return
  }
  func.func @transform_0(%arg0: i32, %arg1: i32, %arg2: i32, %arg3: i32) -> (i32, i32, i32) {
    %c0_i32 = arith.constant 0 : i32
    return %arg0, %arg1, %arg3 : i32, i32, i32
  }
  func.func @transform_1(%arg0: i32, %arg1: i32, %arg2: i32, %arg3: i32) -> (i32, i32, i32) {
    %c0_i32 = arith.constant 0 : i32
    return %arg0, %arg3, %arg2 : i32, i32, i32
  }
  func.func @transform_2(%arg0: i32, %arg1: i32, %arg2: i32, %arg3: i32) -> (i32, i32) {
    %c0_i32 = arith.constant 0 : i32
    %c0_i32_0 = arith.constant 0 : i32
    return %c0_i32, %arg2 : i32, i32
  }
  func.func @transform_3(%arg0: i32, %arg1: i32, %arg2: i32, %arg3: i32) -> (i32, i32) {
    %c0_i32 = arith.constant 0 : i32
    %c0_i32_0 = arith.constant 0 : i32
    return %c0_i32, %arg2 : i32, i32
  }
  func.func @transform_4(%arg0: i32, %arg1: i32, %arg2: i32, %arg3: i32) -> (i32, i32, i32) {
    %c0_i32 = arith.constant 0 : i32
    return %arg0, %arg1, %arg2 : i32, i32, i32
  }
}

module attributes {stable_mosaic.version = 11 : i64} {
  func.func @_matmul_epilogue_kernel(%arg0: i32, %arg1: i32, %arg2: i32, %arg3: i32, %arg4: memref<1x32x256xbf16, #tpu.memory_space<vmem>>, %arg5: memref<1x256x128xbf16, #tpu.memory_space<vmem>>, %arg6: memref<1x128xf32, #tpu.memory_space<vmem>>, %arg7: memref<1x128xf32, #tpu.memory_space<vmem>>, %arg8: memref<1x32x128xbf16, #tpu.memory_space<vmem>>, %arg9: memref<32x128xf32, #tpu.memory_space<vmem>>) attributes {dimension_semantics = [#tpu.dimension_semantics<parallel>, #tpu.dimension_semantics<parallel>, #tpu.dimension_semantics<parallel>, #tpu.dimension_semantics<arbitrary>], iteration_bounds = array<i64: 4, 1, 1, 1>, scalar_prefetch = 0 : i64, scratch_operands = 1 : i64, tpu.core_type = #tpu.core_type<tc>, window_params = [{transform_indices = @transform_0, window_bounds = array<i64: 1, 32, 256>}, {transform_indices = @transform_1, window_bounds = array<i64: 1, 256, 128>}, {transform_indices = @transform_2, window_bounds = array<i64: 1, 128>}, {transform_indices = @transform_3, window_bounds = array<i64: 1, 128>}, {transform_indices = @transform_4, window_bounds = array<i64: 1, 32, 128>}]} {
    %c0_i32 = arith.constant 0 : i32
    %0 = arith.cmpi eq, %arg3, %c0_i32 : i32
    %1 = arith.extui %0 : i1 to i32
    %c0_i32_0 = arith.constant 0 : i32
    %2 = arith.cmpi ne, %1, %c0_i32_0 : i32
    scf.if %2 {
      %cst_12 = arith.constant 0.000000e+00 : f32
      %14 = vector.broadcast %cst_12 : f32 to vector<32x128xf32>
      %c0_13 = arith.constant 0 : index
      %c0_14 = arith.constant 0 : index
      %15 = vector.load %arg9[%c0_13, %c0_14] : memref<32x128xf32, #tpu.memory_space<vmem>>, vector<32x128xf32>
      tpu.vector_store %arg9[%c0_13, %c0_14], %14 {strides = array<i32>} : memref<32x128xf32, #tpu.memory_space<vmem>>, vector<32x128xf32>,
    } else {
    }
    %c0 = arith.constant 0 : index
    %c0_1 = arith.constant 0 : index
    %3 = vector.load %arg9[%c0, %c0_1] : memref<32x128xf32, #tpu.memory_space<vmem>>, vector<32x128xf32>
    %c0_2 = arith.constant 0 : index
    %c0_3 = arith.constant 0 : index
    %c0_4 = arith.constant 0 : index
    %4 = vector.load %arg4[%c0_2, %c0_3, %c0_4] : memref<1x32x256xbf16, #tpu.memory_space<vmem>>, vector<1x32x256xbf16>
    %5 = vector.shape_cast %4 : vector<1x32x256xbf16> to vector<32x256xbf16>
    %c0_5 = arith.constant 0 : index
    %c0_6 = arith.constant 0 : index
    %c0_7 = arith.constant 0 : index
    %6 = vector.load %arg5[%c0_5, %c0_6, %c0_7] : memref<1x256x128xbf16, #tpu.memory_space<vmem>>, vector<1x256x128xbf16>
    %7 = vector.shape_cast %6 : vector<1x256x128xbf16> to vector<256x128xbf16>
    %cst = arith.constant dense<0.000000e+00> : vector<32x128xf32>
    %8 = tpu.matmul %5, %7, %cst {dimension_numbers = #tpu.dot_dimension_numbers<[1], [0], [0], [1], [0, 0, 1, 1], [], []>} : vector<32x256xbf16>, vector<256x128xbf16>, vector<32x128xf32> -> vector<32x128xf32>
    %9 = arith.addf %3, %8 : vector<32x128xf32>
    %c0_8 = arith.constant 0 : index
    %c0_9 = arith.constant 0 : index
    %10 = vector.load %arg9[%c0_8, %c0_9] : memref<32x128xf32, #tpu.memory_space<vmem>>, vector<32x128xf32>
    tpu.vector_store %arg9[%c0_8, %c0_9], %9 {strides = array<i32>} : memref<32x128xf32, #tpu.memory_space<vmem>>, vector<32x128xf32>,
    %c0_i32_10 = arith.constant 0 : i32
    %11 = arith.cmpi eq, %arg3, %c0_i32_10 : i32
    %12 = arith.extui %11 : i1 to i32
    %c0_i32_11 = arith.constant 0 : i32
    %13 = arith.cmpi ne, %12, %c0_i32_11 : i32
    scf.if %13 {
      %c0_12 = arith.constant 0 : index
      %c0_13 = arith.constant 0 : index
      %14 = vector.load %arg9[%c0_12, %c0_13] : memref<32x128xf32, #tpu.memory_space<vmem>>, vector<32x128xf32>
      %c0_14 = arith.constant 0 : index
      %c0_15 = arith.constant 0 : index
      %15 = vector.load %arg6[%c0_14, %c0_15] : memref<1x128xf32, #tpu.memory_space<vmem>>, vector<1x128xf32>
      %16 = vector.broadcast %15 : vector<1x128xf32> to vector<32x128xf32>
      %17 = arith.mulf %14, %16 : vector<32x128xf32>
      %c0_16 = arith.constant 0 : index
      %c0_17 = arith.constant 0 : index
      %18 = vector.load %arg7[%c0_16, %c0_17] : memref<1x128xf32, #tpu.memory_space<vmem>>, vector<1x128xf32>
      %19 = vector.broadcast %18 : vector<1x128xf32> to vector<32x128xf32>
      %20 = arith.addf %17, %19 : vector<32x128xf32>
      %cst_18 = arith.constant 0.000000e+00 : f32
      %21 = vector.broadcast %cst_18 : f32 to vector<32x128xf32>
      %22 = arith.maximumf %20, %21 : vector<32x128xf32>
      %23 = arith.truncf %22 : vector<32x128xf32> to vector<32x128xbf16>
      %c0_19 = arith.constant 0 : index
      %c0_20 = arith.constant 0 : index
      %c0_21 = arith.constant 0 : index
      %24 = vector.load %arg8[%c0_19, %c0_20, %c0_21] : memref<1x32x128xbf16, #tpu.memory_space<vmem>>, vector<1x32x128xbf16>
      %25 = vector.shape_cast %24 : vector<1x32x128xbf16> to vector<32x128xbf16>
      %26 = vector.shape_cast %23 : vector<32x128xbf16> to vector<1x32x128xbf16>
      tpu.vector_store %arg8[%c0_19, %c0_20, %c0_21], %26 {strides = array<i32>} : memref<1x32x128xbf16, #tpu.memory_space<vmem>>, vector<1x32x128xbf16>,
    } else {
    }
    return
  }
  func.func @transform_0(%arg0: i32, %arg1: i32, %arg2: i32, %arg3: i32) -> (i32, i32, i32) {
    %c0_i32 = arith.constant 0 : i32
    return %arg0, %arg1, %arg3 : i32, i32, i32
  }
  func.func @transform_1(%arg0: i32, %arg1: i32, %arg2: i32, %arg3: i32) -> (i32, i32, i32) {
    %c0_i32 = arith.constant 0 : i32
    return %arg0, %arg3, %arg2 : i32, i32, i32
  }
  func.func @transform_2(%arg0: i32, %arg1: i32, %arg2: i32, %arg3: i32) -> (i32, i32) {
    %c0_i32 = arith.constant 0 : i32
    %c0_i32_0 = arith.constant 0 : i32
    return %c0_i32, %arg2 : i32, i32
  }
  func.func @transform_3(%arg0: i32, %arg1: i32, %arg2: i32, %arg3: i32) -> (i32, i32) {
    %c0_i32 = arith.constant 0 : i32
    %c0_i32_0 = arith.constant 0 : i32
    return %c0_i32, %arg2 : i32, i32
  }
  func.func @transform_4(%arg0: i32, %arg1: i32, %arg2: i32, %arg3: i32) -> (i32, i32, i32) {
    %c0_i32 = arith.constant 0 : i32
    return %arg0, %arg1, %arg2 : i32, i32, i32
  }
}

module attributes {stable_mosaic.version = 11 : i64} {
  func.func @_matmul_epilogue_kernel(%arg0: i32, %arg1: i32, %arg2: i32, %arg3: i32, %arg4: memref<1x128x128xbf16, #tpu.memory_space<vmem>>, %arg5: memref<1x128x128xbf16, #tpu.memory_space<vmem>>, %arg6: memref<1x128xf32, #tpu.memory_space<vmem>>, %arg7: memref<1x128xf32, #tpu.memory_space<vmem>>, %arg8: memref<1x128x128xbf16, #tpu.memory_space<vmem>>, %arg9: memref<128x128xf32, #tpu.memory_space<vmem>>) attributes {dimension_semantics = [#tpu.dimension_semantics<parallel>, #tpu.dimension_semantics<parallel>, #tpu.dimension_semantics<parallel>, #tpu.dimension_semantics<arbitrary>], iteration_bounds = array<i64: 4, 1, 1, 1>, scalar_prefetch = 0 : i64, scratch_operands = 1 : i64, tpu.core_type = #tpu.core_type<tc>, window_params = [{transform_indices = @transform_0, window_bounds = array<i64: 1, 128, 128>}, {transform_indices = @transform_1, window_bounds = array<i64: 1, 128, 128>}, {transform_indices = @transform_2, window_bounds = array<i64: 1, 128>}, {transform_indices = @transform_3, window_bounds = array<i64: 1, 128>}, {transform_indices = @transform_4, window_bounds = array<i64: 1, 128, 128>}]} {
    %c0_i32 = arith.constant 0 : i32
    %0 = arith.cmpi eq, %arg3, %c0_i32 : i32
    %1 = arith.extui %0 : i1 to i32
    %c0_i32_0 = arith.constant 0 : i32
    %2 = arith.cmpi ne, %1, %c0_i32_0 : i32
    scf.if %2 {
      %cst_12 = arith.constant 0.000000e+00 : f32
      %14 = vector.broadcast %cst_12 : f32 to vector<128x128xf32>
      %c0_13 = arith.constant 0 : index
      %c0_14 = arith.constant 0 : index
      %15 = vector.load %arg9[%c0_13, %c0_14] : memref<128x128xf32, #tpu.memory_space<vmem>>, vector<128x128xf32>
      tpu.vector_store %arg9[%c0_13, %c0_14], %14 {strides = array<i32>} : memref<128x128xf32, #tpu.memory_space<vmem>>, vector<128x128xf32>,
    } else {
    }
    %c0 = arith.constant 0 : index
    %c0_1 = arith.constant 0 : index
    %3 = vector.load %arg9[%c0, %c0_1] : memref<128x128xf32, #tpu.memory_space<vmem>>, vector<128x128xf32>
    %c0_2 = arith.constant 0 : index
    %c0_3 = arith.constant 0 : index
    %c0_4 = arith.constant 0 : index
    %4 = vector.load %arg4[%c0_2, %c0_3, %c0_4] : memref<1x128x128xbf16, #tpu.memory_space<vmem>>, vector<1x128x128xbf16>
    %5 = vector.shape_cast %4 : vector<1x128x128xbf16> to vector<128x128xbf16>
    %c0_5 = arith.constant 0 : index
    %c0_6 = arith.constant 0 : index
    %c0_7 = arith.constant 0 : index
    %6 = vector.load %arg5[%c0_5, %c0_6, %c0_7] : memref<1x128x128xbf16, #tpu.memory_space<vmem>>, vector<1x128x128xbf16>
    %7 = vector.shape_cast %6 : vector<1x128x128xbf16> to vector<128x128xbf16>
    %cst = arith.constant dense<0.000000e+00> : vector<128x128xf32>
    %8 = tpu.matmul %5, %7, %cst {dimension_numbers = #tpu.dot_dimension_numbers<[1], [0], [0], [1], [0, 0, 1, 1], [], []>} : vector<128x128xbf16>, vector<128x128xbf16>, vector<128x128xf32> -> vector<128x128xf32>
    %9 = arith.addf %3, %8 : vector<128x128xf32>
    %c0_8 = arith.constant 0 : index
    %c0_9 = arith.constant 0 : index
    %10 = vector.load %arg9[%c0_8, %c0_9] : memref<128x128xf32, #tpu.memory_space<vmem>>, vector<128x128xf32>
    tpu.vector_store %arg9[%c0_8, %c0_9], %9 {strides = array<i32>} : memref<128x128xf32, #tpu.memory_space<vmem>>, vector<128x128xf32>,
    %c0_i32_10 = arith.constant 0 : i32
    %11 = arith.cmpi eq, %arg3, %c0_i32_10 : i32
    %12 = arith.extui %11 : i1 to i32
    %c0_i32_11 = arith.constant 0 : i32
    %13 = arith.cmpi ne, %12, %c0_i32_11 : i32
    scf.if %13 {
      %c0_12 = arith.constant 0 : index
      %c0_13 = arith.constant 0 : index
      %14 = vector.load %arg9[%c0_12, %c0_13] : memref<128x128xf32, #tpu.memory_space<vmem>>, vector<128x128xf32>
      %c0_14 = arith.constant 0 : index
      %c0_15 = arith.constant 0 : index
      %15 = vector.load %arg6[%c0_14, %c0_15] : memref<1x128xf32, #tpu.memory_space<vmem>>, vector<1x128xf32>
      %16 = vector.broadcast %15 : vector<1x128xf32> to vector<128x128xf32>
      %17 = arith.mulf %14, %16 : vector<128x128xf32>
      %c0_16 = arith.constant 0 : index
      %c0_17 = arith.constant 0 : index
      %18 = vector.load %arg7[%c0_16, %c0_17] : memref<1x128xf32, #tpu.memory_space<vmem>>, vector<1x128xf32>
      %19 = vector.broadcast %18 : vector<1x128xf32> to vector<128x128xf32>
      %20 = arith.addf %17, %19 : vector<128x128xf32>
      %cst_18 = arith.constant 0.000000e+00 : f32
      %21 = vector.broadcast %cst_18 : f32 to vector<128x128xf32>
      %22 = arith.maximumf %20, %21 : vector<128x128xf32>
      %23 = arith.truncf %22 : vector<128x128xf32> to vector<128x128xbf16>
      %c0_19 = arith.constant 0 : index
      %c0_20 = arith.constant 0 : index
      %c0_21 = arith.constant 0 : index
      %24 = vector.load %arg8[%c0_19, %c0_20, %c0_21] : memref<1x128x128xbf16, #tpu.memory_space<vmem>>, vector<1x128x128xbf16>
      %25 = vector.shape_cast %24 : vector<1x128x128xbf16> to vector<128x128xbf16>
      %26 = vector.shape_cast %23 : vector<128x128xbf16> to vector<1x128x128xbf16>
      tpu.vector_store %arg8[%c0_19, %c0_20, %c0_21], %26 {strides = array<i32>} : memref<1x128x128xbf16, #tpu.memory_space<vmem>>, vector<1x128x128xbf16>,
    } else {
    }
    return
  }
  func.func @transform_0(%arg0: i32, %arg1: i32, %arg2: i32, %arg3: i32) -> (i32, i32, i32) {
    %c0_i32 = arith.constant 0 : i32
    return %arg0, %arg1, %arg3 : i32, i32, i32
  }
  func.func @transform_1(%arg0: i32, %arg1: i32, %arg2: i32, %arg3: i32) -> (i32, i32, i32) {
    %c0_i32 = arith.constant 0 : i32
    return %arg0, %arg3, %arg2 : i32, i32, i32
  }
  func.func @transform_2(%arg0: i32, %arg1: i32, %arg2: i32, %arg3: i32) -> (i32, i32) {
    %c0_i32 = arith.constant 0 : i32
    %c0_i32_0 = arith.constant 0 : i32
    return %c0_i32, %arg2 : i32, i32
  }
  func.func @transform_3(%arg0: i32, %arg1: i32, %arg2: i32, %arg3: i32) -> (i32, i32) {
    %c0_i32 = arith.constant 0 : i32
    %c0_i32_0 = arith.constant 0 : i32
    return %c0_i32, %arg2 : i32, i32
  }
  func.func @transform_4(%arg0: i32, %arg1: i32, %arg2: i32, %arg3: i32) -> (i32, i32, i32) {
    %c0_i32 = arith.constant 0 : i32
    return %arg0, %arg1, %arg2 : i32, i32, i32
  }
}

module attributes {stable_mosaic.version = 11 : i64} {
  func.func @_matmul_epilogue_kernel(%arg0: i32, %arg1: i32, %arg2: i32, %arg3: i32, %arg4: memref<1x512x128xbf16, #tpu.memory_space<vmem>>, %arg5: memref<1x128x128xbf16, #tpu.memory_space<vmem>>, %arg6: memref<1x128xf32, #tpu.memory_space<vmem>>, %arg7: memref<1x128xf32, #tpu.memory_space<vmem>>, %arg8: memref<1x512x128xf32, #tpu.memory_space<vmem>>, %arg9: memref<512x128xf32, #tpu.memory_space<vmem>>) attributes {dimension_semantics = [#tpu.dimension_semantics<parallel>, #tpu.dimension_semantics<parallel>, #tpu.dimension_semantics<parallel>, #tpu.dimension_semantics<arbitrary>], iteration_bounds = array<i64: 4, 1, 1, 1>, scalar_prefetch = 0 : i64, scratch_operands = 1 : i64, tpu.core_type = #tpu.core_type<tc>, window_params = [{transform_indices = @transform_0, window_bounds = array<i64: 1, 512, 128>}, {transform_indices = @transform_1, window_bounds = array<i64: 1, 128, 128>}, {transform_indices = @transform_2, window_bounds = array<i64: 1, 128>}, {transform_indices = @transform_3, window_bounds = array<i64: 1, 128>}, {transform_indices = @transform_4, window_bounds = array<i64: 1, 512, 128>}]} {
    %c0_i32 = arith.constant 0 : i32
    %0 = arith.cmpi eq, %arg3, %c0_i32 : i32
    %1 = arith.extui %0 : i1 to i32
    %c0_i32_0 = arith.constant 0 : i32
    %2 = arith.cmpi ne, %1, %c0_i32_0 : i32
    scf.if %2 {
      %cst_12 = arith.constant 0.000000e+00 : f32
      %14 = vector.broadcast %cst_12 : f32 to vector<512x128xf32>
      %c0_13 = arith.constant 0 : index
      %c0_14 = arith.constant 0 : index
      %15 = vector.load %arg9[%c0_13, %c0_14] : memref<512x128xf32, #tpu.memory_space<vmem>>, vector<512x128xf32>
      tpu.vector_store %arg9[%c0_13, %c0_14], %14 {strides = array<i32>} : memref<512x128xf32, #tpu.memory_space<vmem>>, vector<512x128xf32>,
    } else {
    }
    %c0 = arith.constant 0 : index
    %c0_1 = arith.constant 0 : index
    %3 = vector.load %arg9[%c0, %c0_1] : memref<512x128xf32, #tpu.memory_space<vmem>>, vector<512x128xf32>
    %c0_2 = arith.constant 0 : index
    %c0_3 = arith.constant 0 : index
    %c0_4 = arith.constant 0 : index
    %4 = vector.load %arg4[%c0_2, %c0_3, %c0_4] : memref<1x512x128xbf16, #tpu.memory_space<vmem>>, vector<1x512x128xbf16>
    %5 = vector.shape_cast %4 : vector<1x512x128xbf16> to vector<512x128xbf16>
    %c0_5 = arith.constant 0 : index
    %c0_6 = arith.constant 0 : index
    %c0_7 = arith.constant 0 : index
    %6 = vector.load %arg5[%c0_5, %c0_6, %c0_7] : memref<1x128x128xbf16, #tpu.memory_space<vmem>>, vector<1x128x128xbf16>
    %7 = vector.shape_cast %6 : vector<1x128x128xbf16> to vector<128x128xbf16>
    %cst = arith.constant dense<0.000000e+00> : vector<512x128xf32>
    %8 = tpu.matmul %5, %7, %cst {dimension_numbers = #tpu.dot_dimension_numbers<[1], [0], [0], [1], [0, 0, 1, 1], [], []>} : vector<512x128xbf16>, vector<128x128xbf16>, vector<512x128xf32> -> vector<512x128xf32>
    %9 = arith.addf %3, %8 : vector<512x128xf32>
    %c0_8 = arith.constant 0 : index
    %c0_9 = arith.constant 0 : index
    %10 = vector.load %arg9[%c0_8, %c0_9] : memref<512x128xf32, #tpu.memory_space<vmem>>, vector<512x128xf32>
    tpu.vector_store %arg9[%c0_8, %c0_9], %9 {strides = array<i32>} : memref<512x128xf32, #tpu.memory_space<vmem>>, vector<512x128xf32>,
    %c0_i32_10 = arith.constant 0 : i32
    %11 = arith.cmpi eq, %arg3, %c0_i32_10 : i32
    %12 = arith.extui %11 : i1 to i32
    %c0_i32_11 = arith.constant 0 : i32
    %13 = arith.cmpi ne, %12, %c0_i32_11 : i32
    scf.if %13 {
      %c0_12 = arith.constant 0 : index
      %c0_13 = arith.constant 0 : index
      %14 = vector.load %arg9[%c0_12, %c0_13] : memref<512x128xf32, #tpu.memory_space<vmem>>, vector<512x128xf32>
      %c0_14 = arith.constant 0 : index
      %c0_15 = arith.constant 0 : index
      %15 = vector.load %arg6[%c0_14, %c0_15] : memref<1x128xf32, #tpu.memory_space<vmem>>, vector<1x128xf32>
      %16 = vector.broadcast %15 : vector<1x128xf32> to vector<512x128xf32>
      %17 = arith.mulf %14, %16 : vector<512x128xf32>
      %c0_16 = arith.constant 0 : index
      %c0_17 = arith.constant 0 : index
      %18 = vector.load %arg7[%c0_16, %c0_17] : memref<1x128xf32, #tpu.memory_space<vmem>>, vector<1x128xf32>
      %19 = vector.broadcast %18 : vector<1x128xf32> to vector<512x128xf32>
      %20 = arith.addf %17, %19 : vector<512x128xf32>
      %21 = math.tanh %20 : vector<512x128xf32>
      %c0_18 = arith.constant 0 : index
      %c0_19 = arith.constant 0 : index
      %c0_20 = arith.constant 0 : index
      %22 = vector.load %arg8[%c0_18, %c0_19, %c0_20] : memref<1x512x128xf32, #tpu.memory_space<vmem>>, vector<1x512x128xf32>
      %23 = vector.shape_cast %22 : vector<1x512x128xf32> to vector<512x128xf32>
      %24 = vector.shape_cast %21 : vector<512x128xf32> to vector<1x512x128xf32>
      tpu.vector_store %arg8[%c0_18, %c0_19, %c0_20], %24 {strides = array<i32>} : memref<1x512x128xf32, #tpu.memory_space<vmem>>, vector<1x512x128xf32>,
    } else {
    }
    return
  }
  func.func @transform_0(%arg0: i32, %arg1: i32, %arg2: i32, %arg3: i32) -> (i32, i32, i32) {
    %c0_i32 = arith.constant 0 : i32
    return %arg0, %arg1, %arg3 : i32, i32, i32
  }
  func.func @transform_1(%arg0: i32, %arg1: i32, %arg2: i32, %arg3: i32) -> (i32, i32, i32) {
    %c0_i32 = arith.constant 0 : i32
    return %arg0, %arg3, %arg2 : i32, i32, i32
  }
  func.func @transform_2(%arg0: i32, %arg1: i32, %arg2: i32, %arg3: i32) -> (i32, i32) {
    %c0_i32 = arith.constant 0 : i32
    %c0_i32_0 = arith.constant 0 : i32
    return %c0_i32, %arg2 : i32, i32
  }
  func.func @transform_3(%arg0: i32, %arg1: i32, %arg2: i32, %arg3: i32) -> (i32, i32) {
    %c0_i32 = arith.constant 0 : i32
    %c0_i32_0 = arith.constant 0 : i32
    return %c0_i32, %arg2 : i32, i32
  }
  func.func @transform_4(%arg0: i32, %arg1: i32, %arg2: i32, %arg3: i32) -> (i32, i32, i32) {
    %c0_i32 = arith.constant 0 : i32
    return %arg0, %arg1, %arg2 : i32, i32, i32
  }
}

</mosaic_0001>

<llo_original>
// kernel: squeeze.1
$region0: #{squeeze.1}
  %s0 = inlined_call_operand.vmem [shape: bf16[1,2,1024], index: 0, kind: input, shape index: {}]
  %s1 = inlined_call_operand.vmem [shape: bf16[2,4,4,64], index: 1, kind: output, shape index: {}]
  $region1: #{squeeze.1} parent=0
    #allocation0 [shape = 'u8[32768]{0}', space=vmem, size = 0x8000, scoped, tag = 'scoped mem for output reshape']
    #allocation1 [shape = 'u8[32768]{0}', space=vmem, size = 0x8000, scoped, tag = 'scoped mem for input reshape']
    %s3 = smul.u32 1, 2
    %s4 = sshllo.u32 0, %s3
    %s5 = smul.addr 1, 7
    %s6 = scalar_lea.vmem %s0, %s5
    %s7 = sshrl.u32 %s4, 1
    %s8 = sor.u32 %s4, %s7
    %s9 = sand.u32 %s8, 85
    %s10 = sshrl.u32 %s9, 1
    %s11 = sor.u32 %s9, %s10
    %s12 = sand.u32 51, %s11
    %s13 = sshrl.u32 %s12, 2
    %s14 = sor.u32 %s12, %s13
    %s15 = sand.u32 15, %s14
    %v16 = vld [vmem:[%s6] sm:%s15]
    %v17 = vunpack.c.l.bf16 %v16
    %v18 = vunpack.c.h.bf16 %v16
    %s19 = scalar_lea.vmem [#allocation1], 56
    %20 = vst [vmem:[%s19] sm:%s4] %v17
    %s21 = smul.addr 1, 6
    %s22 = scalar_lea.vmem %s0, %s21
    %s23 = sshrl.u32 %s4, 1
    %s24 = sor.u32 %s4, %s23
    %s25 = sand.u32 %s24, 85
    %s26 = sshrl.u32 %s25, 1
    %s27 = sor.u32 %s25, %s26
    %s28 = sand.u32 51, %s27
    %s29 = sshrl.u32 %s28, 2
    %s30 = sor.u32 %s28, %s29
    %s31 = sand.u32 15, %s30
    %v32 = vld [vmem:[%s22] sm:%s31]
    %v33 = vunpack.c.l.bf16 %v32
    %v34 = vunpack.c.h.bf16 %v32
    %s35 = scalar_lea.vmem [#allocation1], 48
    %36 = vst [vmem:[%s35] sm:%s4] %v33
    %s37 = smul.addr 1, 5
    %s38 = scalar_lea.vmem %s0, %s37
    %s39 = sshrl.u32 %s4, 1
    %s40 = sor.u32 %s4, %s39
    %s41 = sand.u32 %s40, 85
    %s42 = sshrl.u32 %s41, 1
    %s43 = sor.u32 %s41, %s42
    %s44 = sand.u32 51, %s43
    %s45 = sshrl.u32 %s44, 2
    %s46 = sor.u32 %s44, %s45
    %s47 = sand.u32 15, %s46
    %v48 = vld [vmem:[%s38] sm:%s47]
    %v49 = vunpack.c.l.bf16 %v48
    %v50 = vunpack.c.h.bf16 %v48
    %s51 = scalar_lea.vmem [#allocation1], 40
    %52 = vst [vmem:[%s51] sm:%s4] %v49
    %s53 = smul.addr 1, 4
    %s54 = scalar_lea.vmem %s0, %s53
    %s55 = sshrl.u32 %s4, 1
    %s56 = sor.u32 %s4, %s55
    %s57 = sand.u32 %s56, 85
    %s58 = sshrl.u32 %s57, 1
    %s59 = sor.u32 %s57, %s58
    %s60 = sand.u32 51, %s59
    %s61 = sshrl.u32 %s60, 2
    %s62 = sor.u32 %s60, %s61
    %s63 = sand.u32 15, %s62
    %v64 = vld [vmem:[%s54] sm:%s63]
    %v65 = vunpack.c.l.bf16 %v64
    %v66 = vunpack.c.h.bf16 %v64
    %s67 = scalar_lea.vmem [#allocation1], 32
    %68 = vst [vmem:[%s67] sm:%s4] %v65
    %s69 = smul.addr 1, 3
    %s70 = scalar_lea.vmem %s0, %s69
    %s71 = sshrl.u32 %s4, 1
    %s72 = sor.u32 %s4, %s71
    %s73 = sand.u32 %s72, 85
    %s74 = sshrl.u32 %s73, 1
    %s75 = sor.u32 %s73, %s74
    %s76 = sand.u32 51, %s75
    %s77 = sshrl.u32 %s76, 2
    %s78 = sor.u32 %s76, %s77
    %s79 = sand.u32 15, %s78
    %v80 = vld [vmem:[%s70] sm:%s79]
    %v81 = vunpack.c.l.bf16 %v80
    %v82 = vunpack.c.h.bf16 %v80
    %s83 = scalar_lea.vmem [#allocation1], 24
    %84 = vst [vmem:[%s83] sm:%s4] %v81
    %s85 = smul.addr 1, 2
    %s86 = scalar_lea.vmem %s0, %s85
    %s87 = sshrl.u32 %s4, 1
    %s88 = sor.u32 %s4, %s87
    %s89 = sand.u32 %s88, 85
    %s90 = sshrl.u32 %s89, 1
    %s91 = sor.u32 %s89, %s90
    %s92 = sand.u32 51, %s91
    %s93 = sshrl.u32 %s92, 2
    %s94 = sor.u32 %s92, %s93
    %s95 = sand.u32 15, %s94
    %v96 = vld [vmem:[%s86] sm:%s95]
    %v97 = vunpack.c.l.bf16 %v96
    %v98 = vunpack.c.h.bf16 %v96
    %s99 = scalar_lea.vmem [#allocation1], 16
    %100 = vst [vmem:[%s99] sm:%s4] %v97
    %s101 = scalar_lea.vmem %s0, 1
    %s102 = sshrl.u32 %s4, 1
    %s103 = sor.u32 %s4, %s102
    %s104 = sand.u32 %s103, 85
    %s105 = sshrl.u32 %s104, 1
    %s106 = sor.u32 %s104, %s105
    %s107 = sand.u32 51, %s106
    %s108 = sshrl.u32 %s107, 2
    %s109 = sor.u32 %s107, %s108
    %s110 = sand.u32 15, %s109
    %v111 = vld [vmem:[%s101] sm:%s110]
    %v112 = vunpack.c.l.bf16 %v111
    %v113 = vunpack.c.h.bf16 %v111
    %s114 = scalar_lea.vmem [#allocation1], 8
    %115 = vst [vmem:[%s114] sm:%s4] %v112
    %s116 = sshrl.u32 %s4, 1
    %s117 = sor.u32 %s4, %s116
    %s118 = sand.u32 %s117, 85
    %s119 = sshrl.u32 %s118, 1
    %s120 = sor.u32 %s118, %s119
    %s121 = sand.u32 51, %s120
    %s122 = sshrl.u32 %s121, 2
    %s123 = sor.u32 %s121, %s122
    %s124 = sand.u32 15, %s123
    %v125 = vld [vmem:[%s0] sm:%s124]
    %v126 = vunpack.c.l.bf16 %v125
    %v127 = vunpack.c.h.bf16 %v125
    %128 = vst [vmem:[#allocation1] sm:%s4] %v126
    %v129 = vld [vmem:[#allocation1] sm:$0x3]
    %vm130 = vcmask 523264
    %131 = vst.msk [vmem:[#allocation0] sm:$0x1] %vm130, %v129
    %s132 = scalar_lea.vmem [#allocation0], 31
    %133 = vst.msk [vmem:[%s132] sm:$0x2] %vm130, %v129
    %s134 = scalar_lea.vmem [#allocation1], 8
    %v135 = vld [vmem:[%s134] sm:$0x3]
    %vm136 = vcmask 523264
    %s137 = scalar_lea.vmem [#allocation0], 2
    %138 = vst.msk [vmem:[%s137] sm:$0x1] %vm136, %v135
    %s139 = scalar_lea.vmem [#allocation0], 33
    %140 = vst.msk [vmem:[%s139] sm:$0x2] %vm136, %v135
    %s141 = scalar_lea.vmem [#allocation1], 16
    %v142 = vld [vmem:[%s141] sm:$0x3]
    %vm143 = vcmask 523264
    %s144 = scalar_lea.vmem [#allocation0], 8
    %145 = vst.msk [vmem:[%s144] sm:$0x1] %vm143, %v142
    %s146 = scalar_lea.vmem [#allocation0], 39
    %147 = vst.msk [vmem:[%s146] sm:$0x2] %vm143, %v142
    %s148 = scalar_lea.vmem [#allocation1], 24
    %v149 = vld [vmem:[%s148] sm:$0x3]
    %vm150 = vcmask 523264
    %s151 = scalar_lea.vmem [#allocation0], 10
    %152 = vst.msk [vmem:[%s151] sm:$0x1] %vm150, %v149
    %s153 = scalar_lea.vmem [#allocation0], 41
    %154 = vst.msk [vmem:[%s153] sm:$0x2] %vm150, %v149
    %s155 = scalar_lea.vmem [#allocation1], 32
    %v156 = vld [vmem:[%s155] sm:$0x3]
    %vm157 = vcmask 523264
    %s158 = scalar_lea.vmem [#allocation0], 16
    %159 = vst.msk [vmem:[%s158] sm:$0x1] %vm157, %v156
    %s160 = scalar_lea.vmem [#allocation0], 47
    %161 = vst.msk [vmem:[%s160] sm:$0x2] %vm157, %v156
    %s162 = scalar_lea.vmem [#allocation1], 40
    %v163 = vld [vmem:[%s162] sm:$0x3]
    %vm164 = vcmask 523264
    %s165 = scalar_lea.vmem [#allocation0], 18
    %166 = vst.msk [vmem:[%s165] sm:$0x1] %vm164, %v163
    %s167 = scalar_lea.vmem [#allocation0], 49
    %168 = vst.msk [vmem:[%s167] sm:$0x2] %vm164, %v163
    %s169 = scalar_lea.vmem [#allocation1], 48
    %v170 = vld [vmem:[%s169] sm:$0x3]
    %vm171 = vcmask 523264
    %s172 = scalar_lea.vmem [#allocation0], 24
    %173 = vst.msk [vmem:[%s172] sm:$0x1] %vm171, %v170
    %s174 = scalar_lea.vmem [#allocation0], 55
    %175 = vst.msk [vmem:[%s174] sm:$0x2] %vm171, %v170
    %s176 = scalar_lea.vmem [#allocation1], 56
    %v177 = vld [vmem:[%s176] sm:$0x3]
    %vm178 = vcmask 523264
    %s179 = scalar_lea.vmem [#allocation0], 26
    %180 = vst.msk [vmem:[%s179] sm:$0x1] %vm178, %v177
    %s181 = scalar_lea.vmem [#allocation0], 57
    %182 = vst.msk [vmem:[%s181] sm:$0x2] %vm178, %v177
    %v183 = vld [vmem:[#allocation1] ss:$8 sm:$0xf]
    %v184 = vld [vmem:[#allocation1] ss:$8 sm:$0xf0]
    %vm185 = vcmask 1047556
    %v186 = vsel %vm185, %v184, %v183
    %187 = vrot.lane.b32.xlu0 %v186, 64
    %v188 = vpop.permute.xlu0 %187
    %vm189 = vcmask 523264
    %s190 = scalar_lea.vmem [#allocation0], 1
    %191 = vst.msk [vmem:[%s190] ss:$2 sm:$0x3] %vm189, %v188
    %s192 = scalar_lea.vmem [#allocation0], 5
    %193 = vst.msk [vmem:[%s192] ss:$2 sm:$0xc] %vm189, %v188
    %s194 = scalar_lea.vmem [#allocation0], 9
    %195 = vst.msk [vmem:[%s194] ss:$2 sm:$0x30] %vm189, %v188
    %s196 = scalar_lea.vmem [#allocation0], 13
    %197 = vst.msk [vmem:[%s196] ss:$2 sm:$0xc0] %vm189, %v188
    %s198 = scalar_lea.vmem [#allocation1], 1
    %v199 = vld [vmem:[%s198] ss:$8 sm:$0xf]
    %s200 = scalar_lea.vmem [#allocation1], 1
    %v201 = vld [vmem:[%s200] ss:$8 sm:$0xf0]
    %vm202 = vcmask 1047556
    %v203 = vsel %vm202, %v201, %v199
    %204 = vrot.lane.b32.xlu0 %v203, 64
    %v205 = vpop.permute.xlu0 %204
    %vm206 = vcmask 523264
    %s207 = scalar_lea.vmem [#allocation0], 33
    %208 = vst.msk [vmem:[%s207] ss:$2 sm:$0x3] %vm206, %v205
    %s209 = scalar_lea.vmem [#allocation0], 37
    %210 = vst.msk [vmem:[%s209] ss:$2 sm:$0xc] %vm206, %v205
    %s211 = scalar_lea.vmem [#allocation0], 41
    %212 = vst.msk [vmem:[%s211] ss:$2 sm:$0x30] %vm206, %v205
    %s213 = scalar_lea.vmem [#allocation0], 45
    %214 = vst.msk [vmem:[%s213] ss:$2 sm:$0xc0] %vm206, %v205
    %s216 = smul.u32 2, 2
    %s217 = sshllo.u32 0, %s216
    %s218 = sshrl.u32 %s216, 1
    %v219 = vld [vmem:[#allocation0] sm:%s217]
    %v220 = vpack.c.bf16 0.0, %v219
    %s221 = sshllo.u32 0, %s218
    %222 = vst [vmem:[%s1] sm:%s221] %v220
    %s223 = scalar_lea.vmem [#allocation0], 8
    %v224 = vld [vmem:[%s223] sm:%s217]
    %v225 = vpack.c.bf16 0.0, %v224
    %s226 = sshllo.u32 0, %s218
    %s227 = scalar_lea.vmem %s1, 2
    %228 = vst [vmem:[%s227] sm:%s226] %v225
    %s229 = scalar_lea.vmem [#allocation0], 16
    %v230 = vld [vmem:[%s229] sm:%s217]
    %v231 = vpack.c.bf16 0.0, %v230
    %s232 = sshllo.u32 0, %s218
    %s233 = smul.addr 2, 2
    %s234 = scalar_lea.vmem %s1, %s233
    %235 = vst [vmem:[%s234] sm:%s232] %v231
    %s236 = scalar_lea.vmem [#allocation0], 24
    %v237 = vld [vmem:[%s236] sm:%s217]
    %v238 = vpack.c.bf16 0.0, %v237
    %s239 = sshllo.u32 0, %s218
    %s240 = smul.addr 2, 3
    %s241 = scalar_lea.vmem %s1, %s240
    %242 = vst [vmem:[%s241] sm:%s239] %v238
    %s243 = scalar_lea.vmem [#allocation0], 32
    %v244 = vld [vmem:[%s243] sm:%s217]
    %v245 = vpack.c.bf16 0.0, %v244
    %s246 = sshllo.u32 0, %s218
    %s247 = smul.addr 2, 4
    %s248 = scalar_lea.vmem %s1, %s247
    %249 = vst [vmem:[%s248] sm:%s246] %v245
    %s250 = scalar_lea.vmem [#allocation0], 40
    %v251 = vld [vmem:[%s250] sm:%s217]
    %v252 = vpack.c.bf16 0.0, %v251
    %s253 = sshllo.u32 0, %s218
    %s254 = smul.addr 2, 5
    %s255 = scalar_lea.vmem %s1, %s254
    %256 = vst [vmem:[%s255] sm:%s253] %v252
    %s257 = scalar_lea.vmem [#allocation0], 48
    %v258 = vld [vmem:[%s257] sm:%s217]
    %v259 = vpack.c.bf16 0.0, %v258
    %s260 = sshllo.u32 0, %s218
    %s261 = smul.addr 2, 6
    %s262 = scalar_lea.vmem %s1, %s261
    %263 = vst [vmem:[%s262] sm:%s260] %v259
    %s264 = scalar_lea.vmem [#allocation0], 56
    %v265 = vld [vmem:[%s264] sm:%s217]
    %v266 = vpack.c.bf16 0.0, %v265
    %s267 = sshllo.u32 0, %s218
    %s268 = smul.addr 2, 7
    %s269 = scalar_lea.vmem %s1, %s268
    %270 = vst [vmem:[%s269] sm:%s267] %v266

// kernel: _lambda_.4
$region0: #{_lambda_.4}
  #allocation0 [shape = 'u32[]', space=smem, size = 0x4, offset = 0x4, fixed_abs, tag = 'smem constant byte address 0x4 - core index']
  #allocation1 [shape = 'u32[144,128]{1,0:T(1,128)}', space=vmem, size = 0x12000, scoped, tag = 'internal scratch']
  #allocation2 [shape = 'f32[16,256]{1,0:T(8,128)}', space=vmem, size = 0x4000, scoped, tag = 'scratch operand']
  %s0 = inlined_call_operand.vmem [shape: bf16[1,16,128], index: 0, kind: input, shape index: {}]
  %s1 = inlined_call_operand.vmem [shape: bf16[1,128,1024], index: 1, kind: input, shape index: {}]
  %s2 = inlined_call_operand.hbm [shape: f32[1,1024], index: 2, kind: input, shape index: {}]
  %s3 = inlined_call_operand.hbm [shape: f32[1,1024], index: 3, kind: input, shape index: {}]
  %s4 = inlined_call_operand.vmem [shape: bf16[1,16,1024], index: 4, kind: output, shape index: {}]
  %s5 = sld [smem:[#allocation0]]
  $region137: #{_lambda_.4} parent=0
    _
  %s7 = ssub.s32 1, %s5
  %s8 = scalar_select 0, %s7, %s5
  $region1: #{_lambda_.4} parent=0
    #allocation3 [shape = 'u8[131072]{0}', space=vmem, size = 0x20000, scoped, tag = 'input window, operand 1']
    #allocation4 [shape = 'u8[2048]{0}', space=vmem, size = 0x800, scoped, tag = 'input window, operand 2']
    #allocation5 [shape = 's32[2]{0}', space=sflag, size = 0x8, scoped, tag = 'scoped memory for _lambda_.4']
    #allocation6 [shape = 'u8[2048]{0}', space=vmem, size = 0x800, scoped, tag = 'input window, operand 3']
    #allocation7 [shape = 's32[2]{0}', space=sflag, size = 0x8, scoped, tag = 'scoped memory for _lambda_.4']
    #allocation8 [shape = 'u8[16384]{0}', space=vmem, size = 0x4000, scoped, tag = 'output window, operand 0']
    %9 = vsyncpa [#allocation5], 0
    %s10 = scalar_lea.sflag [#allocation5], 1
    %11 = vsyncpa %s10, 0
    %12 = vsyncpa [#allocation7], 0
    %s13 = scalar_lea.sflag [#allocation7], 1
    %14 = vsyncpa %s13, 0
    loop: start=0, step=1, limit=6
    $region2: #{_lambda_.4} parent=1 // loop_pre_header
      _
    $region3: #{_lambda_.4} parent=1 // loop_header
      %s16 = sphi 0, %s20
      %p17 = scmp.ge.s32.totalorder %s16, 6
      %s23 = sphi 0, %s49
      %s24 = sphi 0, %s45
      %s25 = sphi 0, %s41
      %s26 = sphi 0, %s37
      %s27 = sphi 0, %s23
      %s28 = sphi 0, %s24
      %s29 = sphi 0, %s25
      %s30 = sphi 0, %s26
      %s31 = sphi 0, %s27
      %s32 = sphi 0, %s28
      %s33 = sphi 0, %s29
      %s34 = sphi 0, %s30
      %s56 = sphi 0, %s58
      %s59 = sphi 0, %s56
      %s60 = sphi 0, %s59
      %s76 = sphi 0, %s60
      %s86 = sphi 0, %s88
      %s89 = sphi 0, %s86
      %s90 = sphi 0, %s89
      %s106 = sphi 0, %s90
      %s112 = sphi 0, %s114
      %s115 = sphi 0, %s112
      %s116 = sphi 0, %s115
      %s132 = sphi 0, %s116
      %s138 = sphi 0, %s140
      %s141 = sphi 0, %s138
      %s142 = sphi 0, %s141
      %s158 = sphi 0, %s142
      %s168 = sphi 0, %s170
      %s171 = sphi 0, %s168
      %s172 = sphi 0, %s171
      %s188 = sphi 0, %s172
    $region4: #{_lambda_.4} parent=1 // loop_header_branch
      %19 = sbr.rel (%p17) target = $region8
    $region5: #{_lambda_.4} parent=1 // loop_body
      %s21 = ssub.s32 %s16, 1
      %s22 = ssub.s32 %s16, 2
      %s35 = sadd.s32 1, %s26
      %p36 = scmp.ge.s32.totalorder %s35, 1
      %s37 = scalar_select %p36, 0, %s35
      %s38 = sadd.s32 1, %s25
      %s39 = scalar_select %p36, %s38, %s25
      %p40 = scmp.ge.s32.totalorder %s39, 4
      %s41 = scalar_select %p40, 0, %s39
      %s42 = sadd.s32 1, %s24
      %s43 = scalar_select %p40, %s42, %s24
      %p44 = scmp.ge.s32.totalorder %s43, 1
      %s45 = scalar_select %p44, 0, %s43
      %s46 = sadd.s32 1, %s23
      %s47 = scalar_select %p44, %s46, %s23
      %p48 = scmp.ge.s32.totalorder %s47, 1
      %s49 = scalar_select %p48, 0, %s47
      %s50 = ssub.s32 %s23, %s49
      %s51 = ssub.s32 %s24, %s45
      %s52 = sor.u32 %s50, %s51
      %s53 = ssub.s32 %s26, %s37
      %s54 = sor.u32 %s52, %s53
      %p55 = scmp.eq.s32.totalorder %s54, 0
      %s57 = sadd.s32 %s56, 1
      %s58 = scalar_select %p55, %s56, %s57
      %p61 = pneg %p55
      %p62 = scmp.eq.s32.totalorder %s16, 3
      %p63 = por %p61, %p62
      %p64 = scmp.ne.s32.totalorder %s56, %s59
      %p65 = scmp.eq.s32.totalorder %s16, 0
      %p66 = por %p64, %p65
      %p67 = scmp.ne.s32.totalorder %s56, %s59
      %p68 = scmp.eq.s32.totalorder %s21, 3
      %p69 = por %p67, %p68
      %p70 = scmp.ne.s32.totalorder %s59, %s60
      %p71 = scmp.eq.s32.totalorder %s21, 0
      %p72 = por %p70, %p71
      %p73 = scmp.ne.s32.totalorder %s59, %s60
      %p74 = scmp.eq.s32.totalorder %s22, 3
      %p75 = por %p73, %p74
      %p77 = scmp.ne.s32.totalorder %s60, %s76
      %p78 = scmp.eq.s32.totalorder %s22, 0
      %p79 = por %p77, %p78
      %s80 = ssub.s32 %s23, %s49
      %s81 = ssub.s32 %s26, %s37
      %s82 = sor.u32 %s80, %s81
      %s83 = ssub.s32 %s25, %s41
      %s84 = sor.u32 %s82, %s83
      %p85 = scmp.eq.s32.totalorder %s84, 0
      %s87 = sadd.s32 %s86, 1
      %s88 = scalar_select %p85, %s86, %s87
      %p91 = pneg %p85
      %p92 = scmp.eq.s32.totalorder %s16, 3
      %p93 = por %p91, %p92
      %p94 = scmp.ne.s32.totalorder %s86, %s89
      %p95 = scmp.eq.s32.totalorder %s16, 0
      %p96 = por %p94, %p95
      %p97 = scmp.ne.s32.totalorder %s86, %s89
      %p98 = scmp.eq.s32.totalorder %s21, 3
      %p99 = por %p97, %p98
      %p100 = scmp.ne.s32.totalorder %s89, %s90
      %p101 = scmp.eq.s32.totalorder %s21, 0
      %p102 = por %p100, %p101
      %p103 = scmp.ne.s32.totalorder %s89, %s90
      %p104 = scmp.eq.s32.totalorder %s22, 3
      %p105 = por %p103, %p104
      %p107 = scmp.ne.s32.totalorder %s90, %s106
      %p108 = scmp.eq.s32.totalorder %s22, 0
      %p109 = por %p107, %p108
      %s110 = ssub.s32 %s25, %s41
      %p111 = scmp.eq.s32.totalorder %s110, 0
      %s113 = sadd.s32 %s112, 1
      %s114 = scalar_select %p111, %s112, %s113
      %p117 = pneg %p111
      %p118 = scmp.eq.s32.totalorder %s16, 3
      %p119 = por %p117, %p118
      %p120 = scmp.ne.s32.totalorder %s112, %s115
      %p121 = scmp.eq.s32.totalorder %s16, 0
      %p122 = por %p120, %p121
      %p123 = scmp.ne.s32.totalorder %s112, %s115
      %p124 = scmp.eq.s32.totalorder %s21, 3
      %p125 = por %p123, %p124
      %p126 = scmp.ne.s32.totalorder %s115, %s116
      %p127 = scmp.eq.s32.totalorder %s21, 0
      %p128 = por %p126, %p127
      %p129 = scmp.ne.s32.totalorder %s115, %s116
      %p130 = scmp.eq.s32.totalorder %s22, 3
      %p131 = por %p129, %p130
      %p133 = scmp.ne.s32.totalorder %s116, %s132
      %p134 = scmp.eq.s32.totalorder %s22, 0
      %p135 = por %p133, %p134
      %s136 = ssub.s32 %s25, %s41
      %p137 = scmp.eq.s32.totalorder %s136, 0
      %s139 = sadd.s32 %s138, 1
      %s140 = scalar_select %p137, %s138, %s139
      %p143 = pneg %p137
      %p144 = scmp.eq.s32.totalorder %s16, 3
      %p145 = por %p143, %p144
      %p146 = scmp.ne.s32.totalorder %s138, %s141
      %p147 = scmp.eq.s32.totalorder %s16, 0
      %p148 = por %p146, %p147
      %p149 = scmp.ne.s32.totalorder %s138, %s141
      %p150 = scmp.eq.s32.totalorder %s21, 3
      %p151 = por %p149, %p150
      %p152 = scmp.ne.s32.totalorder %s141, %s142
      %p153 = scmp.eq.s32.totalorder %s21, 0
      %p154 = por %p152, %p153
      %p155 = scmp.ne.s32.totalorder %s141, %s142
      %p156 = scmp.eq.s32.totalorder %s22, 3
      %p157 = por %p155, %p156
      %p159 = scmp.ne.s32.totalorder %s142, %s158
      %p160 = scmp.eq.s32.totalorder %s22, 0
      %p161 = por %p159, %p160
      %s162 = ssub.s32 %s23, %s49
      %s163 = ssub.s32 %s24, %s45
      %s164 = sor.u32 %s162, %s163
      %s165 = ssub.s32 %s25, %s41
      %s166 = sor.u32 %s164, %s165
      %p167 = scmp.eq.s32.totalorder %s166, 0
      %s169 = sadd.s32 %s168, 1
      %s170 = scalar_select %p167, %s168, %s169
      %p173 = pneg %p167
      %p174 = scmp.eq.s32.totalorder %s16, 3
      %p175 = por %p173, %p174
      %p176 = scmp.ne.s32.totalorder %s168, %s171
      %p177 = scmp.eq.s32.totalorder %s16, 0
      %p178 = por %p176, %p177
      %p179 = scmp.ne.s32.totalorder %s168, %s171
      %p180 = scmp.eq.s32.totalorder %s21, 3
      %p181 = por %p179, %p180
      %p182 = scmp.ne.s32.totalorder %s171, %s172
      %p183 = scmp.eq.s32.totalorder %s21, 0
      %p184 = por %p182, %p183
      %p185 = scmp.ne.s32.totalorder %s171, %s172
      %p186 = scmp.eq.s32.totalorder %s22, 3
      %p187 = por %p185, %p186
      %p189 = scmp.ne.s32.totalorder %s172, %s188
      %p190 = scmp.eq.s32.totalorder %s22, 0
      %p191 = por %p189, %p190
      %p192 = scmp.le.s32.totalorder 1, %s16
      %p193 = scmp.lt.s32.totalorder %s16, 5
      %p194 = pnand %p192, %p193
      %p195 = pneg %p194
      // Predicated region
      $region9: #{_lambda_.4} parent=5 // pred_check
        _
      $region10: #{_lambda_.4} parent=5 // pred_check_branch
        %197 = sbr.rel (%p194) target = $region12
      $region11: #{_lambda_.4} parent=5 // pred_region
        %s198 = ssub.s32 %s16, 1
        // Predicated region
        $region13: #{_lambda_.4} parent=11 // pred_check
          %p199 = pneg %p72
        $region14: #{_lambda_.4} parent=11 // pred_check_branch
          %201 = sbr.rel (%p199) target = $region16
        $region15: #{_lambda_.4} parent=11 // pred_region
          %s202 = smul.u32 2, %s28
          %p203 = scmp.lt.s32.totalorder %s27, 0
          %s204 = scalar_select %p203, %s27, 0
          %p205 = scmp.lt.s32.totalorder %s202, 1
          %s206 = scalar_select %p205, %s202, 1
          %p207 = scmp.lt.s32.totalorder %s30, 0
          %s208 = scalar_select %p207, %s30, 0
          %s209 = sadd.s32 %s208, %s206
          %s210 = smul.addr %s204, 2
          %s211 = sadd.s32 %s209, %s210
          %s212 = smul.addr %s211, 4
          %s213 = scalar_lea.vmem %s0, %s212
          %s214 = smul.u32 2, %s28
        $region16: #{_lambda_.4} parent=11 // pred_fallthru
          _
      $region12: #{_lambda_.4} parent=5 // pred_fallthru
        _
      %p215 = scmp.lt.s32.totalorder %s16, 4
      // Predicated region
      $region17: #{_lambda_.4} parent=5 // pred_check
        %p216 = pneg %p215
      $region18: #{_lambda_.4} parent=5 // pred_check_branch
        %218 = sbr.rel (%p216) target = $region20
      $region19: #{_lambda_.4} parent=5 // pred_region
        // Predicated region
        $region21: #{_lambda_.4} parent=19 // pred_check
          %p219 = pneg %p96
        $region22: #{_lambda_.4} parent=19 // pred_check_branch
          %221 = sbr.rel (%p219) target = $region24
        $region23: #{_lambda_.4} parent=19 // pred_region
          %s222 = sand.u32 %s86, 1
          %s223 = sand.u32 %s86, 1
          %s224 = smul.addr %s223, 128
          %s225 = scalar_lea.vmem [#allocation3], %s224
          %s226 = smul.u32 16, %s26
          %s227 = smul.u32 2, %s25
          %s228 = smul.addr %s226, 8
          %s229 = sadd.s32 %s227, %s228
          %s230 = smul.addr %s23, 128
          %s231 = sadd.s32 %s229, %s230
          %s232 = smul.addr %s231, 4
          %s233 = scalar_lea.vmem %s1, %s232
          // Predicated region
          $region25: #{_lambda_.4} parent=23 // pred_check
            _
          $region26: #{_lambda_.4} parent=23 // pred_check_branch
            %235 = sbr.rel (0) target = $region28
          $region27: #{_lambda_.4} parent=23 // pred_region
            // Predicated region
            $region29: #{_lambda_.4} parent=27 // pred_check
              _
            $region30: #{_lambda_.4} parent=27 // pred_check_branch
              %237 = sbr.rel (0) target = $region32
            $region31: #{_lambda_.4} parent=27 // pred_region
              // Predicated region
              $region44: #{_lambda_.4} parent=31 // pred_check
                _
              $region45: #{_lambda_.4} parent=31 // pred_check_branch
                %282 = sbr.rel (0) target = $region47
              $region46: #{_lambda_.4} parent=31 // pred_region
                loop: start=0, step=1, limit=1
                $region48: #{_lambda_.4} parent=46 // loop_pre_header
                  _
                $region49: #{_lambda_.4} parent=46 // loop_header
                  %s284 = sphi 0, %s288
                  %p285 = scmp.ge.s32.totalorder %s284, 1
                  %s289 = sphi %s233, %s233
                  %s290 = sphi %s225, %s225
                $region50: #{_lambda_.4} parent=46 // loop_header_branch
                  %287 = sbr.rel (%p285) target = $region54
                $region51: #{_lambda_.4} parent=46 // loop_body
                  %v291 = vld [vmem:[%s289] sm:$0xff]
                  %292 = vst [vmem:[%s290] sm:$0xff] %v291
                  %v293 = vld [vmem:[%s289 + $0x20] sm:$0xff]
                  %294 = vst [vmem:[%s290 + $0x8] sm:$0xff] %v293
                  %v295 = vld [vmem:[%s289 + $0x40] sm:$0xff]
                  %296 = vst [vmem:[%s290 + $0x10] sm:$0xff] %v295
                  %v297 = vld [vmem:[%s289 + $0x60] sm:$0xff]
                  %298 = vst [vmem:[%s290 + $0x18] sm:$0xff] %v297
                  %v299 = vld [vmem:[%s289 + $0x80] sm:$0xff]
                  %300 = vst [vmem:[%s290 + $0x20] sm:$0xff] %v299
                  %v301 = vld [vmem:[%s289 + $0xa0] sm:$0xff]
                  %302 = vst [vmem:[%s290 + $0x28] sm:$0xff] %v301
                  %v303 = vld [vmem:[%s289 + $0xc0] sm:$0xff]
                  %304 = vst [vmem:[%s290 + $0x30] sm:$0xff] %v303
                  %v305 = vld [vmem:[%s289 + $0xe0] sm:$0xff]
                  %306 = vst [vmem:[%s290 + $0x38] sm:$0xff] %v305
                  %v307 = vld [vmem:[%s289 + $0x100] sm:$0xff]
                  %308 = vst [vmem:[%s290 + $0x40] sm:$0xff] %v307
                  %v309 = vld [vmem:[%s289 + $0x120] sm:$0xff]
                  %310 = vst [vmem:[%s290 + $0x48] sm:$0xff] %v309
                  %v311 = vld [vmem:[%s289 + $0x140] sm:$0xff]
                  %312 = vst [vmem:[%s290 + $0x50] sm:$0xff] %v311
                  %v313 = vld [vmem:[%s289 + $0x160] sm:$0xff]
                  %314 = vst [vmem:[%s290 + $0x58] sm:$0xff] %v313
                  %v315 = vld [vmem:[%s289 + $0x180] sm:$0xff]
                  %316 = vst [vmem:[%s290 + $0x60] sm:$0xff] %v315
                  %v317 = vld [vmem:[%s289 + $0x1a0] sm:$0xff]
                  %318 = vst [vmem:[%s290 + $0x68] sm:$0xff] %v317
                  %v319 = vld [vmem:[%s289 + $0x1c0] sm:$0xff]
                  %320 = vst [vmem:[%s290 + $0x70] sm:$0xff] %v319
                  %v321 = vld [vmem:[%s289 + $0x1e0] sm:$0xff]
                  %322 = vst [vmem:[%s290 + $0x78] sm:$0xff] %v321
                $region52: #{_lambda_.4} parent=46 // loop_footer
                  %s288 = sadd.s32 1, %s284
                $region53: #{_lambda_.4} parent=46 // loop_footer_branch
                  %283 = sbr.rel target = $region49
                $region54: #{_lambda_.4} parent=46 // loop_exit
                  _
              $region47: #{_lambda_.4} parent=31 // pred_fallthru
                _
              // Predicated region
              $region55: #{_lambda_.4} parent=31 // pred_check
                _
              $region56: #{_lambda_.4} parent=31 // pred_check_branch
                %324 = sbr.rel target = $region58
              $region57: #{_lambda_.4} parent=31 // pred_region
                _
              $region58: #{_lambda_.4} parent=31 // pred_fallthru
                _
            $region32: #{_lambda_.4} parent=27 // pred_fallthru
              _
            // Predicated region
            $region33: #{_lambda_.4} parent=27 // pred_check
              _
            $region34: #{_lambda_.4} parent=27 // pred_check_branch
              %239 = sbr.rel target = $region36
            $region35: #{_lambda_.4} parent=27 // pred_region
              loop: start=0, step=1, limit=1
              $region37: #{_lambda_.4} parent=35 // loop_pre_header
                _
              $region38: #{_lambda_.4} parent=35 // loop_header
                %s242 = sphi 0, %s246
                %p243 = scmp.ge.s32.totalorder %s242, 1
                %s247 = sphi %s233, %s233
                %s248 = sphi %s225, %s225
              $region39: #{_lambda_.4} parent=35 // loop_header_branch
                %245 = sbr.rel (%p243) target = $region43
              $region40: #{_lambda_.4} parent=35 // loop_body
                %v249 = vld [vmem:[%s247] sm:$0xff]
                %250 = vst [vmem:[%s248] sm:$0xff] %v249
                %v251 = vld [vmem:[%s247 + $0x20] sm:$0xff]
                %252 = vst [vmem:[%s248 + $0x8] sm:$0xff] %v251
                %v253 = vld [vmem:[%s247 + $0x40] sm:$0xff]
                %254 = vst [vmem:[%s248 + $0x10] sm:$0xff] %v253
                %v255 = vld [vmem:[%s247 + $0x60] sm:$0xff]
                %256 = vst [vmem:[%s248 + $0x18] sm:$0xff] %v255
                %v257 = vld [vmem:[%s247 + $0x80] sm:$0xff]
                %258 = vst [vmem:[%s248 + $0x20] sm:$0xff] %v257
                %v259 = vld [vmem:[%s247 + $0xa0] sm:$0xff]
                %260 = vst [vmem:[%s248 + $0x28] sm:$0xff] %v259
                %v261 = vld [vmem:[%s247 + $0xc0] sm:$0xff]
                %262 = vst [vmem:[%s248 + $0x30] sm:$0xff] %v261
                %v263 = vld [vmem:[%s247 + $0xe0] sm:$0xff]
                %264 = vst [vmem:[%s248 + $0x38] sm:$0xff] %v263
                %v265 = vld [vmem:[%s247 + $0x100] sm:$0xff]
                %266 = vst [vmem:[%s248 + $0x40] sm:$0xff] %v265
                %v267 = vld [vmem:[%s247 + $0x120] sm:$0xff]
                %268 = vst [vmem:[%s248 + $0x48] sm:$0xff] %v267
                %v269 = vld [vmem:[%s247 + $0x140] sm:$0xff]
                %270 = vst [vmem:[%s248 + $0x50] sm:$0xff] %v269
                %v271 = vld [vmem:[%s247 + $0x160] sm:$0xff]
                %272 = vst [vmem:[%s248 + $0x58] sm:$0xff] %v271
                %v273 = vld [vmem:[%s247 + $0x180] sm:$0xff]
                %274 = vst [vmem:[%s248 + $0x60] sm:$0xff] %v273
                %v275 = vld [vmem:[%s247 + $0x1a0] sm:$0xff]
                %276 = vst [vmem:[%s248 + $0x68] sm:$0xff] %v275
                %v277 = vld [vmem:[%s247 + $0x1c0] sm:$0xff]
                %278 = vst [vmem:[%s248 + $0x70] sm:$0xff] %v277
                %v279 = vld [vmem:[%s247 + $0x1e0] sm:$0xff]
                %280 = vst [vmem:[%s248 + $0x78] sm:$0xff] %v279
              $region41: #{_lambda_.4} parent=35 // loop_footer
                %s246 = sadd.s32 1, %s242
              $region42: #{_lambda_.4} parent=35 // loop_footer_branch
                %241 = sbr.rel target = $region38
              $region43: #{_lambda_.4} parent=35 // loop_exit
                _
            $region36: #{_lambda_.4} parent=27 // pred_fallthru
              _
          $region28: #{_lambda_.4} parent=23 // pred_fallthru
            _
          %325 = vnop
        $region24: #{_lambda_.4} parent=19 // pred_fallthru
          _
        // Predicated region
        $region59: #{_lambda_.4} parent=19 // pred_check
          %p326 = pneg %p122
        $region60: #{_lambda_.4} parent=19 // pred_check_branch
          %328 = sbr.rel (%p326) target = $region62
        $region61: #{_lambda_.4} parent=19 // pred_region
          %s329 = sand.u32 %s112, 1
          %s330 = scalar_lea.sflag [#allocation5], %s329
          %s331 = sand.u32 %s112, 1
          %s332 = smul.addr %s331, 2
          %s333 = scalar_lea.vmem [#allocation4], %s332
          %s334 = smul.u32 2, %s25
          %s336 = ssub.s32 32, 32
          %337 = vsyncadd %s330, %s336
          %s338 = smul.addr %s334, 16
          %s339 = scalar_lea.hbm %s2, %s338
          %s341 = sshll.u32 %s333, 4
          %s342 = int_to_ptr.vmem [resolvable:$true] %s341
          %344 = dma.hbm_to_vmem [thread:$0]  %s339, 32, %s342, %s330
        $region62: #{_lambda_.4} parent=19 // pred_fallthru
          _
        // Predicated region
        $region63: #{_lambda_.4} parent=19 // pred_check
          %p345 = pneg %p148
        $region64: #{_lambda_.4} parent=19 // pred_check_branch
          %347 = sbr.rel (%p345) target = $region66
        $region65: #{_lambda_.4} parent=19 // pred_region
          %s348 = sand.u32 %s138, 1
          %s349 = scalar_lea.sflag [#allocation7], %s348
          %s350 = sand.u32 %s138, 1
          %s351 = smul.addr %s350, 2
          %s352 = scalar_lea.vmem [#allocation6], %s351
          %s353 = smul.u32 2, %s25
          %s355 = ssub.s32 32, 32
          %356 = vsyncadd %s349, %s355
          %s357 = smul.addr %s353, 16
          %s358 = scalar_lea.hbm %s3, %s357
          %s360 = sshll.u32 %s352, 4
          %s361 = int_to_ptr.vmem [resolvable:$true] %s360
          %363 = dma.hbm_to_vmem [thread:$0]  %s358, 32, %s361, %s349
        $region66: #{_lambda_.4} parent=19 // pred_fallthru
          _
      $region20: #{_lambda_.4} parent=5 // pred_fallthru
        _
      %p364 = scmp.le.s32.totalorder 1, %s16
      %p365 = scmp.lt.s32.totalorder %s16, 5
      %p366 = pnand %p364, %p365
      %p367 = pneg %p366
      // Predicated region
      $region67: #{_lambda_.4} parent=5 // pred_check
        _
      $region68: #{_lambda_.4} parent=5 // pred_check_branch
        %369 = sbr.rel (%p366) target = $region70
      $region69: #{_lambda_.4} parent=5 // pred_region
        %s370 = ssub.s32 %s16, 1
        %s371 = sand.u32 %s89, 1
        %s372 = sand.u32 %s89, 1
        %s373 = smul.addr %s372, 128
        %s374 = scalar_lea.vmem [#allocation3], %s373
        // Predicated region
        $region71: #{_lambda_.4} parent=69 // pred_check
          %p375 = pneg %p102
        $region72: #{_lambda_.4} parent=69 // pred_check_branch
          %377 = sbr.rel (%p375) target = $region74
        $region73: #{_lambda_.4} parent=69 // pred_region
          _
        $region74: #{_lambda_.4} parent=69 // pred_fallthru
          _
        %s378 = sand.u32 %s115, 1
        %s379 = scalar_lea.sflag [#allocation5], %s378
        %s380 = sand.u32 %s115, 1
        %s381 = smul.addr %s380, 2
        %s382 = scalar_lea.vmem [#allocation4], %s381
        // Predicated region
        $region75: #{_lambda_.4} parent=69 // pred_check
          %p383 = pneg %p128
        $region76: #{_lambda_.4} parent=69 // pred_check_branch
          %385 = sbr.rel (%p383) target = $region78
        $region77: #{_lambda_.4} parent=69 // pred_region
          %386 = dma.done %s379, 32
        $region78: #{_lambda_.4} parent=69 // pred_fallthru
          _
        %s387 = sand.u32 %s141, 1
        %s388 = scalar_lea.sflag [#allocation7], %s387
        %s389 = sand.u32 %s141, 1
        %s390 = smul.addr %s389, 2
        %s391 = scalar_lea.vmem [#allocation6], %s390
        // Predicated region
        $region79: #{_lambda_.4} parent=69 // pred_check
          %p392 = pneg %p154
        $region80: #{_lambda_.4} parent=69 // pred_check_branch
          %394 = sbr.rel (%p392) target = $region82
        $region81: #{_lambda_.4} parent=69 // pred_region
          %395 = dma.done %s388, 32
        $region82: #{_lambda_.4} parent=69 // pred_fallthru
          _
        %s396 = smul.u32 2, %s28
        %p397 = scmp.lt.s32.totalorder %s27, 0
        %s398 = scalar_select %p397, %s27, 0
        %p399 = scmp.lt.s32.totalorder %s396, 1
        %s400 = scalar_select %p399, %s396, 1
        %p401 = scmp.lt.s32.totalorder %s30, 0
        %s402 = scalar_select %p401, %s30, 0
        %s403 = sadd.s32 %s402, %s400
        %s404 = smul.addr %s398, 2
        %s405 = sadd.s32 %s403, %s404
        %s406 = smul.addr %s405, 4
        %s407 = scalar_lea.vmem %s0, %s406
        %p408 = pneg %p72
        %p409 = pneg %p69
        %s410 = sand.u32 %s89, 1
        %s411 = sand.u32 %s89, 1
        %s412 = smul.addr %s411, 128
        %s413 = scalar_lea.vmem [#allocation3], %s412
        %p414 = pneg %p102
        %p415 = pneg %p99
        %s416 = sand.u32 %s115, 1
        %s417 = scalar_lea.sflag [#allocation5], %s416
        %s418 = sand.u32 %s115, 1
        %s419 = smul.addr %s418, 2
        %s420 = scalar_lea.vmem [#allocation4], %s419
        %p421 = pneg %p128
        %p422 = pneg %p125
        %s423 = sand.u32 %s141, 1
        %s424 = scalar_lea.sflag [#allocation7], %s423
        %s425 = sand.u32 %s141, 1
        %s426 = smul.addr %s425, 2
        %s427 = scalar_lea.vmem [#allocation6], %s426
        %p428 = pneg %p154
        %p429 = pneg %p151
        %p430 = pneg %p184
        %p431 = pneg %p181
        %s432 = sand.u32 %s171, 1
        %s433 = sand.u32 %s171, 1
        %s434 = smul.addr %s433, 16
        %s435 = scalar_lea.vmem [#allocation8], %s434
        %s436 = smul.u32 2, %s28
        %p437 = scmp.lt.s32.totalorder %s27, 0
        %s438 = scalar_select %p437, %s27, 0
        %p439 = scmp.lt.s32.totalorder %s436, 1
        %s440 = scalar_select %p439, %s436, 1
        %p441 = scmp.lt.s32.totalorder %s30, 0
        %s442 = scalar_select %p441, %s30, 0
        %s443 = sadd.s32 %s442, %s440
        %s444 = smul.addr %s438, 2
        %s445 = sadd.s32 %s443, %s444
        %s446 = smul.addr %s445, 4
        %s447 = scalar_lea.vmem %s0, %s446
        %s448 = smul.u32 2, %s28
        %s449 = smul.u32 16, %s30
        %s450 = smul.u32 2, %s29
        %s451 = smul.u32 2, %s29
        %s452 = smul.u32 2, %s29
        %s453 = smul.u32 2, %s28
        %s454 = smul.u32 2, %s29
        %p456 = scmp.eq.s32.totalorder %s30, 0
        // Predicated region
        $region83: #{_lambda_.4} parent=69 // pred_check
          %p457 = pneg %p456
        $region84: #{_lambda_.4} parent=69 // pred_check_branch
          %459 = sbr.rel (%p457) target = $region86
        $region85: #{_lambda_.4} parent=69 // pred_region
          %460 = vst [vmem:[#allocation2] sm:$0xff] 0.0
          %461 = vst [vmem:[#allocation2 + $0x8] sm:$0xff] 0.0
          %462 = vst [vmem:[#allocation2 + $0x10] sm:$0xff] 0.0
          %463 = vst [vmem:[#allocation2 + $0x18] sm:$0xff] 0.0
        $region86: #{_lambda_.4} parent=69 // pred_fallthru
          _
        %v464 = vld [vmem:[#allocation2] sm:$0xff]
        %v465 = vld [vmem:[#allocation2 + $0x8] sm:$0xff]
        %v466 = vld [vmem:[#allocation2 + $0x10] sm:$0xff]
        %v467 = vld [vmem:[#allocation2 + $0x18] sm:$0xff]
        %v468 = vld [vmem:[%s447] sm:$0xf]
        %v469 = vld [vmem:[%s447 + $0x4] sm:$0xf]
        %v470 = vld [vmem:[%s374] sm:$0xff]
        %v471 = vld [vmem:[%s374 + $0x8] sm:$0xff]
        %v472 = vld [vmem:[%s374 + $0x10] sm:$0xff]
        %v473 = vld [vmem:[%s374 + $0x18] sm:$0xff]
        %v474 = vld [vmem:[%s374 + $0x20] sm:$0xff]
        %v475 = vld [vmem:[%s374 + $0x28] sm:$0xff]
        %v476 = vld [vmem:[%s374 + $0x30] sm:$0xff]
        %v477 = vld [vmem:[%s374 + $0x38] sm:$0xff]
        %v478 = vld [vmem:[%s374 + $0x40] sm:$0xff]
        %v479 = vld [vmem:[%s374 + $0x48] sm:$0xff]
        %v480 = vld [vmem:[%s374 + $0x50] sm:$0xff]
        %v481 = vld [vmem:[%s374 + $0x58] sm:$0xff]
        %v482 = vld [vmem:[%s374 + $0x60] sm:$0xff]
        %v483 = vld [vmem:[%s374 + $0x68] sm:$0xff]
        %v484 = vld [vmem:[%s374 + $0x70] sm:$0xff]
        %v485 = vld [vmem:[%s374 + $0x78] sm:$0xff]
        %v488 = vunpack.c.l.b16 %v468
        %v489 = vunpack.c.l.b16 %v469
        %v490 = vpack.c.b16 %v489, %v488
        %v508 = vunpack.c.l.b16 %v470
        %v509 = vunpack.c.h.b16 %v470
        %v510 = vunpack.c.l.b16 %v471
        %v511 = vunpack.c.h.b16 %v471
        %v512 = vunpack.c.l.b16 %v472
        %v513 = vunpack.c.h.b16 %v472
        %v514 = vunpack.c.l.b16 %v473
        %v515 = vunpack.c.h.b16 %v473
        %v516 = vunpack.c.l.b16 %v474
        %v517 = vunpack.c.h.b16 %v474
        %v518 = vunpack.c.l.b16 %v475
        %v519 = vunpack.c.h.b16 %v475
        %v520 = vunpack.c.l.b16 %v476
        %v521 = vunpack.c.h.b16 %v476
        %v522 = vunpack.c.l.b16 %v477
        %v523 = vunpack.c.h.b16 %v477
        %v524 = vunpack.c.l.b16 %v478
        %v525 = vunpack.c.h.b16 %v478
        %v526 = vunpack.c.l.b16 %v479
        %v527 = vunpack.c.h.b16 %v479
        %v528 = vunpack.c.l.b16 %v480
        %v529 = vunpack.c.h.b16 %v480
        %v530 = vunpack.c.l.b16 %v481
        %v531 = vunpack.c.h.b16 %v481
        %v532 = vunpack.c.l.b16 %v482
        %v533 = vunpack.c.h.b16 %v482
        %v534 = vunpack.c.l.b16 %v483
        %v535 = vunpack.c.h.b16 %v483
        %v536 = vunpack.c.l.b16 %v484
        %v537 = vunpack.c.h.b16 %v484
        %v538 = vunpack.c.l.b16 %v485
        %v539 = vunpack.c.h.b16 %v485
        %v540 = vpack.c.b16 %v510, %v508
        %v541 = vpack.c.b16 %v511, %v509
        %v542 = vpack.c.b16 %v514, %v512
        %v543 = vpack.c.b16 %v515, %v513
        %v544 = vpack.c.b16 %v518, %v516
        %v545 = vpack.c.b16 %v519, %v517
        %v546 = vpack.c.b16 %v522, %v520
        %v547 = vpack.c.b16 %v523, %v521
        %v548 = vpack.c.b16 %v526, %v524
        %v549 = vpack.c.b16 %v527, %v525
        %v550 = vpack.c.b16 %v530, %v528
        %v551 = vpack.c.b16 %v531, %v529
        %v552 = vpack.c.b16 %v534, %v532
        %v553 = vpack.c.b16 %v535, %v533
        %v554 = vpack.c.b16 %v538, %v536
        %v555 = vpack.c.b16 %v539, %v537
        %572 = vmatprep.subr.bf16.mxu0 %v541
        %573 = vmatpush1.bf16.msra.mxu0 %v540
        %574 = vmatprep.subr.bf16.mxu0 %v543
        %575 = vmatpush1.bf16.msra.mxu0 %v542
        %576 = vmatprep.subr.bf16.mxu0 %v545
        %577 = vmatpush1.bf16.msra.mxu0 %v544
        %578 = vmatprep.subr.bf16.mxu0 %v547
        %579 = vmatpush1.bf16.msra.mxu0 %v546
        %580 = vmatprep.subr.bf16.mxu0 %v549
        %581 = vmatpush1.bf16.msra.mxu0 %v548
        %582 = vmatprep.subr.bf16.mxu0 %v551
        %583 = vmatpush1.bf16.msra.mxu0 %v550
        %584 = vmatprep.subr.bf16.mxu0 %v553
        %585 = vmatpush1.bf16.msra.mxu0 %v552
        %586 = vmatprep.subr.bf16.mxu0 %v555
        %587 = vmatpush1.bf16.msra.mxu0 %v554
        %588 = vmatprep.subr.bf16.mxu0 0
        %589 = vmatpush1.bf16.msra.mxu0 0
        %590 = vmatprep.subr.bf16.mxu0 0
        %591 = vmatpush1.bf16.msra.mxu0 0
        %592 = vmatprep.subr.bf16.mxu0 0
        %593 = vmatpush1.bf16.msra.mxu0 0
        %594 = vmatprep.subr.bf16.mxu0 0
        %595 = vmatpush1.bf16.msra.mxu0 0
        %596 = vmatprep.subr.bf16.mxu0 0
        %597 = vmatpush1.bf16.msra.mxu0 0
        %598 = vmatprep.subr.bf16.mxu0 0
        %599 = vmatpush1.bf16.msra.mxu0 0
        %600 = vmatprep.subr.bf16.mxu0 0
        %601 = vmatpush1.bf16.msra.mxu0 0
        %602 = vmatprep.subr.bf16.mxu0 0
        %603 = vmatpush1.bf16.msra.mxu0 0
        %604 = vmatprep.mubr.bf16.mxu0 0
        %605 = vmatmul.mubr.bf16.gmra.mrb[0].mxu0 %v490
        %v606 = vpop.f32.mrb[0].mxu0
        %v607 = vadd.f32 0.0, %v606
        %v608 = vpop.f32.mrb[0].mxu0
        %v609 = vadd.f32 0.0, %v608
        %v610 = vpop.f32.mrb[0].mxu0
        %v611 = vadd.f32 0.0, %v610
        %v612 = vpop.f32.mrb[0].mxu0
        %v613 = vadd.f32 0.0, %v612
        %614 = vdwg.mxu0
        %v615 = vadd.f32 %v464, %v607
        %v616 = vadd.f32 %v465, %v609
        %v617 = vadd.f32 %v466, %v611
        %v618 = vadd.f32 %v467, %v613
        %619 = vst [vmem:[#allocation2] sm:$0xff] %v615
        %620 = vst [vmem:[#allocation2 + $0x8] sm:$0xff] %v616
        %621 = vst [vmem:[#allocation2 + $0x10] sm:$0xff] %v617
        %622 = vst [vmem:[#allocation2 + $0x18] sm:$0xff] %v618
        // Predicated region
        $region87: #{_lambda_.4} parent=69 // pred_check
          %p623 = pneg %p456
        $region88: #{_lambda_.4} parent=69 // pred_check_branch
          %625 = sbr.rel (%p623) target = $region90
        $region89: #{_lambda_.4} parent=69 // pred_region
          %v626 = vld [vmem:[#allocation2] sm:$0xff]
          %v627 = vld [vmem:[#allocation2 + $0x8] sm:$0xff]
          %v628 = vld [vmem:[#allocation2 + $0x10] sm:$0xff]
          %v629 = vld [vmem:[#allocation2 + $0x18] sm:$0xff]
          %v630 = vld [vmem:[%s382] sm:$0x3]
          %v632 = vlaneseq
          %v633 = vshrl.u32 %v632, 7
          %v634 = vsub.s32 0, %v633
          %v635 = vrot.slane %v630, %v634
          %v636 = vlaneseq
          %v637 = vshrl.u32 %v636, 7
          %v638 = vsub.s32 1, %v637
          %v639 = vrot.slane %v630, %v638
          %v642 = vmul.f32 %v626, %v635
          %v643 = vmul.f32 %v627, %v639
          %v644 = vmul.f32 %v628, %v635
          %v645 = vmul.f32 %v629, %v639
          %v646 = vld [vmem:[%s391] sm:$0x3]
          %v648 = vlaneseq
          %v649 = vshrl.u32 %v648, 7
          %v650 = vsub.s32 0, %v649
          %v651 = vrot.slane %v646, %v650
          %v652 = vlaneseq
          %v653 = vshrl.u32 %v652, 7
          %v654 = vsub.s32 1, %v653
          %v655 = vrot.slane %v646, %v654
          %v658 = vadd.f32 %v642, %v651
          %v659 = vadd.f32 %v643, %v655
          %v660 = vadd.f32 %v644, %v651
          %v661 = vadd.f32 %v645, %v655
          %v662 = vmax.f32 %v658, 0.0
          %v663 = vmax.f32 %v659, 0.0
          %v664 = vmax.f32 %v660, 0.0
          %v665 = vmax.f32 %v661, 0.0
          %v666 = vpack.c.bf16 %v664, %v662
          %v667 = vpack.c.bf16 %v665, %v663
          %v670 = vunpack.c.l.b16 %v666
          %v671 = vunpack.c.l.b16 %v667
          %v672 = vunpack.c.h.b16 %v666
          %v673 = vunpack.c.h.b16 %v667
          %v674 = vpack.c.b16 %v671, %v670
          %v675 = vpack.c.b16 %v673, %v672
          %678 = vst [vmem:[%s435] sm:$0xff] %v674
          %679 = vst [vmem:[%s435 + $0x8] sm:$0xff] %v675
        $region90: #{_lambda_.4} parent=69 // pred_fallthru
          _
        %s680 = sand.u32 %s171, 1
        %s681 = sand.u32 %s171, 1
        %s682 = smul.addr %s681, 16
        %s683 = scalar_lea.vmem [#allocation8], %s682
        // Predicated region
        $region91: #{_lambda_.4} parent=69 // pred_check
          %p684 = pneg %p181
        $region92: #{_lambda_.4} parent=69 // pred_check_branch
          %686 = sbr.rel (%p684) target = $region94
        $region93: #{_lambda_.4} parent=69 // pred_region
          %s687 = smul.u32 2, %s28
          %s688 = smul.u32 2, %s29
          %s689 = smul.addr %s687, 8
          %s690 = sadd.s32 %s688, %s689
          %s691 = smul.addr %s27, 16
          %s692 = sadd.s32 %s690, %s691
          %s693 = smul.addr %s692, 4
          %s694 = scalar_lea.vmem %s4, %s693
          // Predicated region
          $region95: #{_lambda_.4} parent=93 // pred_check
            _
          $region96: #{_lambda_.4} parent=93 // pred_check_branch
            %696 = sbr.rel (0) target = $region98
          $region97: #{_lambda_.4} parent=93 // pred_region
            // Predicated region
            $region99: #{_lambda_.4} parent=97 // pred_check
              _
            $region100: #{_lambda_.4} parent=97 // pred_check_branch
              %698 = sbr.rel (0) target = $region102
            $region101: #{_lambda_.4} parent=97 // pred_region
              // Predicated region
              $region114: #{_lambda_.4} parent=101 // pred_check
                _
              $region115: #{_lambda_.4} parent=101 // pred_check_branch
                %715 = sbr.rel (0) target = $region117
              $region116: #{_lambda_.4} parent=101 // pred_region
                loop: start=0, step=1, limit=1
                $region118: #{_lambda_.4} parent=116 // loop_pre_header
                  _
                $region119: #{_lambda_.4} parent=116 // loop_header
                  %s717 = sphi 0, %s721
                  %p718 = scmp.ge.s32.totalorder %s717, 1
                  %s722 = sphi %s683, %s683
                  %s723 = sphi %s694, %s694
                $region120: #{_lambda_.4} parent=116 // loop_header_branch
                  %720 = sbr.rel (%p718) target = $region124
                $region121: #{_lambda_.4} parent=116 // loop_body
                  %v724 = vld [vmem:[%s722] sm:$0xff]
                  %725 = vst [vmem:[%s723] sm:$0xff] %v724
                  %v726 = vld [vmem:[%s722 + $0x8] sm:$0xff]
                  %727 = vst [vmem:[%s723 + $0x20] sm:$0xff] %v726
                $region122: #{_lambda_.4} parent=116 // loop_footer
                  %s721 = sadd.s32 1, %s717
                $region123: #{_lambda_.4} parent=116 // loop_footer_branch
                  %716 = sbr.rel target = $region119
                $region124: #{_lambda_.4} parent=116 // loop_exit
                  _
              $region117: #{_lambda_.4} parent=101 // pred_fallthru
                _
              // Predicated region
              $region125: #{_lambda_.4} parent=101 // pred_check
                _
              $region126: #{_lambda_.4} parent=101 // pred_check_branch
                %729 = sbr.rel target = $region128
              $region127: #{_lambda_.4} parent=101 // pred_region
                _
              $region128: #{_lambda_.4} parent=101 // pred_fallthru
                _
            $region102: #{_lambda_.4} parent=97 // pred_fallthru
              _
            // Predicated region
            $region103: #{_lambda_.4} parent=97 // pred_check
              _
            $region104: #{_lambda_.4} parent=97 // pred_check_branch
              %700 = sbr.rel target = $region106
            $region105: #{_lambda_.4} parent=97 // pred_region
              loop: start=0, step=1, limit=1
              $region107: #{_lambda_.4} parent=105 // loop_pre_header
                _
              $region108: #{_lambda_.4} parent=105 // loop_header
                %s703 = sphi 0, %s707
                %p704 = scmp.ge.s32.totalorder %s703, 1
                %s708 = sphi %s683, %s683
                %s709 = sphi %s694, %s694
              $region109: #{_lambda_.4} parent=105 // loop_header_branch
                %706 = sbr.rel (%p704) target = $region113
              $region110: #{_lambda_.4} parent=105 // loop_body
                %v710 = vld [vmem:[%s708] sm:$0xff]
                %711 = vst [vmem:[%s709] sm:$0xff] %v710
                %v712 = vld [vmem:[%s708 + $0x8] sm:$0xff]
                %713 = vst [vmem:[%s709 + $0x20] sm:$0xff] %v712
              $region111: #{_lambda_.4} parent=105 // loop_footer
                %s707 = sadd.s32 1, %s703
              $region112: #{_lambda_.4} parent=105 // loop_footer_branch
                %702 = sbr.rel target = $region108
              $region113: #{_lambda_.4} parent=105 // loop_exit
                _
            $region106: #{_lambda_.4} parent=97 // pred_fallthru
              _
          $region98: #{_lambda_.4} parent=93 // pred_fallthru
            _
          %730 = vnop
        $region94: #{_lambda_.4} parent=69 // pred_fallthru
          _
      $region70: #{_lambda_.4} parent=5 // pred_fallthru
        _
      %p731 = scmp.le.s32.totalorder 2, %s16
      // Predicated region
      $region129: #{_lambda_.4} parent=5 // pred_check
        %p732 = pneg %p731
      $region130: #{_lambda_.4} parent=5 // pred_check_branch
        %734 = sbr.rel (%p732) target = $region132
      $region131: #{_lambda_.4} parent=5 // pred_region
        %s735 = ssub.s32 %s16, 2
        // Predicated region
        $region133: #{_lambda_.4} parent=131 // pred_check
          %p736 = pneg %p187
        $region134: #{_lambda_.4} parent=131 // pred_check_branch
          %738 = sbr.rel (%p736) target = $region136
        $region135: #{_lambda_.4} parent=131 // pred_region
          %s739 = sand.u32 %s172, 1
          %s740 = sand.u32 %s172, 1
          %s741 = smul.addr %s740, 16
          %s742 = scalar_lea.vmem [#allocation8], %s741
        $region136: #{_lambda_.4} parent=131 // pred_fallthru
          _
      $region132: #{_lambda_.4} parent=5 // pred_fallthru
        _
    $region6: #{_lambda_.4} parent=1 // loop_footer
      %s20 = sadd.s32 1, %s16
    $region7: #{_lambda_.4} parent=1 // loop_footer_branch
      %15 = sbr.rel target = $region3
    $region8: #{_lambda_.4} parent=1 // loop_exit
      _
    %743 = vsyncpa [#allocation5], 1
    %s744 = scalar_lea.sflag [#allocation5], 1
    %745 = vsyncpa %s744, 1
    %746 = vsyncpa [#allocation7], 1
    %s747 = scalar_lea.sflag [#allocation7], 1
    %748 = vsyncpa %s747, 1

// kernel: _lambda_.5
$region0: #{_lambda_.5}
  #allocation0 [shape = 'u32[]', space=smem, size = 0x4, offset = 0x4, fixed_abs, tag = 'smem constant byte address 0x4 - core index']
  #allocation1 [shape = 'u32[144,128]{1,0:T(1,128)}', space=vmem, size = 0x12000, scoped, tag = 'internal scratch']
  #allocation2 [shape = 'f32[32,128]{1,0:T(8,128)}', space=vmem, size = 0x4000, scoped, tag = 'scratch operand']
  %s0 = inlined_call_operand.vmem [shape: bf16[4,32,256], index: 0, kind: input, shape index: {}]
  %s1 = inlined_call_operand.hbm [shape: bf16[4,256,128], index: 1, kind: input, shape index: {}]
  %s2 = inlined_call_operand.hbm [shape: f32[1,128], index: 2, kind: input, shape index: {}]
  %s3 = inlined_call_operand.hbm [shape: f32[1,128], index: 3, kind: input, shape index: {}]
  %s4 = inlined_call_operand.vmem [shape: bf16[4,32,128], index: 4, kind: output, shape index: {}]
  %s5 = sld [smem:[#allocation0]]
  $region69: #{_lambda_.5} parent=0
    _
  %s7 = ssub.s32 1, %s5
  %s8 = scalar_select 0, %s7, %s5
  $region1: #{_lambda_.5} parent=0
    #allocation3 [shape = 'u8[131072]{0}', space=vmem, size = 0x20000, scoped, tag = 'input window, operand 1']
    #allocation4 [shape = 's32[2]{0}', space=sflag, size = 0x8, scoped, tag = 'scoped memory for _lambda_.5']
    #allocation5 [shape = 'u8[512]{0}', space=vmem, size = 0x400, scoped, tag = 'input window, operand 2, single buffered']
    #allocation6 [shape = 's32[1]{0}', space=sflag, size = 0x4, scoped, tag = 'scoped memory for _lambda_.5']
    #allocation7 [shape = 'u8[512]{0}', space=vmem, size = 0x400, scoped, tag = 'input window, operand 3, single buffered']
    %9 = vsyncpa [#allocation4], 0
    %s10 = scalar_lea.sflag [#allocation4], 1
    %11 = vsyncpa %s10, 0
    %12 = vsyncpa [#allocation6], 0
    loop: start=0, step=1, limit=6
    $region2: #{_lambda_.5} parent=1 // loop_pre_header
      _
    $region3: #{_lambda_.5} parent=1 // loop_header
      %s14 = sphi 0, %s18
      %p15 = scmp.ge.s32.totalorder %s14, 6
      %s21 = sphi 0, %s47
      %s22 = sphi 0, %s43
      %s23 = sphi 0, %s39
      %s24 = sphi 0, %s35
      %s25 = sphi 0, %s21
      %s26 = sphi 0, %s22
      %s27 = sphi 0, %s23
      %s28 = sphi 0, %s24
      %s29 = sphi 0, %s25
      %s30 = sphi 0, %s26
      %s31 = sphi 0, %s27
      %s32 = sphi 0, %s28
      %s54 = sphi 0, %s56
      %s57 = sphi 0, %s54
      %s58 = sphi 0, %s57
      %s74 = sphi 0, %s58
      %s84 = sphi 0, %s86
      %s87 = sphi 0, %s84
      %s88 = sphi 0, %s87
      %s104 = sphi 0, %s88
      %s110 = sphi 0, %s112
      %s113 = sphi 0, %s110
      %s114 = sphi 0, %s113
      %s130 = sphi 0, %s114
      %s136 = sphi 0, %s138
      %s139 = sphi 0, %s136
      %s140 = sphi 0, %s139
      %s156 = sphi 0, %s140
      %s166 = sphi 0, %s168
      %s169 = sphi 0, %s166
      %s170 = sphi 0, %s169
      %s186 = sphi 0, %s170
    $region4: #{_lambda_.5} parent=1 // loop_header_branch
      %17 = sbr.rel (%p15) target = $region8
    $region5: #{_lambda_.5} parent=1 // loop_body
      %s19 = ssub.s32 %s14, 1
      %s20 = ssub.s32 %s14, 2
      %s33 = sadd.s32 1, %s24
      %p34 = scmp.ge.s32.totalorder %s33, 1
      %s35 = scalar_select %p34, 0, %s33
      %s36 = sadd.s32 1, %s23
      %s37 = scalar_select %p34, %s36, %s23
      %p38 = scmp.ge.s32.totalorder %s37, 1
      %s39 = scalar_select %p38, 0, %s37
      %s40 = sadd.s32 1, %s22
      %s41 = scalar_select %p38, %s40, %s22
      %p42 = scmp.ge.s32.totalorder %s41, 1
      %s43 = scalar_select %p42, 0, %s41
      %s44 = sadd.s32 1, %s21
      %s45 = scalar_select %p42, %s44, %s21
      %p46 = scmp.ge.s32.totalorder %s45, 4
      %s47 = scalar_select %p46, 0, %s45
      %s48 = ssub.s32 %s21, %s47
      %s49 = ssub.s32 %s22, %s43
      %s50 = sor.u32 %s48, %s49
      %s51 = ssub.s32 %s24, %s35
      %s52 = sor.u32 %s50, %s51
      %p53 = scmp.eq.s32.totalorder %s52, 0
      %s55 = sadd.s32 %s54, 1
      %s56 = scalar_select %p53, %s54, %s55
      %p59 = pneg %p53
      %p60 = scmp.eq.s32.totalorder %s14, 3
      %p61 = por %p59, %p60
      %p62 = scmp.ne.s32.totalorder %s54, %s57
      %p63 = scmp.eq.s32.totalorder %s14, 0
      %p64 = por %p62, %p63
      %p65 = scmp.ne.s32.totalorder %s54, %s57
      %p66 = scmp.eq.s32.totalorder %s19, 3
      %p67 = por %p65, %p66
      %p68 = scmp.ne.s32.totalorder %s57, %s58
      %p69 = scmp.eq.s32.totalorder %s19, 0
      %p70 = por %p68, %p69
      %p71 = scmp.ne.s32.totalorder %s57, %s58
      %p72 = scmp.eq.s32.totalorder %s20, 3
      %p73 = por %p71, %p72
      %p75 = scmp.ne.s32.totalorder %s58, %s74
      %p76 = scmp.eq.s32.totalorder %s20, 0
      %p77 = por %p75, %p76
      %s78 = ssub.s32 %s21, %s47
      %s79 = ssub.s32 %s24, %s35
      %s80 = sor.u32 %s78, %s79
      %s81 = ssub.s32 %s23, %s39
      %s82 = sor.u32 %s80, %s81
      %p83 = scmp.eq.s32.totalorder %s82, 0
      %s85 = sadd.s32 %s84, 1
      %s86 = scalar_select %p83, %s84, %s85
      %p89 = pneg %p83
      %p90 = scmp.eq.s32.totalorder %s14, 3
      %p91 = por %p89, %p90
      %p92 = scmp.ne.s32.totalorder %s84, %s87
      %p93 = scmp.eq.s32.totalorder %s14, 0
      %p94 = por %p92, %p93
      %p95 = scmp.ne.s32.totalorder %s84, %s87
      %p96 = scmp.eq.s32.totalorder %s19, 3
      %p97 = por %p95, %p96
      %p98 = scmp.ne.s32.totalorder %s87, %s88
      %p99 = scmp.eq.s32.totalorder %s19, 0
      %p100 = por %p98, %p99
      %p101 = scmp.ne.s32.totalorder %s87, %s88
      %p102 = scmp.eq.s32.totalorder %s20, 3
      %p103 = por %p101, %p102
      %p105 = scmp.ne.s32.totalorder %s88, %s104
      %p106 = scmp.eq.s32.totalorder %s20, 0
      %p107 = por %p105, %p106
      %s108 = ssub.s32 %s23, %s39
      %p109 = scmp.eq.s32.totalorder %s108, 0
      %s111 = sadd.s32 %s110, 1
      %s112 = scalar_select %p109, %s110, %s111
      %p115 = pneg %p109
      %p116 = scmp.eq.s32.totalorder %s14, 3
      %p117 = por %p115, %p116
      %p118 = scmp.ne.s32.totalorder %s110, %s113
      %p119 = scmp.eq.s32.totalorder %s14, 0
      %p120 = por %p118, %p119
      %p121 = scmp.ne.s32.totalorder %s110, %s113
      %p122 = scmp.eq.s32.totalorder %s19, 3
      %p123 = por %p121, %p122
      %p124 = scmp.ne.s32.totalorder %s113, %s114
      %p125 = scmp.eq.s32.totalorder %s19, 0
      %p126 = por %p124, %p125
      %p127 = scmp.ne.s32.totalorder %s113, %s114
      %p128 = scmp.eq.s32.totalorder %s20, 3
      %p129 = por %p127, %p128
      %p131 = scmp.ne.s32.totalorder %s114, %s130
      %p132 = scmp.eq.s32.totalorder %s20, 0
      %p133 = por %p131, %p132
      %s134 = ssub.s32 %s23, %s39
      %p135 = scmp.eq.s32.totalorder %s134, 0
      %s137 = sadd.s32 %s136, 1
      %s138 = scalar_select %p135, %s136, %s137
      %p141 = pneg %p135
      %p142 = scmp.eq.s32.totalorder %s14, 3
      %p143 = por %p141, %p142
      %p144 = scmp.ne.s32.totalorder %s136, %s139
      %p145 = scmp.eq.s32.totalorder %s14, 0
      %p146 = por %p144, %p145
      %p147 = scmp.ne.s32.totalorder %s136, %s139
      %p148 = scmp.eq.s32.totalorder %s19, 3
      %p149 = por %p147, %p148
      %p150 = scmp.ne.s32.totalorder %s139, %s140
      %p151 = scmp.eq.s32.totalorder %s19, 0
      %p152 = por %p150, %p151
      %p153 = scmp.ne.s32.totalorder %s139, %s140
      %p154 = scmp.eq.s32.totalorder %s20, 3
      %p155 = por %p153, %p154
      %p157 = scmp.ne.s32.totalorder %s140, %s156
      %p158 = scmp.eq.s32.totalorder %s20, 0
      %p159 = por %p157, %p158
      %s160 = ssub.s32 %s21, %s47
      %s161 = ssub.s32 %s22, %s43
      %s162 = sor.u32 %s160, %s161
      %s163 = ssub.s32 %s23, %s39
      %s164 = sor.u32 %s162, %s163
      %p165 = scmp.eq.s32.totalorder %s164, 0
      %s167 = sadd.s32 %s166, 1
      %s168 = scalar_select %p165, %s166, %s167
      %p171 = pneg %p165
      %p172 = scmp.eq.s32.totalorder %s14, 3
      %p173 = por %p171, %p172
      %p174 = scmp.ne.s32.totalorder %s166, %s169
      %p175 = scmp.eq.s32.totalorder %s14, 0
      %p176 = por %p174, %p175
      %p177 = scmp.ne.s32.totalorder %s166, %s169
      %p178 = scmp.eq.s32.totalorder %s19, 3
      %p179 = por %p177, %p178
      %p180 = scmp.ne.s32.totalorder %s169, %s170
      %p181 = scmp.eq.s32.totalorder %s19, 0
      %p182 = por %p180, %p181
      %p183 = scmp.ne.s32.totalorder %s169, %s170
      %p184 = scmp.eq.s32.totalorder %s20, 3
      %p185 = por %p183, %p184
      %p187 = scmp.ne.s32.totalorder %s170, %s186
      %p188 = scmp.eq.s32.totalorder %s20, 0
      %p189 = por %p187, %p188
      %p190 = scmp.le.s32.totalorder 1, %s14
      %p191 = scmp.lt.s32.totalorder %s14, 5
      %p192 = pnand %p190, %p191
      %p193 = pneg %p192
      // Predicated region
      $region9: #{_lambda_.5} parent=5 // pred_check
        _
      $region10: #{_lambda_.5} parent=5 // pred_check_branch
        %195 = sbr.rel (%p192) target = $region12
      $region11: #{_lambda_.5} parent=5 // pred_region
        %s196 = ssub.s32 %s14, 1
        // Predicated region
        $region13: #{_lambda_.5} parent=11 // pred_check
          %p197 = pneg %p126
        $region14: #{_lambda_.5} parent=11 // pred_check_branch
          %199 = sbr.rel (%p197) target = $region16
        $region15: #{_lambda_.5} parent=11 // pred_region
          %s201 = ssub.s32 16, 16
          %202 = vsyncadd [#allocation6], %s201
          %s203 = smul.addr %s27, 16
          %s204 = scalar_lea.hbm %s2, %s203
          %s206 = sshll.u32 [#allocation5], 4
          %s207 = int_to_ptr.vmem [resolvable:$true] %s206
          %209 = dma.hbm_to_vmem [thread:$0]  %s204, 16, %s207, [#allocation6]
        $region16: #{_lambda_.5} parent=11 // pred_fallthru
          _
        // Predicated region
        $region17: #{_lambda_.5} parent=11 // pred_check
          %p210 = pneg %p152
        $region18: #{_lambda_.5} parent=11 // pred_check_branch
          %212 = sbr.rel (%p210) target = $region20
        $region19: #{_lambda_.5} parent=11 // pred_region
          %s214 = ssub.s32 16, 16
          %215 = vsyncadd [#allocation6], %s214
          %s216 = smul.addr %s27, 16
          %s217 = scalar_lea.hbm %s3, %s216
          %s219 = sshll.u32 [#allocation7], 4
          %s220 = int_to_ptr.vmem [resolvable:$true] %s219
          %222 = dma.hbm_to_vmem [thread:$0]  %s217, 16, %s220, [#allocation6]
        $region20: #{_lambda_.5} parent=11 // pred_fallthru
          _
      $region12: #{_lambda_.5} parent=5 // pred_fallthru
        _
      %p223 = scmp.lt.s32.totalorder %s14, 4
      // Predicated region
      $region21: #{_lambda_.5} parent=5 // pred_check
        %p224 = pneg %p223
      $region22: #{_lambda_.5} parent=5 // pred_check_branch
        %226 = sbr.rel (%p224) target = $region24
      $region23: #{_lambda_.5} parent=5 // pred_region
        // Predicated region
        $region25: #{_lambda_.5} parent=23 // pred_check
          %p227 = pneg %p64
        $region26: #{_lambda_.5} parent=23 // pred_check_branch
          %229 = sbr.rel (%p227) target = $region28
        $region27: #{_lambda_.5} parent=23 // pred_region
          %s230 = smul.u32 4, %s22
          %s231 = smul.u32 2, %s24
          %p232 = scmp.lt.s32.totalorder %s21, 3
          %s233 = scalar_select %p232, %s21, 3
          %p234 = scmp.lt.s32.totalorder %s230, 3
          %s235 = scalar_select %p234, %s230, 3
          %p236 = scmp.lt.s32.totalorder %s231, 1
          %s237 = scalar_select %p236, %s231, 1
          %s238 = smul.addr %s235, 2
          %s239 = sadd.s32 %s237, %s238
          %s240 = smul.addr %s233, 8
          %s241 = sadd.s32 %s239, %s240
          %s242 = smul.addr %s241, 4
          %s243 = scalar_lea.vmem %s0, %s242
          %s244 = smul.u32 4, %s22
          %s245 = smul.u32 2, %s24
        $region28: #{_lambda_.5} parent=23 // pred_fallthru
          _
        // Predicated region
        $region29: #{_lambda_.5} parent=23 // pred_check
          %p246 = pneg %p94
        $region30: #{_lambda_.5} parent=23 // pred_check_branch
          %248 = sbr.rel (%p246) target = $region32
        $region31: #{_lambda_.5} parent=23 // pred_region
          %s249 = sand.u32 %s84, 1
          %s250 = scalar_lea.sflag [#allocation4], %s249
          %s251 = sand.u32 %s84, 1
          %s252 = smul.addr %s251, 128
          %s253 = scalar_lea.vmem [#allocation3], %s252
          %s254 = smul.u32 32, %s24
          %s256 = ssub.s32 2048, 2048
          %257 = vsyncadd %s250, %s256
          %s258 = sadd.s32 %s23, %s254
          %s259 = smul.addr %s21, 32
          %s260 = sadd.s32 %s258, %s259
          %s261 = smul.addr %s260, 64
          %s262 = scalar_lea.hbm %s1, %s261
          %s263 = sshll.u32 %s253, 4
          %s264 = int_to_ptr.vmem [resolvable:$true] %s263
          %269 = dma.hbm_to_vmem [thread:$0]  %s262, 2048, %s264, %s250, 64, 64, 4
        $region32: #{_lambda_.5} parent=23 // pred_fallthru
          _
      $region24: #{_lambda_.5} parent=5 // pred_fallthru
        _
      %p270 = scmp.le.s32.totalorder 1, %s14
      %p271 = scmp.lt.s32.totalorder %s14, 5
      %p272 = pnand %p270, %p271
      %p273 = pneg %p272
      // Predicated region
      $region33: #{_lambda_.5} parent=5 // pred_check
        _
      $region34: #{_lambda_.5} parent=5 // pred_check_branch
        %275 = sbr.rel (%p272) target = $region36
      $region35: #{_lambda_.5} parent=5 // pred_region
        %s276 = ssub.s32 %s14, 1
        %s277 = sand.u32 %s87, 1
        %s278 = scalar_lea.sflag [#allocation4], %s277
        %s279 = sand.u32 %s87, 1
        %s280 = smul.addr %s279, 128
        %s281 = scalar_lea.vmem [#allocation3], %s280
        // Predicated region
        $region37: #{_lambda_.5} parent=35 // pred_check
          %p282 = pneg %p100
        $region38: #{_lambda_.5} parent=35 // pred_check_branch
          %284 = sbr.rel (%p282) target = $region40
        $region39: #{_lambda_.5} parent=35 // pred_region
          %285 = dma.done %s278, 2048
        $region40: #{_lambda_.5} parent=35 // pred_fallthru
          _
        // Predicated region
        $region41: #{_lambda_.5} parent=35 // pred_check
          %p286 = pneg %p126
        $region42: #{_lambda_.5} parent=35 // pred_check_branch
          %288 = sbr.rel (%p286) target = $region44
        $region43: #{_lambda_.5} parent=35 // pred_region
          %289 = dma.done [#allocation6], 16
        $region44: #{_lambda_.5} parent=35 // pred_fallthru
          _
        // Predicated region
        $region45: #{_lambda_.5} parent=35 // pred_check
          %p290 = pneg %p152
        $region46: #{_lambda_.5} parent=35 // pred_check_branch
          %292 = sbr.rel (%p290) target = $region48
        $region47: #{_lambda_.5} parent=35 // pred_region
          %293 = dma.done [#allocation6], 16
        $region48: #{_lambda_.5} parent=35 // pred_fallthru
          _
        %s294 = smul.u32 4, %s26
        %s295 = smul.u32 2, %s28
        %p296 = scmp.lt.s32.totalorder %s25, 3
        %s297 = scalar_select %p296, %s25, 3
        %p298 = scmp.lt.s32.totalorder %s294, 3
        %s299 = scalar_select %p298, %s294, 3
        %p300 = scmp.lt.s32.totalorder %s295, 1
        %s301 = scalar_select %p300, %s295, 1
        %s302 = smul.addr %s299, 2
        %s303 = sadd.s32 %s301, %s302
        %s304 = smul.addr %s297, 8
        %s305 = sadd.s32 %s303, %s304
        %s306 = smul.addr %s305, 4
        %s307 = scalar_lea.vmem %s0, %s306
        %p308 = pneg %p70
        %p309 = pneg %p67
        %s310 = sand.u32 %s87, 1
        %s311 = scalar_lea.sflag [#allocation4], %s310
        %s312 = sand.u32 %s87, 1
        %s313 = smul.addr %s312, 128
        %s314 = scalar_lea.vmem [#allocation3], %s313
        %p315 = pneg %p100
        %p316 = pneg %p97
        %p317 = pneg %p126
        %p318 = pneg %p123
        %p319 = pneg %p152
        %p320 = pneg %p149
        %p321 = pneg %p182
        %p322 = pneg %p179
        %s323 = smul.u32 4, %s26
        %p324 = scmp.lt.s32.totalorder %s25, 3
        %s325 = scalar_select %p324, %s25, 3
        %p326 = scmp.lt.s32.totalorder %s323, 3
        %s327 = scalar_select %p326, %s323, 3
        %p328 = scmp.lt.s32.totalorder %s27, 0
        %s329 = scalar_select %p328, %s27, 0
        %s330 = sadd.s32 %s329, %s327
        %s331 = smul.addr %s325, 4
        %s332 = sadd.s32 %s330, %s331
        %s333 = smul.addr %s332, 4
        %s334 = scalar_lea.vmem %s4, %s333
        %s335 = smul.u32 4, %s26
        %s336 = smul.u32 2, %s28
        %p337 = scmp.lt.s32.totalorder %s25, 3
        %s338 = scalar_select %p337, %s25, 3
        %p339 = scmp.lt.s32.totalorder %s335, 3
        %s340 = scalar_select %p339, %s335, 3
        %p341 = scmp.lt.s32.totalorder %s336, 1
        %s342 = scalar_select %p341, %s336, 1
        %s343 = smul.addr %s340, 2
        %s344 = sadd.s32 %s342, %s343
        %s345 = smul.addr %s338, 8
        %s346 = sadd.s32 %s344, %s345
        %s347 = smul.addr %s346, 4
        %s348 = scalar_lea.vmem %s0, %s347
        %s349 = smul.u32 4, %s26
        %s350 = smul.u32 2, %s28
        %s351 = smul.u32 32, %s28
        %s352 = smul.u32 4, %s26
        %p353 = scmp.lt.s32.totalorder %s25, 3
        %s354 = scalar_select %p353, %s25, 3
        %p355 = scmp.lt.s32.totalorder %s352, 3
        %s356 = scalar_select %p355, %s352, 3
        %p357 = scmp.lt.s32.totalorder %s27, 0
        %s358 = scalar_select %p357, %s27, 0
        %s359 = sadd.s32 %s358, %s356
        %s360 = smul.addr %s354, 4
        %s361 = sadd.s32 %s359, %s360
        %s362 = smul.addr %s361, 4
        %s363 = scalar_lea.vmem %s4, %s362
        %s364 = smul.u32 4, %s26
        %p366 = scmp.eq.s32.totalorder %s28, 0
        // Predicated region
        $region49: #{_lambda_.5} parent=35 // pred_check
          %p367 = pneg %p366
        $region50: #{_lambda_.5} parent=35 // pred_check_branch
          %369 = sbr.rel (%p367) target = $region52
        $region51: #{_lambda_.5} parent=35 // pred_region
          %370 = vst [vmem:[#allocation2] sm:$0xff] 0.0
          %371 = vst [vmem:[#allocation2 + $0x8] sm:$0xff] 0.0
          %372 = vst [vmem:[#allocation2 + $0x10] sm:$0xff] 0.0
          %373 = vst [vmem:[#allocation2 + $0x18] sm:$0xff] 0.0
        $region52: #{_lambda_.5} parent=35 // pred_fallthru
          _
        %v374 = vld [vmem:[#allocation2] sm:$0xff]
        %v375 = vld [vmem:[#allocation2 + $0x8] sm:$0xff]
        %v376 = vld [vmem:[#allocation2 + $0x10] sm:$0xff]
        %v377 = vld [vmem:[#allocation2 + $0x18] sm:$0xff]
        %v378 = vld [vmem:[%s348] sm:$0xff]
        %v379 = vld [vmem:[%s348 + $0x8] sm:$0xff]
        %v380 = vld [vmem:[%s348 + $0x10] sm:$0xff]
        %v381 = vld [vmem:[%s348 + $0x18] sm:$0xff]
        %v382 = vld [vmem:[%s281] sm:$0xf]
        %v383 = vld [vmem:[%s281 + $0x4] sm:$0xf]
        %v384 = vld [vmem:[%s281 + $0x8] sm:$0xf]
        %v385 = vld [vmem:[%s281 + $0xc] sm:$0xf]
        %v386 = vld [vmem:[%s281 + $0x10] sm:$0xf]
        %v387 = vld [vmem:[%s281 + $0x14] sm:$0xf]
        %v388 = vld [vmem:[%s281 + $0x18] sm:$0xf]
        %v389 = vld [vmem:[%s281 + $0x1c] sm:$0xf]
        %v390 = vld [vmem:[%s281 + $0x20] sm:$0xf]
        %v391 = vld [vmem:[%s281 + $0x24] sm:$0xf]
        %v392 = vld [vmem:[%s281 + $0x28] sm:$0xf]
        %v393 = vld [vmem:[%s281 + $0x2c] sm:$0xf]
        %v394 = vld [vmem:[%s281 + $0x30] sm:$0xf]
        %v395 = vld [vmem:[%s281 + $0x34] sm:$0xf]
        %v396 = vld [vmem:[%s281 + $0x38] sm:$0xf]
        %v397 = vld [vmem:[%s281 + $0x3c] sm:$0xf]
        %v398 = vld [vmem:[%s281 + $0x40] sm:$0xf]
        %v399 = vld [vmem:[%s281 + $0x44] sm:$0xf]
        %v400 = vld [vmem:[%s281 + $0x48] sm:$0xf]
        %v401 = vld [vmem:[%s281 + $0x4c] sm:$0xf]
        %v402 = vld [vmem:[%s281 + $0x50] sm:$0xf]
        %v403 = vld [vmem:[%s281 + $0x54] sm:$0xf]
        %v404 = vld [vmem:[%s281 + $0x58] sm:$0xf]
        %v405 = vld [vmem:[%s281 + $0x5c] sm:$0xf]
        %v406 = vld [vmem:[%s281 + $0x60] sm:$0xf]
        %v407 = vld [vmem:[%s281 + $0x64] sm:$0xf]
        %v408 = vld [vmem:[%s281 + $0x68] sm:$0xf]
        %v409 = vld [vmem:[%s281 + $0x6c] sm:$0xf]
        %v410 = vld [vmem:[%s281 + $0x70] sm:$0xf]
        %v411 = vld [vmem:[%s281 + $0x74] sm:$0xf]
        %v412 = vld [vmem:[%s281 + $0x78] sm:$0xf]
        %v413 = vld [vmem:[%s281 + $0x7c] sm:$0xf]
        %v418 = vunpack.c.l.b16 %v378
        %v419 = vunpack.c.h.b16 %v378
        %v420 = vunpack.c.l.b16 %v379
        %v421 = vunpack.c.h.b16 %v379
        %v422 = vunpack.c.l.b16 %v380
        %v423 = vunpack.c.h.b16 %v380
        %v424 = vunpack.c.l.b16 %v381
        %v425 = vunpack.c.h.b16 %v381
        %v426 = vpack.c.b16 %v420, %v418
        %v427 = vpack.c.b16 %v421, %v419
        %v428 = vpack.c.b16 %v424, %v422
        %v429 = vpack.c.b16 %v425, %v423
        %v466 = vunpack.c.l.b16 %v382
        %v467 = vunpack.c.l.b16 %v383
        %v468 = vunpack.c.l.b16 %v384
        %v469 = vunpack.c.l.b16 %v385
        %v470 = vunpack.c.l.b16 %v386
        %v471 = vunpack.c.l.b16 %v387
        %v472 = vunpack.c.l.b16 %v388
        %v473 = vunpack.c.l.b16 %v389
        %v474 = vunpack.c.l.b16 %v390
        %v475 = vunpack.c.l.b16 %v391
        %v476 = vunpack.c.l.b16 %v392
        %v477 = vunpack.c.l.b16 %v393
        %v478 = vunpack.c.l.b16 %v394
        %v479 = vunpack.c.l.b16 %v395
        %v480 = vunpack.c.l.b16 %v396
        %v481 = vunpack.c.l.b16 %v397
        %v482 = vunpack.c.l.b16 %v398
        %v483 = vunpack.c.l.b16 %v399
        %v484 = vunpack.c.l.b16 %v400
        %v485 = vunpack.c.l.b16 %v401
        %v486 = vunpack.c.l.b16 %v402
        %v487 = vunpack.c.l.b16 %v403
        %v488 = vunpack.c.l.b16 %v404
        %v489 = vunpack.c.l.b16 %v405
        %v490 = vunpack.c.l.b16 %v406
        %v491 = vunpack.c.l.b16 %v407
        %v492 = vunpack.c.l.b16 %v408
        %v493 = vunpack.c.l.b16 %v409
        %v494 = vunpack.c.l.b16 %v410
        %v495 = vunpack.c.l.b16 %v411
        %v496 = vunpack.c.l.b16 %v412
        %v497 = vunpack.c.l.b16 %v413
        %v498 = vpack.c.b16 %v467, %v466
        %v499 = vpack.c.b16 %v469, %v468
        %v500 = vpack.c.b16 %v471, %v470
        %v501 = vpack.c.b16 %v473, %v472
        %v502 = vpack.c.b16 %v475, %v474
        %v503 = vpack.c.b16 %v477, %v476
        %v504 = vpack.c.b16 %v479, %v478
        %v505 = vpack.c.b16 %v481, %v480
        %v506 = vpack.c.b16 %v483, %v482
        %v507 = vpack.c.b16 %v485, %v484
        %v508 = vpack.c.b16 %v487, %v486
        %v509 = vpack.c.b16 %v489, %v488
        %v510 = vpack.c.b16 %v491, %v490
        %v511 = vpack.c.b16 %v493, %v492
        %v512 = vpack.c.b16 %v495, %v494
        %v513 = vpack.c.b16 %v497, %v496
        %530 = vmatprep.subr.bf16.mxu0 0
        %531 = vmatpush1.bf16.msra.mxu0 %v498
        %532 = vmatprep.subr.bf16.mxu0 0
        %533 = vmatpush1.bf16.msra.mxu0 %v499
        %534 = vmatprep.subr.bf16.mxu0 0
        %535 = vmatpush1.bf16.msra.mxu0 %v500
        %536 = vmatprep.subr.bf16.mxu0 0
        %537 = vmatpush1.bf16.msra.mxu0 %v501
        %538 = vmatprep.subr.bf16.mxu0 0
        %539 = vmatpush1.bf16.msra.mxu0 %v502
        %540 = vmatprep.subr.bf16.mxu0 0
        %541 = vmatpush1.bf16.msra.mxu0 %v503
        %542 = vmatprep.subr.bf16.mxu0 0
        %543 = vmatpush1.bf16.msra.mxu0 %v504
        %544 = vmatprep.subr.bf16.mxu0 0
        %545 = vmatpush1.bf16.msra.mxu0 %v505
        %546 = vmatprep.subr.bf16.mxu0 0
        %547 = vmatpush1.bf16.msra.mxu0 %v506
        %548 = vmatprep.subr.bf16.mxu0 0
        %549 = vmatpush1.bf16.msra.mxu0 %v507
        %550 = vmatprep.subr.bf16.mxu0 0
        %551 = vmatpush1.bf16.msra.mxu0 %v508
        %552 = vmatprep.subr.bf16.mxu0 0
        %553 = vmatpush1.bf16.msra.mxu0 %v509
        %554 = vmatprep.subr.bf16.mxu0 0
        %555 = vmatpush1.bf16.msra.mxu0 %v510
        %556 = vmatprep.subr.bf16.mxu0 0
        %557 = vmatpush1.bf16.msra.mxu0 %v511
        %558 = vmatprep.subr.bf16.mxu0 0
        %559 = vmatpush1.bf16.msra.mxu0 %v512
        %560 = vmatprep.subr.bf16.mxu0 0
        %561 = vmatpush1.bf16.msra.mxu0 %v513
        %562 = vmatprep.mubr.bf16.mxu0 %v427
        %563 = vmatmul.mubr.bf16.gmra.mrb[0].mxu0 %v426
        %v564 = vpop.f32.mrb[0].mxu0
        %v565 = vadd.f32 0.0, %v564
        %v566 = vpop.f32.mrb[0].mxu0
        %v567 = vpop.f32.mrb[0].mxu0
        %v568 = vadd.f32 0.0, %v567
        %v569 = vpop.f32.mrb[0].mxu0
        %570 = vmatprep.mubr.bf16.mxu0 %v429
        %571 = vmatmul.mubr.bf16.gmra.mrb[0].mxu0 %v428
        %v572 = vpop.f32.mrb[0].mxu0
        %v573 = vadd.f32 0.0, %v572
        %v574 = vpop.f32.mrb[0].mxu0
        %v575 = vpop.f32.mrb[0].mxu0
        %v576 = vadd.f32 0.0, %v575
        %v577 = vpop.f32.mrb[0].mxu0
        %578 = vdwg.mxu0
        %v579 = vadd.f32 %v374, %v565
        %v580 = vadd.f32 %v375, %v568
        %v581 = vadd.f32 %v376, %v573
        %v582 = vadd.f32 %v377, %v576
        %583 = vst [vmem:[#allocation2] sm:$0xff] %v579
        %584 = vst [vmem:[#allocation2 + $0x8] sm:$0xff] %v580
        %585 = vst [vmem:[#allocation2 + $0x10] sm:$0xff] %v581
        %586 = vst [vmem:[#allocation2 + $0x18] sm:$0xff] %v582
        // Predicated region
        $region53: #{_lambda_.5} parent=35 // pred_check
          %p587 = pneg %p366
        $region54: #{_lambda_.5} parent=35 // pred_check_branch
          %589 = sbr.rel (%p587) target = $region56
        $region55: #{_lambda_.5} parent=35 // pred_region
          %v590 = vld [vmem:[#allocation2] sm:$0xff]
          %v591 = vld [vmem:[#allocation2 + $0x8] sm:$0xff]
          %v592 = vld [vmem:[#allocation2 + $0x10] sm:$0xff]
          %v593 = vld [vmem:[#allocation2 + $0x18] sm:$0xff]
          %v594 = vld [vmem:[#allocation5] sm:$0x1]
          %v596 = vlaneseq
          %v597 = vshrl.u32 %v596, 7
          %v598 = vsub.s32 0, %v597
          %v599 = vrot.slane %v594, %v598
          %v601 = vmul.f32 %v590, %v599
          %v602 = vmul.f32 %v591, %v599
          %v603 = vmul.f32 %v592, %v599
          %v604 = vmul.f32 %v593, %v599
          %v605 = vld [vmem:[#allocation7] sm:$0x1]
          %v607 = vlaneseq
          %v608 = vshrl.u32 %v607, 7
          %v609 = vsub.s32 0, %v608
          %v610 = vrot.slane %v605, %v609
          %v612 = vadd.f32 %v601, %v610
          %v613 = vadd.f32 %v602, %v610
          %v614 = vadd.f32 %v603, %v610
          %v615 = vadd.f32 %v604, %v610
          %v616 = vmax.f32 %v612, 0.0
          %v617 = vmax.f32 %v613, 0.0
          %v618 = vmax.f32 %v614, 0.0
          %v619 = vmax.f32 %v615, 0.0
          %v620 = vpack.c.bf16 %v617, %v616
          %v621 = vpack.c.bf16 %v619, %v618
          %v624 = vunpack.c.l.b16 %v620
          %v625 = vunpack.c.h.b16 %v620
          %v626 = vunpack.c.l.b16 %v621
          %v627 = vunpack.c.h.b16 %v621
          %v628 = vpack.c.b16 %v624, %v624
          %v629 = vpack.c.b16 %v625, %v625
          %v630 = vpack.c.b16 %v626, %v626
          %v631 = vpack.c.b16 %v627, %v627
          %636 = vst [vmem:[%s363] sm:$0xf] %v628
          %637 = vst [vmem:[%s363 + $0x4] sm:$0xf] %v629
          %638 = vst [vmem:[%s363 + $0x8] sm:$0xf] %v630
          %639 = vst [vmem:[%s363 + $0xc] sm:$0xf] %v631
        $region56: #{_lambda_.5} parent=35 // pred_fallthru
          _
        %s640 = smul.u32 4, %s26
        %p641 = scmp.lt.s32.totalorder %s25, 3
        %s642 = scalar_select %p641, %s25, 3
        %p643 = scmp.lt.s32.totalorder %s640, 3
        %s644 = scalar_select %p643, %s640, 3
        %p645 = scmp.lt.s32.totalorder %s27, 0
        %s646 = scalar_select %p645, %s27, 0
        %s647 = sadd.s32 %s646, %s644
        %s648 = smul.addr %s642, 4
        %s649 = sadd.s32 %s647, %s648
        %s650 = smul.addr %s649, 4
        %s651 = scalar_lea.vmem %s4, %s650
        // Predicated region
        $region57: #{_lambda_.5} parent=35 // pred_check
          %p652 = pneg %p179
        $region58: #{_lambda_.5} parent=35 // pred_check_branch
          %654 = sbr.rel (%p652) target = $region60
        $region59: #{_lambda_.5} parent=35 // pred_region
          %s655 = smul.u32 4, %s26
        $region60: #{_lambda_.5} parent=35 // pred_fallthru
          _
      $region36: #{_lambda_.5} parent=5 // pred_fallthru
        _
      %p656 = scmp.le.s32.totalorder 2, %s14
      // Predicated region
      $region61: #{_lambda_.5} parent=5 // pred_check
        %p657 = pneg %p656
      $region62: #{_lambda_.5} parent=5 // pred_check_branch
        %659 = sbr.rel (%p657) target = $region64
      $region63: #{_lambda_.5} parent=5 // pred_region
        %s660 = ssub.s32 %s14, 2
        // Predicated region
        $region65: #{_lambda_.5} parent=63 // pred_check
          %p661 = pneg %p185
        $region66: #{_lambda_.5} parent=63 // pred_check_branch
          %663 = sbr.rel (%p661) target = $region68
        $region67: #{_lambda_.5} parent=63 // pred_region
          %s664 = smul.u32 4, %s30
          %p665 = scmp.lt.s32.totalorder %s29, 3
          %s666 = scalar_select %p665, %s29, 3
          %p667 = scmp.lt.s32.totalorder %s664, 3
          %s668 = scalar_select %p667, %s664, 3
          %p669 = scmp.lt.s32.totalorder %s31, 0
          %s670 = scalar_select %p669, %s31, 0
          %s671 = sadd.s32 %s670, %s668
          %s672 = smul.addr %s666, 4
          %s673 = sadd.s32 %s671, %s672
          %s674 = smul.addr %s673, 4
          %s675 = scalar_lea.vmem %s4, %s674
        $region68: #{_lambda_.5} parent=63 // pred_fallthru
          _
      $region64: #{_lambda_.5} parent=5 // pred_fallthru
        _
    $region6: #{_lambda_.5} parent=1 // loop_footer
      %s18 = sadd.s32 1, %s14
    $region7: #{_lambda_.5} parent=1 // loop_footer_branch
      %13 = sbr.rel target = $region3
    $region8: #{_lambda_.5} parent=1 // loop_exit
      _
    %676 = vsyncpa [#allocation4], 1
    %s677 = scalar_lea.sflag [#allocation4], 1
    %678 = vsyncpa %s677, 1
    %679 = vsyncpa [#allocation6], 1

// kernel: _lambda_.6
$region0: #{_lambda_.6}
  #allocation0 [shape = 'u32[]', space=smem, size = 0x4, offset = 0x4, fixed_abs, tag = 'smem constant byte address 0x4 - core index']
  #allocation1 [shape = 'u32[144,128]{1,0:T(1,128)}', space=vmem, size = 0x12000, scoped, tag = 'internal scratch']
  #allocation2 [shape = 'f32[128,128]{1,0:T(8,128)}', space=vmem, size = 0x10000, scoped, tag = 'scratch operand']
  %s0 = inlined_call_operand.vmem [shape: bf16[4,128,128], index: 0, kind: input, shape index: {}]
  %s1 = inlined_call_operand.vmem [shape: bf16[4,128,128], index: 1, kind: input, shape index: {}]
  %s2 = inlined_call_operand.vmem [shape: f32[1,128], index: 2, kind: input, shape index: {}]
  %s3 = inlined_call_operand.vmem [shape: f32[1,128], index: 3, kind: input, shape index: {}]
  %s4 = inlined_call_operand.vmem [shape: bf16[4,128,128], index: 4, kind: output, shape index: {}]
  %s5 = sld [smem:[#allocation0]]
  $region57: #{_lambda_.6} parent=0
    _
  %s7 = ssub.s32 1, %s5
  %s8 = scalar_select 0, %s7, %s5
  loop: start=0, step=1, limit=6
  $region2: #{_lambda_.6} parent=0 // loop_pre_header
    _
  $region3: #{_lambda_.6} parent=0 // loop_header
    %s10 = sphi 0, %s14
    %p11 = scmp.ge.s32.totalorder %s10, 6
    %s17 = sphi 0, %s43
    %s18 = sphi 0, %s39
    %s19 = sphi 0, %s35
    %s20 = sphi 0, %s31
    %s21 = sphi 0, %s17
    %s22 = sphi 0, %s18
    %s23 = sphi 0, %s19
    %s24 = sphi 0, %s20
    %s25 = sphi 0, %s21
    %s26 = sphi 0, %s22
    %s27 = sphi 0, %s23
    %s28 = sphi 0, %s24
    %s50 = sphi 0, %s52
    %s53 = sphi 0, %s50
    %s54 = sphi 0, %s53
    %s70 = sphi 0, %s54
    %s80 = sphi 0, %s82
    %s83 = sphi 0, %s80
    %s84 = sphi 0, %s83
    %s100 = sphi 0, %s84
    %s106 = sphi 0, %s108
    %s109 = sphi 0, %s106
    %s110 = sphi 0, %s109
    %s126 = sphi 0, %s110
    %s132 = sphi 0, %s134
    %s135 = sphi 0, %s132
    %s136 = sphi 0, %s135
    %s152 = sphi 0, %s136
    %s162 = sphi 0, %s164
    %s165 = sphi 0, %s162
    %s166 = sphi 0, %s165
    %s182 = sphi 0, %s166
  $region4: #{_lambda_.6} parent=0 // loop_header_branch
    %13 = sbr.rel (%p11) target = $region8
  $region5: #{_lambda_.6} parent=0 // loop_body
    %s15 = ssub.s32 %s10, 1
    %s16 = ssub.s32 %s10, 2
    %s29 = sadd.s32 1, %s20
    %p30 = scmp.ge.s32.totalorder %s29, 1
    %s31 = scalar_select %p30, 0, %s29
    %s32 = sadd.s32 1, %s19
    %s33 = scalar_select %p30, %s32, %s19
    %p34 = scmp.ge.s32.totalorder %s33, 1
    %s35 = scalar_select %p34, 0, %s33
    %s36 = sadd.s32 1, %s18
    %s37 = scalar_select %p34, %s36, %s18
    %p38 = scmp.ge.s32.totalorder %s37, 1
    %s39 = scalar_select %p38, 0, %s37
    %s40 = sadd.s32 1, %s17
    %s41 = scalar_select %p38, %s40, %s17
    %p42 = scmp.ge.s32.totalorder %s41, 4
    %s43 = scalar_select %p42, 0, %s41
    %s44 = ssub.s32 %s17, %s43
    %s45 = ssub.s32 %s18, %s39
    %s46 = sor.u32 %s44, %s45
    %s47 = ssub.s32 %s20, %s31
    %s48 = sor.u32 %s46, %s47
    %p49 = scmp.eq.s32.totalorder %s48, 0
    %s51 = sadd.s32 %s50, 1
    %s52 = scalar_select %p49, %s50, %s51
    %p55 = pneg %p49
    %p56 = scmp.eq.s32.totalorder %s10, 3
    %p57 = por %p55, %p56
    %p58 = scmp.ne.s32.totalorder %s50, %s53
    %p59 = scmp.eq.s32.totalorder %s10, 0
    %p60 = por %p58, %p59
    %p61 = scmp.ne.s32.totalorder %s50, %s53
    %p62 = scmp.eq.s32.totalorder %s15, 3
    %p63 = por %p61, %p62
    %p64 = scmp.ne.s32.totalorder %s53, %s54
    %p65 = scmp.eq.s32.totalorder %s15, 0
    %p66 = por %p64, %p65
    %p67 = scmp.ne.s32.totalorder %s53, %s54
    %p68 = scmp.eq.s32.totalorder %s16, 3
    %p69 = por %p67, %p68
    %p71 = scmp.ne.s32.totalorder %s54, %s70
    %p72 = scmp.eq.s32.totalorder %s16, 0
    %p73 = por %p71, %p72
    %s74 = ssub.s32 %s17, %s43
    %s75 = ssub.s32 %s20, %s31
    %s76 = sor.u32 %s74, %s75
    %s77 = ssub.s32 %s19, %s35
    %s78 = sor.u32 %s76, %s77
    %p79 = scmp.eq.s32.totalorder %s78, 0
    %s81 = sadd.s32 %s80, 1
    %s82 = scalar_select %p79, %s80, %s81
    %p85 = pneg %p79
    %p86 = scmp.eq.s32.totalorder %s10, 3
    %p87 = por %p85, %p86
    %p88 = scmp.ne.s32.totalorder %s80, %s83
    %p89 = scmp.eq.s32.totalorder %s10, 0
    %p90 = por %p88, %p89
    %p91 = scmp.ne.s32.totalorder %s80, %s83
    %p92 = scmp.eq.s32.totalorder %s15, 3
    %p93 = por %p91, %p92
    %p94 = scmp.ne.s32.totalorder %s83, %s84
    %p95 = scmp.eq.s32.totalorder %s15, 0
    %p96 = por %p94, %p95
    %p97 = scmp.ne.s32.totalorder %s83, %s84
    %p98 = scmp.eq.s32.totalorder %s16, 3
    %p99 = por %p97, %p98
    %p101 = scmp.ne.s32.totalorder %s84, %s100
    %p102 = scmp.eq.s32.totalorder %s16, 0
    %p103 = por %p101, %p102
    %s104 = ssub.s32 %s19, %s35
    %p105 = scmp.eq.s32.totalorder %s104, 0
    %s107 = sadd.s32 %s106, 1
    %s108 = scalar_select %p105, %s106, %s107
    %p111 = pneg %p105
    %p112 = scmp.eq.s32.totalorder %s10, 3
    %p113 = por %p111, %p112
    %p114 = scmp.ne.s32.totalorder %s106, %s109
    %p115 = scmp.eq.s32.totalorder %s10, 0
    %p116 = por %p114, %p115
    %p117 = scmp.ne.s32.totalorder %s106, %s109
    %p118 = scmp.eq.s32.totalorder %s15, 3
    %p119 = por %p117, %p118
    %p120 = scmp.ne.s32.totalorder %s109, %s110
    %p121 = scmp.eq.s32.totalorder %s15, 0
    %p122 = por %p120, %p121
    %p123 = scmp.ne.s32.totalorder %s109, %s110
    %p124 = scmp.eq.s32.totalorder %s16, 3
    %p125 = por %p123, %p124
    %p127 = scmp.ne.s32.totalorder %s110, %s126
    %p128 = scmp.eq.s32.totalorder %s16, 0
    %p129 = por %p127, %p128
    %s130 = ssub.s32 %s19, %s35
    %p131 = scmp.eq.s32.totalorder %s130, 0
    %s133 = sadd.s32 %s132, 1
    %s134 = scalar_select %p131, %s132, %s133
    %p137 = pneg %p131
    %p138 = scmp.eq.s32.totalorder %s10, 3
    %p139 = por %p137, %p138
    %p140 = scmp.ne.s32.totalorder %s132, %s135
    %p141 = scmp.eq.s32.totalorder %s10, 0
    %p142 = por %p140, %p141
    %p143 = scmp.ne.s32.totalorder %s132, %s135
    %p144 = scmp.eq.s32.totalorder %s15, 3
    %p145 = por %p143, %p144
    %p146 = scmp.ne.s32.totalorder %s135, %s136
    %p147 = scmp.eq.s32.totalorder %s15, 0
    %p148 = por %p146, %p147
    %p149 = scmp.ne.s32.totalorder %s135, %s136
    %p150 = scmp.eq.s32.totalorder %s16, 3
    %p151 = por %p149, %p150
    %p153 = scmp.ne.s32.totalorder %s136, %s152
    %p154 = scmp.eq.s32.totalorder %s16, 0
    %p155 = por %p153, %p154
    %s156 = ssub.s32 %s17, %s43
    %s157 = ssub.s32 %s18, %s39
    %s158 = sor.u32 %s156, %s157
    %s159 = ssub.s32 %s19, %s35
    %s160 = sor.u32 %s158, %s159
    %p161 = scmp.eq.s32.totalorder %s160, 0
    %s163 = sadd.s32 %s162, 1
    %s164 = scalar_select %p161, %s162, %s163
    %p167 = pneg %p161
    %p168 = scmp.eq.s32.totalorder %s10, 3
    %p169 = por %p167, %p168
    %p170 = scmp.ne.s32.totalorder %s162, %s165
    %p171 = scmp.eq.s32.totalorder %s10, 0
    %p172 = por %p170, %p171
    %p173 = scmp.ne.s32.totalorder %s162, %s165
    %p174 = scmp.eq.s32.totalorder %s15, 3
    %p175 = por %p173, %p174
    %p176 = scmp.ne.s32.totalorder %s165, %s166
    %p177 = scmp.eq.s32.totalorder %s15, 0
    %p178 = por %p176, %p177
    %p179 = scmp.ne.s32.totalorder %s165, %s166
    %p180 = scmp.eq.s32.totalorder %s16, 3
    %p181 = por %p179, %p180
    %p183 = scmp.ne.s32.totalorder %s166, %s182
    %p184 = scmp.eq.s32.totalorder %s16, 0
    %p185 = por %p183, %p184
    %p186 = scmp.le.s32.totalorder 1, %s10
    %p187 = scmp.lt.s32.totalorder %s10, 5
    %p188 = pnand %p186, %p187
    %p189 = pneg %p188
    // Predicated region
    $region9: #{_lambda_.6} parent=5 // pred_check
      _
    $region10: #{_lambda_.6} parent=5 // pred_check_branch
      %191 = sbr.rel (%p188) target = $region12
    $region11: #{_lambda_.6} parent=5 // pred_region
      %s192 = ssub.s32 %s10, 1
      // Predicated region
      $region13: #{_lambda_.6} parent=11 // pred_check
        %p193 = pneg %p122
      $region14: #{_lambda_.6} parent=11 // pred_check_branch
        %195 = sbr.rel (%p193) target = $region16
      $region15: #{_lambda_.6} parent=11 // pred_region
        %p196 = scmp.lt.s32.totalorder %s23, 0
        %s197 = scalar_select %p196, %s23, 0
        %s198 = scalar_lea.vmem %s2, %s197
      $region16: #{_lambda_.6} parent=11 // pred_fallthru
        _
      // Predicated region
      $region17: #{_lambda_.6} parent=11 // pred_check
        %p199 = pneg %p148
      $region18: #{_lambda_.6} parent=11 // pred_check_branch
        %201 = sbr.rel (%p199) target = $region20
      $region19: #{_lambda_.6} parent=11 // pred_region
        %p202 = scmp.lt.s32.totalorder %s23, 0
        %s203 = scalar_select %p202, %s23, 0
        %s204 = scalar_lea.vmem %s3, %s203
      $region20: #{_lambda_.6} parent=11 // pred_fallthru
        _
    $region12: #{_lambda_.6} parent=5 // pred_fallthru
      _
    %p205 = scmp.lt.s32.totalorder %s10, 4
    // Predicated region
    $region21: #{_lambda_.6} parent=5 // pred_check
      %p206 = pneg %p205
    $region22: #{_lambda_.6} parent=5 // pred_check_branch
      %208 = sbr.rel (%p206) target = $region24
    $region23: #{_lambda_.6} parent=5 // pred_region
      // Predicated region
      $region25: #{_lambda_.6} parent=23 // pred_check
        %p209 = pneg %p60
      $region26: #{_lambda_.6} parent=23 // pred_check_branch
        %211 = sbr.rel (%p209) target = $region28
      $region27: #{_lambda_.6} parent=23 // pred_region
        %s212 = smul.u32 16, %s18
        %p213 = scmp.lt.s32.totalorder %s17, 3
        %s214 = scalar_select %p213, %s17, 3
        %p215 = scmp.lt.s32.totalorder %s212, 15
        %s216 = scalar_select %p215, %s212, 15
        %p217 = scmp.lt.s32.totalorder %s20, 0
        %s218 = scalar_select %p217, %s20, 0
        %s219 = sadd.s32 %s218, %s216
        %s220 = smul.addr %s214, 16
        %s221 = sadd.s32 %s219, %s220
        %s222 = smul.addr %s221, 4
        %s223 = scalar_lea.vmem %s0, %s222
        %s224 = smul.u32 16, %s18
      $region28: #{_lambda_.6} parent=23 // pred_fallthru
        _
      // Predicated region
      $region29: #{_lambda_.6} parent=23 // pred_check
        %p225 = pneg %p90
      $region30: #{_lambda_.6} parent=23 // pred_check_branch
        %227 = sbr.rel (%p225) target = $region32
      $region31: #{_lambda_.6} parent=23 // pred_region
        %s228 = smul.u32 16, %s20
        %p229 = scmp.lt.s32.totalorder %s17, 3
        %s230 = scalar_select %p229, %s17, 3
        %p231 = scmp.lt.s32.totalorder %s228, 15
        %s232 = scalar_select %p231, %s228, 15
        %p233 = scmp.lt.s32.totalorder %s19, 0
        %s234 = scalar_select %p233, %s19, 0
        %s235 = sadd.s32 %s234, %s232
        %s236 = smul.addr %s230, 16
        %s237 = sadd.s32 %s235, %s236
        %s238 = smul.addr %s237, 4
        %s239 = scalar_lea.vmem %s1, %s238
        %s240 = smul.u32 16, %s20
      $region32: #{_lambda_.6} parent=23 // pred_fallthru
        _
    $region24: #{_lambda_.6} parent=5 // pred_fallthru
      _
    %p241 = scmp.le.s32.totalorder 1, %s10
    %p242 = scmp.lt.s32.totalorder %s10, 5
    %p243 = pnand %p241, %p242
    %p244 = pneg %p243
    // Predicated region
    $region33: #{_lambda_.6} parent=5 // pred_check
      _
    $region34: #{_lambda_.6} parent=5 // pred_check_branch
      %246 = sbr.rel (%p243) target = $region36
    $region35: #{_lambda_.6} parent=5 // pred_region
      %s247 = ssub.s32 %s10, 1
      %s248 = smul.u32 16, %s22
      %p249 = scmp.lt.s32.totalorder %s21, 3
      %s250 = scalar_select %p249, %s21, 3
      %p251 = scmp.lt.s32.totalorder %s248, 15
      %s252 = scalar_select %p251, %s248, 15
      %p253 = scmp.lt.s32.totalorder %s24, 0
      %s254 = scalar_select %p253, %s24, 0
      %s255 = sadd.s32 %s254, %s252
      %s256 = smul.addr %s250, 16
      %s257 = sadd.s32 %s255, %s256
      %s258 = smul.addr %s257, 4
      %s259 = scalar_lea.vmem %s0, %s258
      %p260 = pneg %p66
      %p261 = pneg %p63
      %s262 = smul.u32 16, %s24
      %p263 = scmp.lt.s32.totalorder %s21, 3
      %s264 = scalar_select %p263, %s21, 3
      %p265 = scmp.lt.s32.totalorder %s262, 15
      %s266 = scalar_select %p265, %s262, 15
      %p267 = scmp.lt.s32.totalorder %s23, 0
      %s268 = scalar_select %p267, %s23, 0
      %s269 = sadd.s32 %s268, %s266
      %s270 = smul.addr %s264, 16
      %s271 = sadd.s32 %s269, %s270
      %s272 = smul.addr %s271, 4
      %s273 = scalar_lea.vmem %s1, %s272
      %p274 = pneg %p96
      %p275 = pneg %p93
      %p276 = scmp.lt.s32.totalorder %s23, 0
      %s277 = scalar_select %p276, %s23, 0
      %s278 = scalar_lea.vmem %s2, %s277
      %p279 = pneg %p122
      %p280 = pneg %p119
      %p281 = scmp.lt.s32.totalorder %s23, 0
      %s282 = scalar_select %p281, %s23, 0
      %s283 = scalar_lea.vmem %s3, %s282
      %p284 = pneg %p148
      %p285 = pneg %p145
      %p286 = pneg %p178
      %p287 = pneg %p175
      %s288 = smul.u32 16, %s22
      %p289 = scmp.lt.s32.totalorder %s21, 3
      %s290 = scalar_select %p289, %s21, 3
      %p291 = scmp.lt.s32.totalorder %s288, 15
      %s292 = scalar_select %p291, %s288, 15
      %p293 = scmp.lt.s32.totalorder %s23, 0
      %s294 = scalar_select %p293, %s23, 0
      %s295 = sadd.s32 %s294, %s292
      %s296 = smul.addr %s290, 16
      %s297 = sadd.s32 %s295, %s296
      %s298 = smul.addr %s297, 4
      %s299 = scalar_lea.vmem %s4, %s298
      %s300 = smul.u32 16, %s22
      %p301 = scmp.lt.s32.totalorder %s21, 3
      %s302 = scalar_select %p301, %s21, 3
      %p303 = scmp.lt.s32.totalorder %s300, 15
      %s304 = scalar_select %p303, %s300, 15
      %p305 = scmp.lt.s32.totalorder %s24, 0
      %s306 = scalar_select %p305, %s24, 0
      %s307 = sadd.s32 %s306, %s304
      %s308 = smul.addr %s302, 16
      %s309 = sadd.s32 %s307, %s308
      %s310 = smul.addr %s309, 4
      %s311 = scalar_lea.vmem %s0, %s310
      %s312 = smul.u32 16, %s22
      %s313 = smul.u32 16, %s24
      %p314 = scmp.lt.s32.totalorder %s21, 3
      %s315 = scalar_select %p314, %s21, 3
      %p316 = scmp.lt.s32.totalorder %s313, 15
      %s317 = scalar_select %p316, %s313, 15
      %p318 = scmp.lt.s32.totalorder %s23, 0
      %s319 = scalar_select %p318, %s23, 0
      %s320 = sadd.s32 %s319, %s317
      %s321 = smul.addr %s315, 16
      %s322 = sadd.s32 %s320, %s321
      %s323 = smul.addr %s322, 4
      %s324 = scalar_lea.vmem %s1, %s323
      %s325 = smul.u32 16, %s24
      %p326 = scmp.lt.s32.totalorder %s23, 0
      %s327 = scalar_select %p326, %s23, 0
      %s328 = scalar_lea.vmem %s2, %s327
      %p329 = scmp.lt.s32.totalorder %s23, 0
      %s330 = scalar_select %p329, %s23, 0
      %s331 = scalar_lea.vmem %s3, %s330
      %s332 = smul.u32 16, %s22
      %p333 = scmp.lt.s32.totalorder %s21, 3
      %s334 = scalar_select %p333, %s21, 3
      %p335 = scmp.lt.s32.totalorder %s332, 15
      %s336 = scalar_select %p335, %s332, 15
      %p337 = scmp.lt.s32.totalorder %s23, 0
      %s338 = scalar_select %p337, %s23, 0
      %s339 = sadd.s32 %s338, %s336
      %s340 = smul.addr %s334, 16
      %s341 = sadd.s32 %s339, %s340
      %s342 = smul.addr %s341, 4
      %s343 = scalar_lea.vmem %s4, %s342
      %s344 = smul.u32 16, %s22
      %p346 = scmp.eq.s32.totalorder %s24, 0
      // Predicated region
      $region37: #{_lambda_.6} parent=35 // pred_check
        %p347 = pneg %p346
      $region38: #{_lambda_.6} parent=35 // pred_check_branch
        %349 = sbr.rel (%p347) target = $region40
      $region39: #{_lambda_.6} parent=35 // pred_region
        %350 = vst [vmem:[#allocation2] sm:$0xff] 0.0
        %351 = vst [vmem:[#allocation2 + $0x8] sm:$0xff] 0.0
        %352 = vst [vmem:[#allocation2 + $0x10] sm:$0xff] 0.0
        %353 = vst [vmem:[#allocation2 + $0x18] sm:$0xff] 0.0
        %354 = vst [vmem:[#allocation2 + $0x20] sm:$0xff] 0.0
        %355 = vst [vmem:[#allocation2 + $0x28] sm:$0xff] 0.0
        %356 = vst [vmem:[#allocation2 + $0x30] sm:$0xff] 0.0
        %357 = vst [vmem:[#allocation2 + $0x38] sm:$0xff] 0.0
        %358 = vst [vmem:[#allocation2 + $0x40] sm:$0xff] 0.0
        %359 = vst [vmem:[#allocation2 + $0x48] sm:$0xff] 0.0
        %360 = vst [vmem:[#allocation2 + $0x50] sm:$0xff] 0.0
        %361 = vst [vmem:[#allocation2 + $0x58] sm:$0xff] 0.0
        %362 = vst [vmem:[#allocation2 + $0x60] sm:$0xff] 0.0
        %363 = vst [vmem:[#allocation2 + $0x68] sm:$0xff] 0.0
        %364 = vst [vmem:[#allocation2 + $0x70] sm:$0xff] 0.0
        %365 = vst [vmem:[#allocation2 + $0x78] sm:$0xff] 0.0
      $region40: #{_lambda_.6} parent=35 // pred_fallthru
        _
      %v366 = vld [vmem:[#allocation2] sm:$0xff]
      %v367 = vld [vmem:[#allocation2 + $0x8] sm:$0xff]
      %v368 = vld [vmem:[#allocation2 + $0x10] sm:$0xff]
      %v369 = vld [vmem:[#allocation2 + $0x18] sm:$0xff]
      %v370 = vld [vmem:[#allocation2 + $0x20] sm:$0xff]
      %v371 = vld [vmem:[#allocation2 + $0x28] sm:$0xff]
      %v372 = vld [vmem:[#allocation2 + $0x30] sm:$0xff]
      %v373 = vld [vmem:[#allocation2 + $0x38] sm:$0xff]
      %v374 = vld [vmem:[#allocation2 + $0x40] sm:$0xff]
      %v375 = vld [vmem:[#allocation2 + $0x48] sm:$0xff]
      %v376 = vld [vmem:[#allocation2 + $0x50] sm:$0xff]
      %v377 = vld [vmem:[#allocation2 + $0x58] sm:$0xff]
      %v378 = vld [vmem:[#allocation2 + $0x60] sm:$0xff]
      %v379 = vld [vmem:[#allocation2 + $0x68] sm:$0xff]
      %v380 = vld [vmem:[#allocation2 + $0x70] sm:$0xff]
      %v381 = vld [vmem:[#allocation2 + $0x78] sm:$0xff]
      %v382 = vld [vmem:[%s311] sm:$0xf]
      %v383 = vld [vmem:[%s311 + $0x4] sm:$0xf]
      %v384 = vld [vmem:[%s311 + $0x8] sm:$0xf]
      %v385 = vld [vmem:[%s311 + $0xc] sm:$0xf]
      %v386 = vld [vmem:[%s311 + $0x10] sm:$0xf]
      %v387 = vld [vmem:[%s311 + $0x14] sm:$0xf]
      %v388 = vld [vmem:[%s311 + $0x18] sm:$0xf]
      %v389 = vld [vmem:[%s311 + $0x1c] sm:$0xf]
      %v390 = vld [vmem:[%s311 + $0x20] sm:$0xf]
      %v391 = vld [vmem:[%s311 + $0x24] sm:$0xf]
      %v392 = vld [vmem:[%s311 + $0x28] sm:$0xf]
      %v393 = vld [vmem:[%s311 + $0x2c] sm:$0xf]
      %v394 = vld [vmem:[%s311 + $0x30] sm:$0xf]
      %v395 = vld [vmem:[%s311 + $0x34] sm:$0xf]
      %v396 = vld [vmem:[%s311 + $0x38] sm:$0xf]
      %v397 = vld [vmem:[%s311 + $0x3c] sm:$0xf]
      %v398 = vld [vmem:[%s324] sm:$0xf]
      %v399 = vld [vmem:[%s324 + $0x4] sm:$0xf]
      %v400 = vld [vmem:[%s324 + $0x8] sm:$0xf]
      %v401 = vld [vmem:[%s324 + $0xc] sm:$0xf]
      %v402 = vld [vmem:[%s324 + $0x10] sm:$0xf]
      %v403 = vld [vmem:[%s324 + $0x14] sm:$0xf]
      %v404 = vld [vmem:[%s324 + $0x18] sm:$0xf]
      %v405 = vld [vmem:[%s324 + $0x1c] sm:$0xf]
      %v406 = vld [vmem:[%s324 + $0x20] sm:$0xf]
      %v407 = vld [vmem:[%s324 + $0x24] sm:$0xf]
      %v408 = vld [vmem:[%s324 + $0x28] sm:$0xf]
      %v409 = vld [vmem:[%s324 + $0x2c] sm:$0xf]
      %v410 = vld [vmem:[%s324 + $0x30] sm:$0xf]
      %v411 = vld [vmem:[%s324 + $0x34] sm:$0xf]
      %v412 = vld [vmem:[%s324 + $0x38] sm:$0xf]
      %v413 = vld [vmem:[%s324 + $0x3c] sm:$0xf]
      %v430 = vunpack.c.l.b16 %v382
      %v431 = vunpack.c.l.b16 %v383
      %v432 = vunpack.c.l.b16 %v384
      %v433 = vunpack.c.l.b16 %v385
      %v434 = vunpack.c.l.b16 %v386
      %v435 = vunpack.c.l.b16 %v387
      %v436 = vunpack.c.l.b16 %v388
      %v437 = vunpack.c.l.b16 %v389
      %v438 = vunpack.c.l.b16 %v390
      %v439 = vunpack.c.l.b16 %v391
      %v440 = vunpack.c.l.b16 %v392
      %v441 = vunpack.c.l.b16 %v393
      %v442 = vunpack.c.l.b16 %v394
      %v443 = vunpack.c.l.b16 %v395
      %v444 = vunpack.c.l.b16 %v396
      %v445 = vunpack.c.l.b16 %v397
      %v446 = vpack.c.b16 %v431, %v430
      %v447 = vpack.c.b16 %v433, %v432
      %v448 = vpack.c.b16 %v435, %v434
      %v449 = vpack.c.b16 %v437, %v436
      %v450 = vpack.c.b16 %v439, %v438
      %v451 = vpack.c.b16 %v441, %v440
      %v452 = vpack.c.b16 %v443, %v442
      %v453 = vpack.c.b16 %v445, %v444
      %v478 = vunpack.c.l.b16 %v398
      %v479 = vunpack.c.l.b16 %v399
      %v480 = vunpack.c.l.b16 %v400
      %v481 = vunpack.c.l.b16 %v401
      %v482 = vunpack.c.l.b16 %v402
      %v483 = vunpack.c.l.b16 %v403
      %v484 = vunpack.c.l.b16 %v404
      %v485 = vunpack.c.l.b16 %v405
      %v486 = vunpack.c.l.b16 %v406
      %v487 = vunpack.c.l.b16 %v407
      %v488 = vunpack.c.l.b16 %v408
      %v489 = vunpack.c.l.b16 %v409
      %v490 = vunpack.c.l.b16 %v410
      %v491 = vunpack.c.l.b16 %v411
      %v492 = vunpack.c.l.b16 %v412
      %v493 = vunpack.c.l.b16 %v413
      %v494 = vpack.c.b16 %v479, %v478
      %v495 = vpack.c.b16 %v481, %v480
      %v496 = vpack.c.b16 %v483, %v482
      %v497 = vpack.c.b16 %v485, %v484
      %v498 = vpack.c.b16 %v487, %v486
      %v499 = vpack.c.b16 %v489, %v488
      %v500 = vpack.c.b16 %v491, %v490
      %v501 = vpack.c.b16 %v493, %v492
      %510 = vmatprep.subr.bf16.mxu0 0
      %511 = vmatpush1.bf16.msra.mxu0 %v494
      %512 = vmatprep.subr.bf16.mxu0 0
      %513 = vmatpush1.bf16.msra.mxu0 %v495
      %514 = vmatprep.subr.bf16.mxu0 0
      %515 = vmatpush1.bf16.msra.mxu0 %v496
      %516 = vmatprep.subr.bf16.mxu0 0
      %517 = vmatpush1.bf16.msra.mxu0 %v497
      %518 = vmatprep.subr.bf16.mxu0 0
      %519 = vmatpush1.bf16.msra.mxu0 %v498
      %520 = vmatprep.subr.bf16.mxu0 0
      %521 = vmatpush1.bf16.msra.mxu0 %v499
      %522 = vmatprep.subr.bf16.mxu0 0
      %523 = vmatpush1.bf16.msra.mxu0 %v500
      %524 = vmatprep.subr.bf16.mxu0 0
      %525 = vmatpush1.bf16.msra.mxu0 %v501
      %526 = vmatprep.subr.bf16.mxu0 0
      %527 = vmatpush1.bf16.msra.mxu0 0
      %528 = vmatprep.subr.bf16.mxu0 0
      %529 = vmatpush1.bf16.msra.mxu0 0
      %530 = vmatprep.subr.bf16.mxu0 0
      %531 = vmatpush1.bf16.msra.mxu0 0
      %532 = vmatprep.subr.bf16.mxu0 0
      %533 = vmatpush1.bf16.msra.mxu0 0
      %534 = vmatprep.subr.bf16.mxu0 0
      %535 = vmatpush1.bf16.msra.mxu0 0
      %536 = vmatprep.subr.bf16.mxu0 0
      %537 = vmatpush1.bf16.msra.mxu0 0
      %538 = vmatprep.subr.bf16.mxu0 0
      %539 = vmatpush1.bf16.msra.mxu0 0
      %540 = vmatprep.subr.bf16.mxu0 0
      %541 = vmatpush1.bf16.msra.mxu0 0
      %542 = vmatprep.mubr.bf16.mxu0 0
      %543 = vmatmul.mubr.bf16.gmra.mrb[0].mxu0 %v446
      %v544 = vpop.f32.mrb[0].mxu0
      %v545 = vadd.f32 0.0, %v544
      %v546 = vpop.f32.mrb[0].mxu0
      %v547 = vpop.f32.mrb[0].mxu0
      %v548 = vadd.f32 0.0, %v547
      %v549 = vpop.f32.mrb[0].mxu0
      %550 = vmatprep.mubr.bf16.mxu0 0
      %551 = vmatmul.mubr.bf16.gmra.mrb[0].mxu0 %v447
      %v552 = vpop.f32.mrb[0].mxu0
      %v553 = vadd.f32 0.0, %v552
      %v554 = vpop.f32.mrb[0].mxu0
      %v555 = vpop.f32.mrb[0].mxu0
      %v556 = vadd.f32 0.0, %v555
      %v557 = vpop.f32.mrb[0].mxu0
      %558 = vmatprep.mubr.bf16.mxu0 0
      %559 = vmatmul.mubr.bf16.gmra.mrb[0].mxu0 %v448
      %v560 = vpop.f32.mrb[0].mxu0
      %v561 = vadd.f32 0.0, %v560
      %v562 = vpop.f32.mrb[0].mxu0
      %v563 = vpop.f32.mrb[0].mxu0
      %v564 = vadd.f32 0.0, %v563
      %v565 = vpop.f32.mrb[0].mxu0
      %566 = vmatprep.mubr.bf16.mxu0 0
      %567 = vmatmul.mubr.bf16.gmra.mrb[0].mxu0 %v449
      %v568 = vpop.f32.mrb[0].mxu0
      %v569 = vadd.f32 0.0, %v568
      %v570 = vpop.f32.mrb[0].mxu0
      %v571 = vpop.f32.mrb[0].mxu0
      %v572 = vadd.f32 0.0, %v571
      %v573 = vpop.f32.mrb[0].mxu0
      %574 = vmatprep.mubr.bf16.mxu0 0
      %575 = vmatmul.mubr.bf16.gmra.mrb[0].mxu0 %v450
      %v576 = vpop.f32.mrb[0].mxu0
      %v577 = vadd.f32 0.0, %v576
      %v578 = vpop.f32.mrb[0].mxu0
      %v579 = vpop.f32.mrb[0].mxu0
      %v580 = vadd.f32 0.0, %v579
      %v581 = vpop.f32.mrb[0].mxu0
      %582 = vmatprep.mubr.bf16.mxu0 0
      %583 = vmatmul.mubr.bf16.gmra.mrb[0].mxu0 %v451
      %v584 = vpop.f32.mrb[0].mxu0
      %v585 = vadd.f32 0.0, %v584
      %v586 = vpop.f32.mrb[0].mxu0
      %v587 = vpop.f32.mrb[0].mxu0
      %v588 = vadd.f32 0.0, %v587
      %v589 = vpop.f32.mrb[0].mxu0
      %590 = vmatprep.mubr.bf16.mxu0 0
      %591 = vmatmul.mubr.bf16.gmra.mrb[0].mxu0 %v452
      %v592 = vpop.f32.mrb[0].mxu0
      %v593 = vadd.f32 0.0, %v592
      %v594 = vpop.f32.mrb[0].mxu0
      %v595 = vpop.f32.mrb[0].mxu0
      %v596 = vadd.f32 0.0, %v595
      %v597 = vpop.f32.mrb[0].mxu0
      %598 = vmatprep.mubr.bf16.mxu0 0
      %599 = vmatmul.mubr.bf16.gmra.mrb[0].mxu0 %v453
      %v600 = vpop.f32.mrb[0].mxu0
      %v601 = vadd.f32 0.0, %v600
      %v602 = vpop.f32.mrb[0].mxu0
      %v603 = vpop.f32.mrb[0].mxu0
      %v604 = vadd.f32 0.0, %v603
      %v605 = vpop.f32.mrb[0].mxu0
      %606 = vdwg.mxu0
      %v607 = vadd.f32 %v366, %v545
      %v608 = vadd.f32 %v367, %v548
      %v609 = vadd.f32 %v368, %v553
      %v610 = vadd.f32 %v369, %v556
      %v611 = vadd.f32 %v370, %v561
      %v612 = vadd.f32 %v371, %v564
      %v613 = vadd.f32 %v372, %v569
      %v614 = vadd.f32 %v373, %v572
      %v615 = vadd.f32 %v374, %v577
      %v616 = vadd.f32 %v375, %v580
      %v617 = vadd.f32 %v376, %v585
      %v618 = vadd.f32 %v377, %v588
      %v619 = vadd.f32 %v378, %v593
      %v620 = vadd.f32 %v379, %v596
      %v621 = vadd.f32 %v380, %v601
      %v622 = vadd.f32 %v381, %v604
      %623 = vst [vmem:[#allocation2] sm:$0xff] %v607
      %624 = vst [vmem:[#allocation2 + $0x8] sm:$0xff] %v608
      %625 = vst [vmem:[#allocation2 + $0x10] sm:$0xff] %v609
      %626 = vst [vmem:[#allocation2 + $0x18] sm:$0xff] %v610
      %627 = vst [vmem:[#allocation2 + $0x20] sm:$0xff] %v611
      %628 = vst [vmem:[#allocation2 + $0x28] sm:$0xff] %v612
      %629 = vst [vmem:[#allocation2 + $0x30] sm:$0xff] %v613
      %630 = vst [vmem:[#allocation2 + $0x38] sm:$0xff] %v614
      %631 = vst [vmem:[#allocation2 + $0x40] sm:$0xff] %v615
      %632 = vst [vmem:[#allocation2 + $0x48] sm:$0xff] %v616
      %633 = vst [vmem:[#allocation2 + $0x50] sm:$0xff] %v617
      %634 = vst [vmem:[#allocation2 + $0x58] sm:$0xff] %v618
      %635 = vst [vmem:[#allocation2 + $0x60] sm:$0xff] %v619
      %636 = vst [vmem:[#allocation2 + $0x68] sm:$0xff] %v620
      %637 = vst [vmem:[#allocation2 + $0x70] sm:$0xff] %v621
      %638 = vst [vmem:[#allocation2 + $0x78] sm:$0xff] %v622
      // Predicated region
      $region41: #{_lambda_.6} parent=35 // pred_check
        %p639 = pneg %p346
      $region42: #{_lambda_.6} parent=35 // pred_check_branch
        %641 = sbr.rel (%p639) target = $region44
      $region43: #{_lambda_.6} parent=35 // pred_region
        %v642 = vld [vmem:[#allocation2] sm:$0xff]
        %v643 = vld [vmem:[#allocation2 + $0x8] sm:$0xff]
        %v644 = vld [vmem:[#allocation2 + $0x10] sm:$0xff]
        %v645 = vld [vmem:[#allocation2 + $0x18] sm:$0xff]
        %v646 = vld [vmem:[#allocation2 + $0x20] sm:$0xff]
        %v647 = vld [vmem:[#allocation2 + $0x28] sm:$0xff]
        %v648 = vld [vmem:[#allocation2 + $0x30] sm:$0xff]
        %v649 = vld [vmem:[#allocation2 + $0x38] sm:$0xff]
        %v650 = vld [vmem:[#allocation2 + $0x40] sm:$0xff]
        %v651 = vld [vmem:[#allocation2 + $0x48] sm:$0xff]
        %v652 = vld [vmem:[#allocation2 + $0x50] sm:$0xff]
        %v653 = vld [vmem:[#allocation2 + $0x58] sm:$0xff]
        %v654 = vld [vmem:[#allocation2 + $0x60] sm:$0xff]
        %v655 = vld [vmem:[#allocation2 + $0x68] sm:$0xff]
        %v656 = vld [vmem:[#allocation2 + $0x70] sm:$0xff]
        %v657 = vld [vmem:[#allocation2 + $0x78] sm:$0xff]
        %v658 = vld [vmem:[%s328] sm:$0x1]
        %v660 = vlaneseq
        %v661 = vshrl.u32 %v660, 7
        %v662 = vsub.s32 0, %v661
        %v663 = vrot.slane %v658, %v662
        %v665 = vmul.f32 %v642, %v663
        %v666 = vmul.f32 %v643, %v663
        %v667 = vmul.f32 %v644, %v663
        %v668 = vmul.f32 %v645, %v663
        %v669 = vmul.f32 %v646, %v663
        %v670 = vmul.f32 %v647, %v663
        %v671 = vmul.f32 %v648, %v663
        %v672 = vmul.f32 %v649, %v663
        %v673 = vmul.f32 %v650, %v663
        %v674 = vmul.f32 %v651, %v663
        %v675 = vmul.f32 %v652, %v663
        %v676 = vmul.f32 %v653, %v663
        %v677 = vmul.f32 %v654, %v663
        %v678 = vmul.f32 %v655, %v663
        %v679 = vmul.f32 %v656, %v663
        %v680 = vmul.f32 %v657, %v663
        %v681 = vld [vmem:[%s331] sm:$0x1]
        %v683 = vlaneseq
        %v684 = vshrl.u32 %v683, 7
        %v685 = vsub.s32 0, %v684
        %v686 = vrot.slane %v681, %v685
        %v688 = vadd.f32 %v665, %v686
        %v689 = vadd.f32 %v666, %v686
        %v690 = vadd.f32 %v667, %v686
        %v691 = vadd.f32 %v668, %v686
        %v692 = vadd.f32 %v669, %v686
        %v693 = vadd.f32 %v670, %v686
        %v694 = vadd.f32 %v671, %v686
        %v695 = vadd.f32 %v672, %v686
        %v696 = vadd.f32 %v673, %v686
        %v697 = vadd.f32 %v674, %v686
        %v698 = vadd.f32 %v675, %v686
        %v699 = vadd.f32 %v676, %v686
        %v700 = vadd.f32 %v677, %v686
        %v701 = vadd.f32 %v678, %v686
        %v702 = vadd.f32 %v679, %v686
        %v703 = vadd.f32 %v680, %v686
        %v704 = vmax.f32 %v688, 0.0
        %v705 = vmax.f32 %v689, 0.0
        %v706 = vmax.f32 %v690, 0.0
        %v707 = vmax.f32 %v691, 0.0
        %v708 = vmax.f32 %v692, 0.0
        %v709 = vmax.f32 %v693, 0.0
        %v710 = vmax.f32 %v694, 0.0
        %v711 = vmax.f32 %v695, 0.0
        %v712 = vmax.f32 %v696, 0.0
        %v713 = vmax.f32 %v697, 0.0
        %v714 = vmax.f32 %v698, 0.0
        %v715 = vmax.f32 %v699, 0.0
        %v716 = vmax.f32 %v700, 0.0
        %v717 = vmax.f32 %v701, 0.0
        %v718 = vmax.f32 %v702, 0.0
        %v719 = vmax.f32 %v703, 0.0
        %v720 = vpack.c.bf16 %v705, %v704
        %v721 = vpack.c.bf16 %v707, %v706
        %v722 = vpack.c.bf16 %v709, %v708
        %v723 = vpack.c.bf16 %v711, %v710
        %v724 = vpack.c.bf16 %v713, %v712
        %v725 = vpack.c.bf16 %v715, %v714
        %v726 = vpack.c.bf16 %v717, %v716
        %v727 = vpack.c.bf16 %v719, %v718
        %v736 = vunpack.c.l.b16 %v720
        %v737 = vunpack.c.h.b16 %v720
        %v738 = vunpack.c.l.b16 %v721
        %v739 = vunpack.c.h.b16 %v721
        %v740 = vunpack.c.l.b16 %v722
        %v741 = vunpack.c.h.b16 %v722
        %v742 = vunpack.c.l.b16 %v723
        %v743 = vunpack.c.h.b16 %v723
        %v744 = vunpack.c.l.b16 %v724
        %v745 = vunpack.c.h.b16 %v724
        %v746 = vunpack.c.l.b16 %v725
        %v747 = vunpack.c.h.b16 %v725
        %v748 = vunpack.c.l.b16 %v726
        %v749 = vunpack.c.h.b16 %v726
        %v750 = vunpack.c.l.b16 %v727
        %v751 = vunpack.c.h.b16 %v727
        %v752 = vpack.c.b16 %v736, %v736
        %v753 = vpack.c.b16 %v737, %v737
        %v754 = vpack.c.b16 %v738, %v738
        %v755 = vpack.c.b16 %v739, %v739
        %v756 = vpack.c.b16 %v740, %v740
        %v757 = vpack.c.b16 %v741, %v741
        %v758 = vpack.c.b16 %v742, %v742
        %v759 = vpack.c.b16 %v743, %v743
        %v760 = vpack.c.b16 %v744, %v744
        %v761 = vpack.c.b16 %v745, %v745
        %v762 = vpack.c.b16 %v746, %v746
        %v763 = vpack.c.b16 %v747, %v747
        %v764 = vpack.c.b16 %v748, %v748
        %v765 = vpack.c.b16 %v749, %v749
        %v766 = vpack.c.b16 %v750, %v750
        %v767 = vpack.c.b16 %v751, %v751
        %784 = vst [vmem:[%s343] sm:$0xf] %v752
        %785 = vst [vmem:[%s343 + $0x4] sm:$0xf] %v753
        %786 = vst [vmem:[%s343 + $0x8] sm:$0xf] %v754
        %787 = vst [vmem:[%s343 + $0xc] sm:$0xf] %v755
        %788 = vst [vmem:[%s343 + $0x10] sm:$0xf] %v756
        %789 = vst [vmem:[%s343 + $0x14] sm:$0xf] %v757
        %790 = vst [vmem:[%s343 + $0x18] sm:$0xf] %v758
        %791 = vst [vmem:[%s343 + $0x1c] sm:$0xf] %v759
        %792 = vst [vmem:[%s343 + $0x20] sm:$0xf] %v760
        %793 = vst [vmem:[%s343 + $0x24] sm:$0xf] %v761
        %794 = vst [vmem:[%s343 + $0x28] sm:$0xf] %v762
        %795 = vst [vmem:[%s343 + $0x2c] sm:$0xf] %v763
        %796 = vst [vmem:[%s343 + $0x30] sm:$0xf] %v764
        %797 = vst [vmem:[%s343 + $0x34] sm:$0xf] %v765
        %798 = vst [vmem:[%s343 + $0x38] sm:$0xf] %v766
        %799 = vst [vmem:[%s343 + $0x3c] sm:$0xf] %v767
      $region44: #{_lambda_.6} parent=35 // pred_fallthru
        _
      %s800 = smul.u32 16, %s22
      %p801 = scmp.lt.s32.totalorder %s21, 3
      %s802 = scalar_select %p801, %s21, 3
      %p803 = scmp.lt.s32.totalorder %s800, 15
      %s804 = scalar_select %p803, %s800, 15
      %p805 = scmp.lt.s32.totalorder %s23, 0
      %s806 = scalar_select %p805, %s23, 0
      %s807 = sadd.s32 %s806, %s804
      %s808 = smul.addr %s802, 16
      %s809 = sadd.s32 %s807, %s808
      %s810 = smul.addr %s809, 4
      %s811 = scalar_lea.vmem %s4, %s810
      // Predicated region
      $region45: #{_lambda_.6} parent=35 // pred_check
        %p812 = pneg %p175
      $region46: #{_lambda_.6} parent=35 // pred_check_branch
        %814 = sbr.rel (%p812) target = $region48
      $region47: #{_lambda_.6} parent=35 // pred_region
        %s815 = smul.u32 16, %s22
      $region48: #{_lambda_.6} parent=35 // pred_fallthru
        _
    $region36: #{_lambda_.6} parent=5 // pred_fallthru
      _
    %p816 = scmp.le.s32.totalorder 2, %s10
    // Predicated region
    $region49: #{_lambda_.6} parent=5 // pred_check
      %p817 = pneg %p816
    $region50: #{_lambda_.6} parent=5 // pred_check_branch
      %819 = sbr.rel (%p817) target = $region52
    $region51: #{_lambda_.6} parent=5 // pred_region
      %s820 = ssub.s32 %s10, 2
      // Predicated region
      $region53: #{_lambda_.6} parent=51 // pred_check
        %p821 = pneg %p181
      $region54: #{_lambda_.6} parent=51 // pred_check_branch
        %823 = sbr.rel (%p821) target = $region56
      $region55: #{_lambda_.6} parent=51 // pred_region
        %s824 = smul.u32 16, %s26
        %p825 = scmp.lt.s32.totalorder %s25, 3
        %s826 = scalar_select %p825, %s25, 3
        %p827 = scmp.lt.s32.totalorder %s824, 15
        %s828 = scalar_select %p827, %s824, 15
        %p829 = scmp.lt.s32.totalorder %s27, 0
        %s830 = scalar_select %p829, %s27, 0
        %s831 = sadd.s32 %s830, %s828
        %s832 = smul.addr %s826, 16
        %s833 = sadd.s32 %s831, %s832
        %s834 = smul.addr %s833, 4
        %s835 = scalar_lea.vmem %s4, %s834
      $region56: #{_lambda_.6} parent=51 // pred_fallthru
        _
    $region52: #{_lambda_.6} parent=5 // pred_fallthru
      _
  $region6: #{_lambda_.6} parent=0 // loop_footer
    %s14 = sadd.s32 1, %s10
  $region7: #{_lambda_.6} parent=0 // loop_footer_branch
    %9 = sbr.rel target = $region3
  $region8: #{_lambda_.6} parent=0 // loop_exit
    _

// kernel: _lambda_.7
$region0: #{_lambda_.7}
  #allocation0 [shape = 'u32[]', space=smem, size = 0x4, offset = 0x4, fixed_abs, tag = 'smem constant byte address 0x4 - core index']
  #allocation1 [shape = 'u32[144,128]{1,0:T(1,128)}', space=vmem, size = 0x12000, scoped, tag = 'internal scratch']
  #allocation2 [shape = 'f32[512,128]{1,0:T(8,128)}', space=vmem, size = 0x40000, scoped, tag = 'scratch operand']
  %s0 = inlined_call_operand.vmem [shape: bf16[4,512,128], index: 0, kind: input, shape index: {}]
  %s1 = inlined_call_operand.vmem [shape: bf16[4,128,128], index: 1, kind: input, shape index: {}]
  %s2 = inlined_call_operand.vmem [shape: f32[1,128], index: 2, kind: input, shape index: {}]
  %s3 = inlined_call_operand.vmem [shape: f32[1,128], index: 3, kind: input, shape index: {}]
  %s4 = inlined_call_operand.vmem [shape: f32[4,512,128], index: 4, kind: output, shape index: {}]
  %s5 = sld [smem:[#allocation0]]
  $region57: #{_lambda_.7} parent=0
    _
  %s7 = ssub.s32 1, %s5
  %s8 = scalar_select 0, %s7, %s5
  loop: start=0, step=1, limit=6
  $region2: #{_lambda_.7} parent=0 // loop_pre_header
    _
  $region3: #{_lambda_.7} parent=0 // loop_header
    %s10 = sphi 0, %s14
    %p11 = scmp.ge.s32.totalorder %s10, 6
    %s17 = sphi 0, %s43
    %s18 = sphi 0, %s39
    %s19 = sphi 0, %s35
    %s20 = sphi 0, %s31
    %s21 = sphi 0, %s17
    %s22 = sphi 0, %s18
    %s23 = sphi 0, %s19
    %s24 = sphi 0, %s20
    %s25 = sphi 0, %s21
    %s26 = sphi 0, %s22
    %s27 = sphi 0, %s23
    %s28 = sphi 0, %s24
    %s50 = sphi 0, %s52
    %s53 = sphi 0, %s50
    %s54 = sphi 0, %s53
    %s70 = sphi 0, %s54
    %s80 = sphi 0, %s82
    %s83 = sphi 0, %s80
    %s84 = sphi 0, %s83
    %s100 = sphi 0, %s84
    %s106 = sphi 0, %s108
    %s109 = sphi 0, %s106
    %s110 = sphi 0, %s109
    %s126 = sphi 0, %s110
    %s132 = sphi 0, %s134
    %s135 = sphi 0, %s132
    %s136 = sphi 0, %s135
    %s152 = sphi 0, %s136
    %s162 = sphi 0, %s164
    %s165 = sphi 0, %s162
    %s166 = sphi 0, %s165
    %s182 = sphi 0, %s166
  $region4: #{_lambda_.7} parent=0 // loop_header_branch
    %13 = sbr.rel (%p11) target = $region8
  $region5: #{_lambda_.7} parent=0 // loop_body
    %s15 = ssub.s32 %s10, 1
    %s16 = ssub.s32 %s10, 2
    %s29 = sadd.s32 1, %s20
    %p30 = scmp.ge.s32.totalorder %s29, 1
    %s31 = scalar_select %p30, 0, %s29
    %s32 = sadd.s32 1, %s19
    %s33 = scalar_select %p30, %s32, %s19
    %p34 = scmp.ge.s32.totalorder %s33, 1
    %s35 = scalar_select %p34, 0, %s33
    %s36 = sadd.s32 1, %s18
    %s37 = scalar_select %p34, %s36, %s18
    %p38 = scmp.ge.s32.totalorder %s37, 1
    %s39 = scalar_select %p38, 0, %s37
    %s40 = sadd.s32 1, %s17
    %s41 = scalar_select %p38, %s40, %s17
    %p42 = scmp.ge.s32.totalorder %s41, 4
    %s43 = scalar_select %p42, 0, %s41
    %s44 = ssub.s32 %s17, %s43
    %s45 = ssub.s32 %s18, %s39
    %s46 = sor.u32 %s44, %s45
    %s47 = ssub.s32 %s20, %s31
    %s48 = sor.u32 %s46, %s47
    %p49 = scmp.eq.s32.totalorder %s48, 0
    %s51 = sadd.s32 %s50, 1
    %s52 = scalar_select %p49, %s50, %s51
    %p55 = pneg %p49
    %p56 = scmp.eq.s32.totalorder %s10, 3
    %p57 = por %p55, %p56
    %p58 = scmp.ne.s32.totalorder %s50, %s53
    %p59 = scmp.eq.s32.totalorder %s10, 0
    %p60 = por %p58, %p59
    %p61 = scmp.ne.s32.totalorder %s50, %s53
    %p62 = scmp.eq.s32.totalorder %s15, 3
    %p63 = por %p61, %p62
    %p64 = scmp.ne.s32.totalorder %s53, %s54
    %p65 = scmp.eq.s32.totalorder %s15, 0
    %p66 = por %p64, %p65
    %p67 = scmp.ne.s32.totalorder %s53, %s54
    %p68 = scmp.eq.s32.totalorder %s16, 3
    %p69 = por %p67, %p68
    %p71 = scmp.ne.s32.totalorder %s54, %s70
    %p72 = scmp.eq.s32.totalorder %s16, 0
    %p73 = por %p71, %p72
    %s74 = ssub.s32 %s17, %s43
    %s75 = ssub.s32 %s20, %s31
    %s76 = sor.u32 %s74, %s75
    %s77 = ssub.s32 %s19, %s35
    %s78 = sor.u32 %s76, %s77
    %p79 = scmp.eq.s32.totalorder %s78, 0
    %s81 = sadd.s32 %s80, 1
    %s82 = scalar_select %p79, %s80, %s81
    %p85 = pneg %p79
    %p86 = scmp.eq.s32.totalorder %s10, 3
    %p87 = por %p85, %p86
    %p88 = scmp.ne.s32.totalorder %s80, %s83
    %p89 = scmp.eq.s32.totalorder %s10, 0
    %p90 = por %p88, %p89
    %p91 = scmp.ne.s32.totalorder %s80, %s83
    %p92 = scmp.eq.s32.totalorder %s15, 3
    %p93 = por %p91, %p92
    %p94 = scmp.ne.s32.totalorder %s83, %s84
    %p95 = scmp.eq.s32.totalorder %s15, 0
    %p96 = por %p94, %p95
    %p97 = scmp.ne.s32.totalorder %s83, %s84
    %p98 = scmp.eq.s32.totalorder %s16, 3
    %p99 = por %p97, %p98
    %p101 = scmp.ne.s32.totalorder %s84, %s100
    %p102 = scmp.eq.s32.totalorder %s16, 0
    %p103 = por %p101, %p102
    %s104 = ssub.s32 %s19, %s35
    %p105 = scmp.eq.s32.totalorder %s104, 0
    %s107 = sadd.s32 %s106, 1
    %s108 = scalar_select %p105, %s106, %s107
    %p111 = pneg %p105
    %p112 = scmp.eq.s32.totalorder %s10, 3
    %p113 = por %p111, %p112
    %p114 = scmp.ne.s32.totalorder %s106, %s109
    %p115 = scmp.eq.s32.totalorder %s10, 0
    %p116 = por %p114, %p115
    %p117 = scmp.ne.s32.totalorder %s106, %s109
    %p118 = scmp.eq.s32.totalorder %s15, 3
    %p119 = por %p117, %p118
    %p120 = scmp.ne.s32.totalorder %s109, %s110
    %p121 = scmp.eq.s32.totalorder %s15, 0
    %p122 = por %p120, %p121
    %p123 = scmp.ne.s32.totalorder %s109, %s110
    %p124 = scmp.eq.s32.totalorder %s16, 3
    %p125 = por %p123, %p124
    %p127 = scmp.ne.s32.totalorder %s110, %s126
    %p128 = scmp.eq.s32.totalorder %s16, 0
    %p129 = por %p127, %p128
    %s130 = ssub.s32 %s19, %s35
    %p131 = scmp.eq.s32.totalorder %s130, 0
    %s133 = sadd.s32 %s132, 1
    %s134 = scalar_select %p131, %s132, %s133
    %p137 = pneg %p131
    %p138 = scmp.eq.s32.totalorder %s10, 3
    %p139 = por %p137, %p138
    %p140 = scmp.ne.s32.totalorder %s132, %s135
    %p141 = scmp.eq.s32.totalorder %s10, 0
    %p142 = por %p140, %p141
    %p143 = scmp.ne.s32.totalorder %s132, %s135
    %p144 = scmp.eq.s32.totalorder %s15, 3
    %p145 = por %p143, %p144
    %p146 = scmp.ne.s32.totalorder %s135, %s136
    %p147 = scmp.eq.s32.totalorder %s15, 0
    %p148 = por %p146, %p147
    %p149 = scmp.ne.s32.totalorder %s135, %s136
    %p150 = scmp.eq.s32.totalorder %s16, 3
    %p151 = por %p149, %p150
    %p153 = scmp.ne.s32.totalorder %s136, %s152
    %p154 = scmp.eq.s32.totalorder %s16, 0
    %p155 = por %p153, %p154
    %s156 = ssub.s32 %s17, %s43
    %s157 = ssub.s32 %s18, %s39
    %s158 = sor.u32 %s156, %s157
    %s159 = ssub.s32 %s19, %s35
    %s160 = sor.u32 %s158, %s159
    %p161 = scmp.eq.s32.totalorder %s160, 0
    %s163 = sadd.s32 %s162, 1
    %s164 = scalar_select %p161, %s162, %s163
    %p167 = pneg %p161
    %p168 = scmp.eq.s32.totalorder %s10, 3
    %p169 = por %p167, %p168
    %p170 = scmp.ne.s32.totalorder %s162, %s165
    %p171 = scmp.eq.s32.totalorder %s10, 0
    %p172 = por %p170, %p171
    %p173 = scmp.ne.s32.totalorder %s162, %s165
    %p174 = scmp.eq.s32.totalorder %s15, 3
    %p175 = por %p173, %p174
    %p176 = scmp.ne.s32.totalorder %s165, %s166
    %p177 = scmp.eq.s32.totalorder %s15, 0
    %p178 = por %p176, %p177
    %p179 = scmp.ne.s32.totalorder %s165, %s166
    %p180 = scmp.eq.s32.totalorder %s16, 3
    %p181 = por %p179, %p180
    %p183 = scmp.ne.s32.totalorder %s166, %s182
    %p184 = scmp.eq.s32.totalorder %s16, 0
    %p185 = por %p183, %p184
    %p186 = scmp.le.s32.totalorder 1, %s10
    %p187 = scmp.lt.s32.totalorder %s10, 5
    %p188 = pnand %p186, %p187
    %p189 = pneg %p188
    // Predicated region
    $region9: #{_lambda_.7} parent=5 // pred_check
      _
    $region10: #{_lambda_.7} parent=5 // pred_check_branch
      %191 = sbr.rel (%p188) target = $region12
    $region11: #{_lambda_.7} parent=5 // pred_region
      %s192 = ssub.s32 %s10, 1
      // Predicated region
      $region13: #{_lambda_.7} parent=11 // pred_check
        %p193 = pneg %p122
      $region14: #{_lambda_.7} parent=11 // pred_check_branch
        %195 = sbr.rel (%p193) target = $region16
      $region15: #{_lambda_.7} parent=11 // pred_region
        %p196 = scmp.lt.s32.totalorder %s23, 0
        %s197 = scalar_select %p196, %s23, 0
        %s198 = scalar_lea.vmem %s2, %s197
      $region16: #{_lambda_.7} parent=11 // pred_fallthru
        _
      // Predicated region
      $region17: #{_lambda_.7} parent=11 // pred_check
        %p199 = pneg %p148
      $region18: #{_lambda_.7} parent=11 // pred_check_branch
        %201 = sbr.rel (%p199) target = $region20
      $region19: #{_lambda_.7} parent=11 // pred_region
        %p202 = scmp.lt.s32.totalorder %s23, 0
        %s203 = scalar_select %p202, %s23, 0
        %s204 = scalar_lea.vmem %s3, %s203
      $region20: #{_lambda_.7} parent=11 // pred_fallthru
        _
    $region12: #{_lambda_.7} parent=5 // pred_fallthru
      _
    %p205 = scmp.lt.s32.totalorder %s10, 4
    // Predicated region
    $region21: #{_lambda_.7} parent=5 // pred_check
      %p206 = pneg %p205
    $region22: #{_lambda_.7} parent=5 // pred_check_branch
      %208 = sbr.rel (%p206) target = $region24
    $region23: #{_lambda_.7} parent=5 // pred_region
      // Predicated region
      $region25: #{_lambda_.7} parent=23 // pred_check
        %p209 = pneg %p60
      $region26: #{_lambda_.7} parent=23 // pred_check_branch
        %211 = sbr.rel (%p209) target = $region28
      $region27: #{_lambda_.7} parent=23 // pred_region
        %s212 = smul.u32 64, %s18
        %p213 = scmp.lt.s32.totalorder %s17, 3
        %s214 = scalar_select %p213, %s17, 3
        %p215 = scmp.lt.s32.totalorder %s212, 63
        %s216 = scalar_select %p215, %s212, 63
        %p217 = scmp.lt.s32.totalorder %s20, 0
        %s218 = scalar_select %p217, %s20, 0
        %s219 = sadd.s32 %s218, %s216
        %s220 = smul.addr %s214, 64
        %s221 = sadd.s32 %s219, %s220
        %s222 = smul.addr %s221, 4
        %s223 = scalar_lea.vmem %s0, %s222
        %s224 = smul.u32 64, %s18
      $region28: #{_lambda_.7} parent=23 // pred_fallthru
        _
      // Predicated region
      $region29: #{_lambda_.7} parent=23 // pred_check
        %p225 = pneg %p90
      $region30: #{_lambda_.7} parent=23 // pred_check_branch
        %227 = sbr.rel (%p225) target = $region32
      $region31: #{_lambda_.7} parent=23 // pred_region
        %s228 = smul.u32 16, %s20
        %p229 = scmp.lt.s32.totalorder %s17, 3
        %s230 = scalar_select %p229, %s17, 3
        %p231 = scmp.lt.s32.totalorder %s228, 15
        %s232 = scalar_select %p231, %s228, 15
        %p233 = scmp.lt.s32.totalorder %s19, 0
        %s234 = scalar_select %p233, %s19, 0
        %s235 = sadd.s32 %s234, %s232
        %s236 = smul.addr %s230, 16
        %s237 = sadd.s32 %s235, %s236
        %s238 = smul.addr %s237, 4
        %s239 = scalar_lea.vmem %s1, %s238
        %s240 = smul.u32 16, %s20
      $region32: #{_lambda_.7} parent=23 // pred_fallthru
        _
    $region24: #{_lambda_.7} parent=5 // pred_fallthru
      _
    %p241 = scmp.le.s32.totalorder 1, %s10
    %p242 = scmp.lt.s32.totalorder %s10, 5
    %p243 = pnand %p241, %p242
    %p244 = pneg %p243
    // Predicated region
    $region33: #{_lambda_.7} parent=5 // pred_check
      _
    $region34: #{_lambda_.7} parent=5 // pred_check_branch
      %246 = sbr.rel (%p243) target = $region36
    $region35: #{_lambda_.7} parent=5 // pred_region
      %s247 = ssub.s32 %s10, 1
      %s248 = smul.u32 64, %s22
      %p249 = scmp.lt.s32.totalorder %s21, 3
      %s250 = scalar_select %p249, %s21, 3
      %p251 = scmp.lt.s32.totalorder %s248, 63
      %s252 = scalar_select %p251, %s248, 63
      %p253 = scmp.lt.s32.totalorder %s24, 0
      %s254 = scalar_select %p253, %s24, 0
      %s255 = sadd.s32 %s254, %s252
      %s256 = smul.addr %s250, 64
      %s257 = sadd.s32 %s255, %s256
      %s258 = smul.addr %s257, 4
      %s259 = scalar_lea.vmem %s0, %s258
      %p260 = pneg %p66
      %p261 = pneg %p63
      %s262 = smul.u32 16, %s24
      %p263 = scmp.lt.s32.totalorder %s21, 3
      %s264 = scalar_select %p263, %s21, 3
      %p265 = scmp.lt.s32.totalorder %s262, 15
      %s266 = scalar_select %p265, %s262, 15
      %p267 = scmp.lt.s32.totalorder %s23, 0
      %s268 = scalar_select %p267, %s23, 0
      %s269 = sadd.s32 %s268, %s266
      %s270 = smul.addr %s264, 16
      %s271 = sadd.s32 %s269, %s270
      %s272 = smul.addr %s271, 4
      %s273 = scalar_lea.vmem %s1, %s272
      %p274 = pneg %p96
      %p275 = pneg %p93
      %p276 = scmp.lt.s32.totalorder %s23, 0
      %s277 = scalar_select %p276, %s23, 0
      %s278 = scalar_lea.vmem %s2, %s277
      %p279 = pneg %p122
      %p280 = pneg %p119
      %p281 = scmp.lt.s32.totalorder %s23, 0
      %s282 = scalar_select %p281, %s23, 0
      %s283 = scalar_lea.vmem %s3, %s282
      %p284 = pneg %p148
      %p285 = pneg %p145
      %p286 = pneg %p178
      %p287 = pneg %p175
      %s288 = smul.u32 64, %s22
      %p289 = scmp.lt.s32.totalorder %s21, 3
      %s290 = scalar_select %p289, %s21, 3
      %p291 = scmp.lt.s32.totalorder %s288, 63
      %s292 = scalar_select %p291, %s288, 63
      %p293 = scmp.lt.s32.totalorder %s23, 0
      %s294 = scalar_select %p293, %s23, 0
      %s295 = sadd.s32 %s294, %s292
      %s296 = smul.addr %s290, 64
      %s297 = sadd.s32 %s295, %s296
      %s298 = smul.addr %s297, 8
      %s299 = scalar_lea.vmem %s4, %s298
      %s300 = smul.u32 64, %s22
      %p301 = scmp.lt.s32.totalorder %s21, 3
      %s302 = scalar_select %p301, %s21, 3
      %p303 = scmp.lt.s32.totalorder %s300, 63
      %s304 = scalar_select %p303, %s300, 63
      %p305 = scmp.lt.s32.totalorder %s24, 0
      %s306 = scalar_select %p305, %s24, 0
      %s307 = sadd.s32 %s306, %s304
      %s308 = smul.addr %s302, 64
      %s309 = sadd.s32 %s307, %s308
      %s310 = smul.addr %s309, 4
      %s311 = scalar_lea.vmem %s0, %s310
      %s312 = smul.u32 64, %s22
      %s313 = smul.u32 16, %s24
      %p314 = scmp.lt.s32.totalorder %s21, 3
      %s315 = scalar_select %p314, %s21, 3
      %p316 = scmp.lt.s32.totalorder %s313, 15
      %s317 = scalar_select %p316, %s313, 15
      %p318 = scmp.lt.s32.totalorder %s23, 0
      %s319 = scalar_select %p318, %s23, 0
      %s320 = sadd.s32 %s319, %s317
      %s321 = smul.addr %s315, 16
      %s322 = sadd.s32 %s320, %s321
      %s323 = smul.addr %s322, 4
      %s324 = scalar_lea.vmem %s1, %s323
      %s325 = smul.u32 16, %s24
      %p326 = scmp.lt.s32.totalorder %s23, 0
      %s327 = scalar_select %p326, %s23, 0
      %s328 = scalar_lea.vmem %s2, %s327
      %p329 = scmp.lt.s32.totalorder %s23, 0
      %s330 = scalar_select %p329, %s23, 0
      %s331 = scalar_lea.vmem %s3, %s330
      %s332 = smul.u32 64, %s22
      %p333 = scmp.lt.s32.totalorder %s21, 3
      %s334 = scalar_select %p333, %s21, 3
      %p335 = scmp.lt.s32.totalorder %s332, 63
      %s336 = scalar_select %p335, %s332, 63
      %p337 = scmp.lt.s32.totalorder %s23, 0
      %s338 = scalar_select %p337, %s23, 0
      %s339 = sadd.s32 %s338, %s336
      %s340 = smul.addr %s334, 64
      %s341 = sadd.s32 %s339, %s340
      %s342 = smul.addr %s341, 8
      %s343 = scalar_lea.vmem %s4, %s342
      %s344 = smul.u32 64, %s22
      %p346 = scmp.eq.s32.totalorder %s24, 0
      // Predicated region
      $region37: #{_lambda_.7} parent=35 // pred_check
        %p347 = pneg %p346
      $region38: #{_lambda_.7} parent=35 // pred_check_branch
        %349 = sbr.rel (%p347) target = $region40
      $region39: #{_lambda_.7} parent=35 // pred_region
        %350 = vst [vmem:[#allocation2] sm:$0xff] 0.0
        %351 = vst [vmem:[#allocation2 + $0x8] sm:$0xff] 0.0
        %352 = vst [vmem:[#allocation2 + $0x10] sm:$0xff] 0.0
        %353 = vst [vmem:[#allocation2 + $0x18] sm:$0xff] 0.0
        %354 = vst [vmem:[#allocation2 + $0x20] sm:$0xff] 0.0
        %355 = vst [vmem:[#allocation2 + $0x28] sm:$0xff] 0.0
        %356 = vst [vmem:[#allocation2 + $0x30] sm:$0xff] 0.0
        %357 = vst [vmem:[#allocation2 + $0x38] sm:$0xff] 0.0
        %358 = vst [vmem:[#allocation2 + $0x40] sm:$0xff] 0.0
        %359 = vst [vmem:[#allocation2 + $0x48] sm:$0xff] 0.0
        %360 = vst [vmem:[#allocation2 + $0x50] sm:$0xff] 0.0
        %361 = vst [vmem:[#allocation2 + $0x58] sm:$0xff] 0.0
        %362 = vst [vmem:[#allocation2 + $0x60] sm:$0xff] 0.0
        %363 = vst [vmem:[#allocation2 + $0x68] sm:$0xff] 0.0
        %364 = vst [vmem:[#allocation2 + $0x70] sm:$0xff] 0.0
        %365 = vst [vmem:[#allocation2 + $0x78] sm:$0xff] 0.0
        %366 = vst [vmem:[#allocation2 + $0x80] sm:$0xff] 0.0
        %367 = vst [vmem:[#allocation2 + $0x88] sm:$0xff] 0.0
        %368 = vst [vmem:[#allocation2 + $0x90] sm:$0xff] 0.0
        %369 = vst [vmem:[#allocation2 + $0x98] sm:$0xff] 0.0
        %370 = vst [vmem:[#allocation2 + $0xa0] sm:$0xff] 0.0
        %371 = vst [vmem:[#allocation2 + $0xa8] sm:$0xff] 0.0
        %372 = vst [vmem:[#allocation2 + $0xb0] sm:$0xff] 0.0
        %373 = vst [vmem:[#allocation2 + $0xb8] sm:$0xff] 0.0
        %374 = vst [vmem:[#allocation2 + $0xc0] sm:$0xff] 0.0
        %375 = vst [vmem:[#allocation2 + $0xc8] sm:$0xff] 0.0
        %376 = vst [vmem:[#allocation2 + $0xd0] sm:$0xff] 0.0
        %377 = vst [vmem:[#allocation2 + $0xd8] sm:$0xff] 0.0
        %378 = vst [vmem:[#allocation2 + $0xe0] sm:$0xff] 0.0
        %379 = vst [vmem:[#allocation2 + $0xe8] sm:$0xff] 0.0
        %380 = vst [vmem:[#allocation2 + $0xf0] sm:$0xff] 0.0
        %381 = vst [vmem:[#allocation2 + $0xf8] sm:$0xff] 0.0
        %382 = vst [vmem:[#allocation2 + $0x100] sm:$0xff] 0.0
        %383 = vst [vmem:[#allocation2 + $0x108] sm:$0xff] 0.0
        %384 = vst [vmem:[#allocation2 + $0x110] sm:$0xff] 0.0
        %385 = vst [vmem:[#allocation2 + $0x118] sm:$0xff] 0.0
        %386 = vst [vmem:[#allocation2 + $0x120] sm:$0xff] 0.0
        %387 = vst [vmem:[#allocation2 + $0x128] sm:$0xff] 0.0
        %388 = vst [vmem:[#allocation2 + $0x130] sm:$0xff] 0.0
        %389 = vst [vmem:[#allocation2 + $0x138] sm:$0xff] 0.0
        %390 = vst [vmem:[#allocation2 + $0x140] sm:$0xff] 0.0
        %391 = vst [vmem:[#allocation2 + $0x148] sm:$0xff] 0.0
        %392 = vst [vmem:[#allocation2 + $0x150] sm:$0xff] 0.0
        %393 = vst [vmem:[#allocation2 + $0x158] sm:$0xff] 0.0
        %394 = vst [vmem:[#allocation2 + $0x160] sm:$0xff] 0.0
        %395 = vst [vmem:[#allocation2 + $0x168] sm:$0xff] 0.0
        %396 = vst [vmem:[#allocation2 + $0x170] sm:$0xff] 0.0
        %397 = vst [vmem:[#allocation2 + $0x178] sm:$0xff] 0.0
        %398 = vst [vmem:[#allocation2 + $0x180] sm:$0xff] 0.0
        %399 = vst [vmem:[#allocation2 + $0x188] sm:$0xff] 0.0
        %400 = vst [vmem:[#allocation2 + $0x190] sm:$0xff] 0.0
        %401 = vst [vmem:[#allocation2 + $0x198] sm:$0xff] 0.0
        %402 = vst [vmem:[#allocation2 + $0x1a0] sm:$0xff] 0.0
        %403 = vst [vmem:[#allocation2 + $0x1a8] sm:$0xff] 0.0
        %404 = vst [vmem:[#allocation2 + $0x1b0] sm:$0xff] 0.0
        %405 = vst [vmem:[#allocation2 + $0x1b8] sm:$0xff] 0.0
        %406 = vst [vmem:[#allocation2 + $0x1c0] sm:$0xff] 0.0
        %407 = vst [vmem:[#allocation2 + $0x1c8] sm:$0xff] 0.0
        %408 = vst [vmem:[#allocation2 + $0x1d0] sm:$0xff] 0.0
        %409 = vst [vmem:[#allocation2 + $0x1d8] sm:$0xff] 0.0
        %410 = vst [vmem:[#allocation2 + $0x1e0] sm:$0xff] 0.0
        %411 = vst [vmem:[#allocation2 + $0x1e8] sm:$0xff] 0.0
        %412 = vst [vmem:[#allocation2 + $0x1f0] sm:$0xff] 0.0
        %413 = vst [vmem:[#allocation2 + $0x1f8] sm:$0xff] 0.0
      $region40: #{_lambda_.7} parent=35 // pred_fallthru
        _
      %v414 = vld [vmem:[#allocation2] sm:$0xff]
      %v415 = vld [vmem:[#allocation2 + $0x8] sm:$0xff]
      %v416 = vld [vmem:[#allocation2 + $0x10] sm:$0xff]
      %v417 = vld [vmem:[#allocation2 + $0x18] sm:$0xff]
      %v418 = vld [vmem:[#allocation2 + $0x20] sm:$0xff]
      %v419 = vld [vmem:[#allocation2 + $0x28] sm:$0xff]
      %v420 = vld [vmem:[#allocation2 + $0x30] sm:$0xff]
      %v421 = vld [vmem:[#allocation2 + $0x38] sm:$0xff]
      %v422 = vld [vmem:[#allocation2 + $0x40] sm:$0xff]
      %v423 = vld [vmem:[#allocation2 + $0x48] sm:$0xff]
      %v424 = vld [vmem:[#allocation2 + $0x50] sm:$0xff]
      %v425 = vld [vmem:[#allocation2 + $0x58] sm:$0xff]
      %v426 = vld [vmem:[#allocation2 + $0x60] sm:$0xff]
      %v427 = vld [vmem:[#allocation2 + $0x68] sm:$0xff]
      %v428 = vld [vmem:[#allocation2 + $0x70] sm:$0xff]
      %v429 = vld [vmem:[#allocation2 + $0x78] sm:$0xff]
      %v430 = vld [vmem:[#allocation2 + $0x80] sm:$0xff]
      %v431 = vld [vmem:[#allocation2 + $0x88] sm:$0xff]
      %v432 = vld [vmem:[#allocation2 + $0x90] sm:$0xff]
      %v433 = vld [vmem:[#allocation2 + $0x98] sm:$0xff]
      %v434 = vld [vmem:[#allocation2 + $0xa0] sm:$0xff]
      %v435 = vld [vmem:[#allocation2 + $0xa8] sm:$0xff]
      %v436 = vld [vmem:[#allocation2 + $0xb0] sm:$0xff]
      %v437 = vld [vmem:[#allocation2 + $0xb8] sm:$0xff]
      %v438 = vld [vmem:[#allocation2 + $0xc0] sm:$0xff]
      %v439 = vld [vmem:[#allocation2 + $0xc8] sm:$0xff]
      %v440 = vld [vmem:[#allocation2 + $0xd0] sm:$0xff]
      %v441 = vld [vmem:[#allocation2 + $0xd8] sm:$0xff]
      %v442 = vld [vmem:[#allocation2 + $0xe0] sm:$0xff]
      %v443 = vld [vmem:[#allocation2 + $0xe8] sm:$0xff]
      %v444 = vld [vmem:[#allocation2 + $0xf0] sm:$0xff]
      %v445 = vld [vmem:[#allocation2 + $0xf8] sm:$0xff]
      %v446 = vld [vmem:[#allocation2 + $0x100] sm:$0xff]
      %v447 = vld [vmem:[#allocation2 + $0x108] sm:$0xff]
      %v448 = vld [vmem:[#allocation2 + $0x110] sm:$0xff]
      %v449 = vld [vmem:[#allocation2 + $0x118] sm:$0xff]
      %v450 = vld [vmem:[#allocation2 + $0x120] sm:$0xff]
      %v451 = vld [vmem:[#allocation2 + $0x128] sm:$0xff]
      %v452 = vld [vmem:[#allocation2 + $0x130] sm:$0xff]
      %v453 = vld [vmem:[#allocation2 + $0x138] sm:$0xff]
      %v454 = vld [vmem:[#allocation2 + $0x140] sm:$0xff]
      %v455 = vld [vmem:[#allocation2 + $0x148] sm:$0xff]
      %v456 = vld [vmem:[#allocation2 + $0x150] sm:$0xff]
      %v457 = vld [vmem:[#allocation2 + $0x158] sm:$0xff]
      %v458 = vld [vmem:[#allocation2 + $0x160] sm:$0xff]
      %v459 = vld [vmem:[#allocation2 + $0x168] sm:$0xff]
      %v460 = vld [vmem:[#allocation2 + $0x170] sm:$0xff]
      %v461 = vld [vmem:[#allocation2 + $0x178] sm:$0xff]
      %v462 = vld [vmem:[#allocation2 + $0x180] sm:$0xff]
      %v463 = vld [vmem:[#allocation2 + $0x188] sm:$0xff]
      %v464 = vld [vmem:[#allocation2 + $0x190] sm:$0xff]
      %v465 = vld [vmem:[#allocation2 + $0x198] sm:$0xff]
      %v466 = vld [vmem:[#allocation2 + $0x1a0] sm:$0xff]
      %v467 = vld [vmem:[#allocation2 + $0x1a8] sm:$0xff]
      %v468 = vld [vmem:[#allocation2 + $0x1b0] sm:$0xff]
      %v469 = vld [vmem:[#allocation2 + $0x1b8] sm:$0xff]
      %v470 = vld [vmem:[#allocation2 + $0x1c0] sm:$0xff]
      %v471 = vld [vmem:[#allocation2 + $0x1c8] sm:$0xff]
      %v472 = vld [vmem:[#allocation2 + $0x1d0] sm:$0xff]
      %v473 = vld [vmem:[#allocation2 + $0x1d8] sm:$0xff]
      %v474 = vld [vmem:[#allocation2 + $0x1e0] sm:$0xff]
      %v475 = vld [vmem:[#allocation2 + $0x1e8] sm:$0xff]
      %v476 = vld [vmem:[#allocation2 + $0x1f0] sm:$0xff]
      %v477 = vld [vmem:[#allocation2 + $0x1f8] sm:$0xff]
      %v478 = vld [vmem:[%s311] sm:$0xf]
      %v479 = vld [vmem:[%s311 + $0x4] sm:$0xf]
      %v480 = vld [vmem:[%s311 + $0x8] sm:$0xf]
      %v481 = vld [vmem:[%s311 + $0xc] sm:$0xf]
      %v482 = vld [vmem:[%s311 + $0x10] sm:$0xf]
      %v483 = vld [vmem:[%s311 + $0x14] sm:$0xf]
      %v484 = vld [vmem:[%s311 + $0x18] sm:$0xf]
      %v485 = vld [vmem:[%s311 + $0x1c] sm:$0xf]
      %v486 = vld [vmem:[%s311 + $0x20] sm:$0xf]
      %v487 = vld [vmem:[%s311 + $0x24] sm:$0xf]
      %v488 = vld [vmem:[%s311 + $0x28] sm:$0xf]
      %v489 = vld [vmem:[%s311 + $0x2c] sm:$0xf]
      %v490 = vld [vmem:[%s311 + $0x30] sm:$0xf]
      %v491 = vld [vmem:[%s311 + $0x34] sm:$0xf]
      %v492 = vld [vmem:[%s311 + $0x38] sm:$0xf]
      %v493 = vld [vmem:[%s311 + $0x3c] sm:$0xf]
      %v494 = vld [vmem:[%s311 + $0x40] sm:$0xf]
      %v495 = vld [vmem:[%s311 + $0x44] sm:$0xf]
      %v496 = vld [vmem:[%s311 + $0x48] sm:$0xf]
      %v497 = vld [vmem:[%s311 + $0x4c] sm:$0xf]
      %v498 = vld [vmem:[%s311 + $0x50] sm:$0xf]
      %v499 = vld [vmem:[%s311 + $0x54] sm:$0xf]
      %v500 = vld [vmem:[%s311 + $0x58] sm:$0xf]
      %v501 = vld [vmem:[%s311 + $0x5c] sm:$0xf]
      %v502 = vld [vmem:[%s311 + $0x60] sm:$0xf]
      %v503 = vld [vmem:[%s311 + $0x64] sm:$0xf]
      %v504 = vld [vmem:[%s311 + $0x68] sm:$0xf]
      %v505 = vld [vmem:[%s311 + $0x6c] sm:$0xf]
      %v506 = vld [vmem:[%s311 + $0x70] sm:$0xf]
      %v507 = vld [vmem:[%s311 + $0x74] sm:$0xf]
      %v508 = vld [vmem:[%s311 + $0x78] sm:$0xf]
      %v509 = vld [vmem:[%s311 + $0x7c] sm:$0xf]
      %v510 = vld [vmem:[%s311 + $0x80] sm:$0xf]
      %v511 = vld [vmem:[%s311 + $0x84] sm:$0xf]
      %v512 = vld [vmem:[%s311 + $0x88] sm:$0xf]
      %v513 = vld [vmem:[%s311 + $0x8c] sm:$0xf]
      %v514 = vld [vmem:[%s311 + $0x90] sm:$0xf]
      %v515 = vld [vmem:[%s311 + $0x94] sm:$0xf]
      %v516 = vld [vmem:[%s311 + $0x98] sm:$0xf]
      %v517 = vld [vmem:[%s311 + $0x9c] sm:$0xf]
      %v518 = vld [vmem:[%s311 + $0xa0] sm:$0xf]
      %v519 = vld [vmem:[%s311 + $0xa4] sm:$0xf]
      %v520 = vld [vmem:[%s311 + $0xa8] sm:$0xf]
      %v521 = vld [vmem:[%s311 + $0xac] sm:$0xf]
      %v522 = vld [vmem:[%s311 + $0xb0] sm:$0xf]
      %v523 = vld [vmem:[%s311 + $0xb4] sm:$0xf]
      %v524 = vld [vmem:[%s311 + $0xb8] sm:$0xf]
      %v525 = vld [vmem:[%s311 + $0xbc] sm:$0xf]
      %v526 = vld [vmem:[%s311 + $0xc0] sm:$0xf]
      %v527 = vld [vmem:[%s311 + $0xc4] sm:$0xf]
      %v528 = vld [vmem:[%s311 + $0xc8] sm:$0xf]
      %v529 = vld [vmem:[%s311 + $0xcc] sm:$0xf]
      %v530 = vld [vmem:[%s311 + $0xd0] sm:$0xf]
      %v531 = vld [vmem:[%s311 + $0xd4] sm:$0xf]
      %v532 = vld [vmem:[%s311 + $0xd8] sm:$0xf]
      %v533 = vld [vmem:[%s311 + $0xdc] sm:$0xf]
      %v534 = vld [vmem:[%s311 + $0xe0] sm:$0xf]
      %v535 = vld [vmem:[%s311 + $0xe4] sm:$0xf]
      %v536 = vld [vmem:[%s311 + $0xe8] sm:$0xf]
      %v537 = vld [vmem:[%s311 + $0xec] sm:$0xf]
      %v538 = vld [vmem:[%s311 + $0xf0] sm:$0xf]
      %v539 = vld [vmem:[%s311 + $0xf4] sm:$0xf]
      %v540 = vld [vmem:[%s311 + $0xf8] sm:$0xf]
      %v541 = vld [vmem:[%s311 + $0xfc] sm:$0xf]
      %v542 = vld [vmem:[%s324] sm:$0xf]
      %v543 = vld [vmem:[%s324 + $0x4] sm:$0xf]
      %v544 = vld [vmem:[%s324 + $0x8] sm:$0xf]
      %v545 = vld [vmem:[%s324 + $0xc] sm:$0xf]
      %v546 = vld [vmem:[%s324 + $0x10] sm:$0xf]
      %v547 = vld [vmem:[%s324 + $0x14] sm:$0xf]
      %v548 = vld [vmem:[%s324 + $0x18] sm:$0xf]
      %v549 = vld [vmem:[%s324 + $0x1c] sm:$0xf]
      %v550 = vld [vmem:[%s324 + $0x20] sm:$0xf]
      %v551 = vld [vmem:[%s324 + $0x24] sm:$0xf]
      %v552 = vld [vmem:[%s324 + $0x28] sm:$0xf]
      %v553 = vld [vmem:[%s324 + $0x2c] sm:$0xf]
      %v554 = vld [vmem:[%s324 + $0x30] sm:$0xf]
      %v555 = vld [vmem:[%s324 + $0x34] sm:$0xf]
      %v556 = vld [vmem:[%s324 + $0x38] sm:$0xf]
      %v557 = vld [vmem:[%s324 + $0x3c] sm:$0xf]
      %v622 = vunpack.c.l.b16 %v478
      %v623 = vunpack.c.l.b16 %v479
      %v624 = vunpack.c.l.b16 %v480
      %v625 = vunpack.c.l.b16 %v481
      %v626 = vunpack.c.l.b16 %v482
      %v627 = vunpack.c.l.b16 %v483
      %v628 = vunpack.c.l.b16 %v484
      %v629 = vunpack.c.l.b16 %v485
      %v630 = vunpack.c.l.b16 %v486
      %v631 = vunpack.c.l.b16 %v487
      %v632 = vunpack.c.l.b16 %v488
      %v633 = vunpack.c.l.b16 %v489
      %v634 = vunpack.c.l.b16 %v490
      %v635 = vunpack.c.l.b16 %v491
      %v636 = vunpack.c.l.b16 %v492
      %v637 = vunpack.c.l.b16 %v493
      %v638 = vunpack.c.l.b16 %v494
      %v639 = vunpack.c.l.b16 %v495
      %v640 = vunpack.c.l.b16 %v496
      %v641 = vunpack.c.l.b16 %v497
      %v642 = vunpack.c.l.b16 %v498
      %v643 = vunpack.c.l.b16 %v499
      %v644 = vunpack.c.l.b16 %v500
      %v645 = vunpack.c.l.b16 %v501
      %v646 = vunpack.c.l.b16 %v502
      %v647 = vunpack.c.l.b16 %v503
      %v648 = vunpack.c.l.b16 %v504
      %v649 = vunpack.c.l.b16 %v505
      %v650 = vunpack.c.l.b16 %v506
      %v651 = vunpack.c.l.b16 %v507
      %v652 = vunpack.c.l.b16 %v508
      %v653 = vunpack.c.l.b16 %v509
      %v654 = vunpack.c.l.b16 %v510
      %v655 = vunpack.c.l.b16 %v511
      %v656 = vunpack.c.l.b16 %v512
      %v657 = vunpack.c.l.b16 %v513
      %v658 = vunpack.c.l.b16 %v514
      %v659 = vunpack.c.l.b16 %v515
      %v660 = vunpack.c.l.b16 %v516
      %v661 = vunpack.c.l.b16 %v517
      %v662 = vunpack.c.l.b16 %v518
      %v663 = vunpack.c.l.b16 %v519
      %v664 = vunpack.c.l.b16 %v520
      %v665 = vunpack.c.l.b16 %v521
      %v666 = vunpack.c.l.b16 %v522
      %v667 = vunpack.c.l.b16 %v523
      %v668 = vunpack.c.l.b16 %v524
      %v669 = vunpack.c.l.b16 %v525
      %v670 = vunpack.c.l.b16 %v526
      %v671 = vunpack.c.l.b16 %v527
      %v672 = vunpack.c.l.b16 %v528
      %v673 = vunpack.c.l.b16 %v529
      %v674 = vunpack.c.l.b16 %v530
      %v675 = vunpack.c.l.b16 %v531
      %v676 = vunpack.c.l.b16 %v532
      %v677 = vunpack.c.l.b16 %v533
      %v678 = vunpack.c.l.b16 %v534
      %v679 = vunpack.c.l.b16 %v535
      %v680 = vunpack.c.l.b16 %v536
      %v681 = vunpack.c.l.b16 %v537
      %v682 = vunpack.c.l.b16 %v538
      %v683 = vunpack.c.l.b16 %v539
      %v684 = vunpack.c.l.b16 %v540
      %v685 = vunpack.c.l.b16 %v541
      %v686 = vpack.c.b16 %v623, %v622
      %v687 = vpack.c.b16 %v625, %v624
      %v688 = vpack.c.b16 %v627, %v626
      %v689 = vpack.c.b16 %v629, %v628
      %v690 = vpack.c.b16 %v631, %v630
      %v691 = vpack.c.b16 %v633, %v632
      %v692 = vpack.c.b16 %v635, %v634
      %v693 = vpack.c.b16 %v637, %v636
      %v694 = vpack.c.b16 %v639, %v638
      %v695 = vpack.c.b16 %v641, %v640
      %v696 = vpack.c.b16 %v643, %v642
      %v697 = vpack.c.b16 %v645, %v644
      %v698 = vpack.c.b16 %v647, %v646
      %v699 = vpack.c.b16 %v649, %v648
      %v700 = vpack.c.b16 %v651, %v650
      %v701 = vpack.c.b16 %v653, %v652
      %v702 = vpack.c.b16 %v655, %v654
      %v703 = vpack.c.b16 %v657, %v656
      %v704 = vpack.c.b16 %v659, %v658
      %v705 = vpack.c.b16 %v661, %v660
      %v706 = vpack.c.b16 %v663, %v662
      %v707 = vpack.c.b16 %v665, %v664
      %v708 = vpack.c.b16 %v667, %v666
      %v709 = vpack.c.b16 %v669, %v668
      %v710 = vpack.c.b16 %v671, %v670
      %v711 = vpack.c.b16 %v673, %v672
      %v712 = vpack.c.b16 %v675, %v674
      %v713 = vpack.c.b16 %v677, %v676
      %v714 = vpack.c.b16 %v679, %v678
      %v715 = vpack.c.b16 %v681, %v680
      %v716 = vpack.c.b16 %v683, %v682
      %v717 = vpack.c.b16 %v685, %v684
      %v766 = vunpack.c.l.b16 %v542
      %v767 = vunpack.c.l.b16 %v543
      %v768 = vunpack.c.l.b16 %v544
      %v769 = vunpack.c.l.b16 %v545
      %v770 = vunpack.c.l.b16 %v546
      %v771 = vunpack.c.l.b16 %v547
      %v772 = vunpack.c.l.b16 %v548
      %v773 = vunpack.c.l.b16 %v549
      %v774 = vunpack.c.l.b16 %v550
      %v775 = vunpack.c.l.b16 %v551
      %v776 = vunpack.c.l.b16 %v552
      %v777 = vunpack.c.l.b16 %v553
      %v778 = vunpack.c.l.b16 %v554
      %v779 = vunpack.c.l.b16 %v555
      %v780 = vunpack.c.l.b16 %v556
      %v781 = vunpack.c.l.b16 %v557
      %v782 = vpack.c.b16 %v767, %v766
      %v783 = vpack.c.b16 %v769, %v768
      %v784 = vpack.c.b16 %v771, %v770
      %v785 = vpack.c.b16 %v773, %v772
      %v786 = vpack.c.b16 %v775, %v774
      %v787 = vpack.c.b16 %v777, %v776
      %v788 = vpack.c.b16 %v779, %v778
      %v789 = vpack.c.b16 %v781, %v780
      %798 = vmatprep.subr.bf16.mxu0 0
      %799 = vmatpush1.bf16.msra.mxu0 %v782
      %800 = vmatprep.subr.bf16.mxu0 0
      %801 = vmatpush1.bf16.msra.mxu0 %v783
      %802 = vmatprep.subr.bf16.mxu0 0
      %803 = vmatpush1.bf16.msra.mxu0 %v784
      %804 = vmatprep.subr.bf16.mxu0 0
      %805 = vmatpush1.bf16.msra.mxu0 %v785
      %806 = vmatprep.subr.bf16.mxu0 0
      %807 = vmatpush1.bf16.msra.mxu0 %v786
      %808 = vmatprep.subr.bf16.mxu0 0
      %809 = vmatpush1.bf16.msra.mxu0 %v787
      %810 = vmatprep.subr.bf16.mxu0 0
      %811 = vmatpush1.bf16.msra.mxu0 %v788
      %812 = vmatprep.subr.bf16.mxu0 0
      %813 = vmatpush1.bf16.msra.mxu0 %v789
      %814 = vmatprep.subr.bf16.mxu0 0
      %815 = vmatpush1.bf16.msra.mxu0 0
      %816 = vmatprep.subr.bf16.mxu0 0
      %817 = vmatpush1.bf16.msra.mxu0 0
      %818 = vmatprep.subr.bf16.mxu0 0
      %819 = vmatpush1.bf16.msra.mxu0 0
      %820 = vmatprep.subr.bf16.mxu0 0
      %821 = vmatpush1.bf16.msra.mxu0 0
      %822 = vmatprep.subr.bf16.mxu0 0
      %823 = vmatpush1.bf16.msra.mxu0 0
      %824 = vmatprep.subr.bf16.mxu0 0
      %825 = vmatpush1.bf16.msra.mxu0 0
      %826 = vmatprep.subr.bf16.mxu0 0
      %827 = vmatpush1.bf16.msra.mxu0 0
      %828 = vmatprep.subr.bf16.mxu0 0
      %829 = vmatpush1.bf16.msra.mxu0 0
      %830 = vmatprep.mubr.bf16.mxu0 0
      %831 = vmatmul.mubr.bf16.gmra.mrb[0].mxu0 %v686
      %v832 = vpop.f32.mrb[0].mxu0
      %v833 = vadd.f32 0.0, %v832
      %v834 = vpop.f32.mrb[0].mxu0
      %v835 = vpop.f32.mrb[0].mxu0
      %v836 = vadd.f32 0.0, %v835
      %v837 = vpop.f32.mrb[0].mxu0
      %838 = vmatprep.mubr.bf16.mxu0 0
      %839 = vmatmul.mubr.bf16.gmra.mrb[0].mxu0 %v687
      %v840 = vpop.f32.mrb[0].mxu0
      %v841 = vadd.f32 0.0, %v840
      %v842 = vpop.f32.mrb[0].mxu0
      %v843 = vpop.f32.mrb[0].mxu0
      %v844 = vadd.f32 0.0, %v843
      %v845 = vpop.f32.mrb[0].mxu0
      %846 = vmatprep.mubr.bf16.mxu0 0
      %847 = vmatmul.mubr.bf16.gmra.mrb[0].mxu0 %v688
      %v848 = vpop.f32.mrb[0].mxu0
      %v849 = vadd.f32 0.0, %v848
      %v850 = vpop.f32.mrb[0].mxu0
      %v851 = vpop.f32.mrb[0].mxu0
      %v852 = vadd.f32 0.0, %v851
      %v853 = vpop.f32.mrb[0].mxu0
      %854 = vmatprep.mubr.bf16.mxu0 0
      %855 = vmatmul.mubr.bf16.gmra.mrb[0].mxu0 %v689
      %v856 = vpop.f32.mrb[0].mxu0
      %v857 = vadd.f32 0.0, %v856
      %v858 = vpop.f32.mrb[0].mxu0
      %v859 = vpop.f32.mrb[0].mxu0
      %v860 = vadd.f32 0.0, %v859
      %v861 = vpop.f32.mrb[0].mxu0
      %862 = vmatprep.mubr.bf16.mxu0 0
      %863 = vmatmul.mubr.bf16.gmra.mrb[0].mxu0 %v690
      %v864 = vpop.f32.mrb[0].mxu0
      %v865 = vadd.f32 0.0, %v864
      %v866 = vpop.f32.mrb[0].mxu0
      %v867 = vpop.f32.mrb[0].mxu0
      %v868 = vadd.f32 0.0, %v867
      %v869 = vpop.f32.mrb[0].mxu0
      %870 = vmatprep.mubr.bf16.mxu0 0
      %871 = vmatmul.mubr.bf16.gmra.mrb[0].mxu0 %v691
      %v872 = vpop.f32.mrb[0].mxu0
      %v873 = vadd.f32 0.0, %v872
      %v874 = vpop.f32.mrb[0].mxu0
      %v875 = vpop.f32.mrb[0].mxu0
      %v876 = vadd.f32 0.0, %v875
      %v877 = vpop.f32.mrb[0].mxu0
      %878 = vmatprep.mubr.bf16.mxu0 0
      %879 = vmatmul.mubr.bf16.gmra.mrb[0].mxu0 %v692
      %v880 = vpop.f32.mrb[0].mxu0
      %v881 = vadd.f32 0.0, %v880
      %v882 = vpop.f32.mrb[0].mxu0
      %v883 = vpop.f32.mrb[0].mxu0
      %v884 = vadd.f32 0.0, %v883
      %v885 = vpop.f32.mrb[0].mxu0
      %886 = vmatprep.mubr.bf16.mxu0 0
      %887 = vmatmul.mubr.bf16.gmra.mrb[0].mxu0 %v693
      %v888 = vpop.f32.mrb[0].mxu0
      %v889 = vadd.f32 0.0, %v888
      %v890 = vpop.f32.mrb[0].mxu0
      %v891 = vpop.f32.mrb[0].mxu0
      %v892 = vadd.f32 0.0, %v891
      %v893 = vpop.f32.mrb[0].mxu0
      %894 = vmatprep.mubr.bf16.mxu0 0
      %895 = vmatmul.mubr.bf16.gmra.mrb[0].mxu0 %v694
      %v896 = vpop.f32.mrb[0].mxu0
      %v897 = vadd.f32 0.0, %v896
      %v898 = vpop.f32.mrb[0].mxu0
      %v899 = vpop.f32.mrb[0].mxu0
      %v900 = vadd.f32 0.0, %v899
      %v901 = vpop.f32.mrb[0].mxu0
      %902 = vmatprep.mubr.bf16.mxu0 0
      %903 = vmatmul.mubr.bf16.gmra.mrb[0].mxu0 %v695
      %v904 = vpop.f32.mrb[0].mxu0
      %v905 = vadd.f32 0.0, %v904
      %v906 = vpop.f32.mrb[0].mxu0
      %v907 = vpop.f32.mrb[0].mxu0
      %v908 = vadd.f32 0.0, %v907
      %v909 = vpop.f32.mrb[0].mxu0
      %910 = vmatprep.mubr.bf16.mxu0 0
      %911 = vmatmul.mubr.bf16.gmra.mrb[0].mxu0 %v696
      %v912 = vpop.f32.mrb[0].mxu0
      %v913 = vadd.f32 0.0, %v912
      %v914 = vpop.f32.mrb[0].mxu0
      %v915 = vpop.f32.mrb[0].mxu0
      %v916 = vadd.f32 0.0, %v915
      %v917 = vpop.f32.mrb[0].mxu0
      %918 = vmatprep.mubr.bf16.mxu0 0
      %919 = vmatmul.mubr.bf16.gmra.mrb[0].mxu0 %v697
      %v920 = vpop.f32.mrb[0].mxu0
      %v921 = vadd.f32 0.0, %v920
      %v922 = vpop.f32.mrb[0].mxu0
      %v923 = vpop.f32.mrb[0].mxu0
      %v924 = vadd.f32 0.0, %v923
      %v925 = vpop.f32.mrb[0].mxu0
      %926 = vmatprep.mubr.bf16.mxu0 0
      %927 = vmatmul.mubr.bf16.gmra.mrb[0].mxu0 %v698
      %v928 = vpop.f32.mrb[0].mxu0
      %v929 = vadd.f32 0.0, %v928
      %v930 = vpop.f32.mrb[0].mxu0
      %v931 = vpop.f32.mrb[0].mxu0
      %v932 = vadd.f32 0.0, %v931
      %v933 = vpop.f32.mrb[0].mxu0
      %934 = vmatprep.mubr.bf16.mxu0 0
      %935 = vmatmul.mubr.bf16.gmra.mrb[0].mxu0 %v699
      %v936 = vpop.f32.mrb[0].mxu0
      %v937 = vadd.f32 0.0, %v936
      %v938 = vpop.f32.mrb[0].mxu0
      %v939 = vpop.f32.mrb[0].mxu0
      %v940 = vadd.f32 0.0, %v939
      %v941 = vpop.f32.mrb[0].mxu0
      %942 = vmatprep.mubr.bf16.mxu0 0
      %943 = vmatmul.mubr.bf16.gmra.mrb[0].mxu0 %v700
      %v944 = vpop.f32.mrb[0].mxu0
      %v945 = vadd.f32 0.0, %v944
      %v946 = vpop.f32.mrb[0].mxu0
      %v947 = vpop.f32.mrb[0].mxu0
      %v948 = vadd.f32 0.0, %v947
      %v949 = vpop.f32.mrb[0].mxu0
      %950 = vmatprep.mubr.bf16.mxu0 0
      %951 = vmatmul.mubr.bf16.gmra.mrb[0].mxu0 %v701
      %v952 = vpop.f32.mrb[0].mxu0
      %v953 = vadd.f32 0.0, %v952
      %v954 = vpop.f32.mrb[0].mxu0
      %v955 = vpop.f32.mrb[0].mxu0
      %v956 = vadd.f32 0.0, %v955
      %v957 = vpop.f32.mrb[0].mxu0
      %958 = vmatprep.mubr.bf16.mxu0 0
      %959 = vmatmul.mubr.bf16.gmra.mrb[0].mxu0 %v702
      %v960 = vpop.f32.mrb[0].mxu0
      %v961 = vadd.f32 0.0, %v960
      %v962 = vpop.f32.mrb[0].mxu0
      %v963 = vpop.f32.mrb[0].mxu0
      %v964 = vadd.f32 0.0, %v963
      %v965 = vpop.f32.mrb[0].mxu0
      %966 = vmatprep.mubr.bf16.mxu0 0
      %967 = vmatmul.mubr.bf16.gmra.mrb[0].mxu0 %v703
      %v968 = vpop.f32.mrb[0].mxu0
      %v969 = vadd.f32 0.0, %v968
      %v970 = vpop.f32.mrb[0].mxu0
      %v971 = vpop.f32.mrb[0].mxu0
      %v972 = vadd.f32 0.0, %v971
      %v973 = vpop.f32.mrb[0].mxu0
      %974 = vmatprep.mubr.bf16.mxu0 0
      %975 = vmatmul.mubr.bf16.gmra.mrb[0].mxu0 %v704
      %v976 = vpop.f32.mrb[0].mxu0
      %v977 = vadd.f32 0.0, %v976
      %v978 = vpop.f32.mrb[0].mxu0
      %v979 = vpop.f32.mrb[0].mxu0
      %v980 = vadd.f32 0.0, %v979
      %v981 = vpop.f32.mrb[0].mxu0
      %982 = vmatprep.mubr.bf16.mxu0 0
      %983 = vmatmul.mubr.bf16.gmra.mrb[0].mxu0 %v705
      %v984 = vpop.f32.mrb[0].mxu0
      %v985 = vadd.f32 0.0, %v984
      %v986 = vpop.f32.mrb[0].mxu0
      %v987 = vpop.f32.mrb[0].mxu0
      %v988 = vadd.f32 0.0, %v987
      %v989 = vpop.f32.mrb[0].mxu0
      %990 = vmatprep.mubr.bf16.mxu0 0
      %991 = vmatmul.mubr.bf16.gmra.mrb[0].mxu0 %v706
      %v992 = vpop.f32.mrb[0].mxu0
      %v993 = vadd.f32 0.0, %v992
      %v994 = vpop.f32.mrb[0].mxu0
      %v995 = vpop.f32.mrb[0].mxu0
      %v996 = vadd.f32 0.0, %v995
      %v997 = vpop.f32.mrb[0].mxu0
      %998 = vmatprep.mubr.bf16.mxu0 0
      %999 = vmatmul.mubr.bf16.gmra.mrb[0].mxu0 %v707
      %v1000 = vpop.f32.mrb[0].mxu0
      %v1001 = vadd.f32 0.0, %v1000
      %v1002 = vpop.f32.mrb[0].mxu0
      %v1003 = vpop.f32.mrb[0].mxu0
      %v1004 = vadd.f32 0.0, %v1003
      %v1005 = vpop.f32.mrb[0].mxu0
      %1006 = vmatprep.mubr.bf16.mxu0 0
      %1007 = vmatmul.mubr.bf16.gmra.mrb[0].mxu0 %v708
      %v1008 = vpop.f32.mrb[0].mxu0
      %v1009 = vadd.f32 0.0, %v1008
      %v1010 = vpop.f32.mrb[0].mxu0
      %v1011 = vpop.f32.mrb[0].mxu0
      %v1012 = vadd.f32 0.0, %v1011
      %v1013 = vpop.f32.mrb[0].mxu0
      %1014 = vmatprep.mubr.bf16.mxu0 0
      %1015 = vmatmul.mubr.bf16.gmra.mrb[0].mxu0 %v709
      %v1016 = vpop.f32.mrb[0].mxu0
      %v1017 = vadd.f32 0.0, %v1016
      %v1018 = vpop.f32.mrb[0].mxu0
      %v1019 = vpop.f32.mrb[0].mxu0
      %v1020 = vadd.f32 0.0, %v1019
      %v1021 = vpop.f32.mrb[0].mxu0
      %1022 = vmatprep.mubr.bf16.mxu0 0
      %1023 = vmatmul.mubr.bf16.gmra.mrb[0].mxu0 %v710
      %v1024 = vpop.f32.mrb[0].mxu0
      %v1025 = vadd.f32 0.0, %v1024
      %v1026 = vpop.f32.mrb[0].mxu0
      %v1027 = vpop.f32.mrb[0].mxu0
      %v1028 = vadd.f32 0.0, %v1027
      %v1029 = vpop.f32.mrb[0].mxu0
      %1030 = vmatprep.mubr.bf16.mxu0 0
      %1031 = vmatmul.mubr.bf16.gmra.mrb[0].mxu0 %v711
      %v1032 = vpop.f32.mrb[0].mxu0
      %v1033 = vadd.f32 0.0, %v1032
      %v1034 = vpop.f32.mrb[0].mxu0
      %v1035 = vpop.f32.mrb[0].mxu0
      %v1036 = vadd.f32 0.0, %v1035
      %v1037 = vpop.f32.mrb[0].mxu0
      %1038 = vmatprep.mubr.bf16.mxu0 0
      %1039 = vmatmul.mubr.bf16.gmra.mrb[0].mxu0 %v712
      %v1040 = vpop.f32.mrb[0].mxu0
      %v1041 = vadd.f32 0.0, %v1040
      %v1042 = vpop.f32.mrb[0].mxu0
      %v1043 = vpop.f32.mrb[0].mxu0
      %v1044 = vadd.f32 0.0, %v1043
      %v1045 = vpop.f32.mrb[0].mxu0
      %1046 = vmatprep.mubr.bf16.mxu0 0
      %1047 = vmatmul.mubr.bf16.gmra.mrb[0].mxu0 %v713
      %v1048 = vpop.f32.mrb[0].mxu0
      %v1049 = vadd.f32 0.0, %v1048
      %v1050 = vpop.f32.mrb[0].mxu0
      %v1051 = vpop.f32.mrb[0].mxu0
      %v1052 = vadd.f32 0.0, %v1051
      %v1053 = vpop.f32.mrb[0].mxu0
      %1054 = vmatprep.mubr.bf16.mxu0 0
      %1055 = vmatmul.mubr.bf16.gmra.mrb[0].mxu0 %v714
      %v1056 = vpop.f32.mrb[0].mxu0
      %v1057 = vadd.f32 0.0, %v1056
      %v1058 = vpop.f32.mrb[0].mxu0
      %v1059 = vpop.f32.mrb[0].mxu0
      %v1060 = vadd.f32 0.0, %v1059
      %v1061 = vpop.f32.mrb[0].mxu0
      %1062 = vmatprep.mubr.bf16.mxu0 0
      %1063 = vmatmul.mubr.bf16.gmra.mrb[0].mxu0 %v715
      %v1064 = vpop.f32.mrb[0].mxu0
      %v1065 = vadd.f32 0.0, %v1064
      %v1066 = vpop.f32.mrb[0].mxu0
      %v1067 = vpop.f32.mrb[0].mxu0
      %v1068 = vadd.f32 0.0, %v1067
      %v1069 = vpop.f32.mrb[0].mxu0
      %1070 = vmatprep.mubr.bf16.mxu0 0
      %1071 = vmatmul.mubr.bf16.gmra.mrb[0].mxu0 %v716
      %v1072 = vpop.f32.mrb[0].mxu0
      %v1073 = vadd.f32 0.0, %v1072
      %v1074 = vpop.f32.mrb[0].mxu0
      %v1075 = vpop.f32.mrb[0].mxu0
      %v1076 = vadd.f32 0.0, %v1075
      %v1077 = vpop.f32.mrb[0].mxu0
      %1078 = vmatprep.mubr.bf16.mxu0 0
      %1079 = vmatmul.mubr.bf16.gmra.mrb[0].mxu0 %v717
      %v1080 = vpop.f32.mrb[0].mxu0
      %v1081 = vadd.f32 0.0, %v1080
      %v1082 = vpop.f32.mrb[0].mxu0
      %v1083 = vpop.f32.mrb[0].mxu0
      %v1084 = vadd.f32 0.0, %v1083
      %v1085 = vpop.f32.mrb[0].mxu0
      %1086 = vdwg.mxu0
      %v1087 = vadd.f32 %v414, %v833
      %v1088 = vadd.f32 %v415, %v836
      %v1089 = vadd.f32 %v416, %v841
      %v1090 = vadd.f32 %v417, %v844
      %v1091 = vadd.f32 %v418, %v849
      %v1092 = vadd.f32 %v419, %v852
      %v1093 = vadd.f32 %v420, %v857
      %v1094 = vadd.f32 %v421, %v860
      %v1095 = vadd.f32 %v422, %v865
      %v1096 = vadd.f32 %v423, %v868
      %v1097 = vadd.f32 %v424, %v873
      %v1098 = vadd.f32 %v425, %v876
      %v1099 = vadd.f32 %v426, %v881
      %v1100 = vadd.f32 %v427, %v884
      %v1101 = vadd.f32 %v428, %v889
      %v1102 = vadd.f32 %v429, %v892
      %v1103 = vadd.f32 %v430, %v897
      %v1104 = vadd.f32 %v431, %v900
      %v1105 = vadd.f32 %v432, %v905
      %v1106 = vadd.f32 %v433, %v908
      %v1107 = vadd.f32 %v434, %v913
      %v1108 = vadd.f32 %v435, %v916
      %v1109 = vadd.f32 %v436, %v921
      %v1110 = vadd.f32 %v437, %v924
      %v1111 = vadd.f32 %v438, %v929
      %v1112 = vadd.f32 %v439, %v932
      %v1113 = vadd.f32 %v440, %v937
      %v1114 = vadd.f32 %v441, %v940
      %v1115 = vadd.f32 %v442, %v945
      %v1116 = vadd.f32 %v443, %v948
      %v1117 = vadd.f32 %v444, %v953
      %v1118 = vadd.f32 %v445, %v956
      %v1119 = vadd.f32 %v446, %v961
      %v1120 = vadd.f32 %v447, %v964
      %v1121 = vadd.f32 %v448, %v969
      %v1122 = vadd.f32 %v449, %v972
      %v1123 = vadd.f32 %v450, %v977
      %v1124 = vadd.f32 %v451, %v980
      %v1125 = vadd.f32 %v452, %v985
      %v1126 = vadd.f32 %v453, %v988
      %v1127 = vadd.f32 %v454, %v993
      %v1128 = vadd.f32 %v455, %v996
      %v1129 = vadd.f32 %v456, %v1001
      %v1130 = vadd.f32 %v457, %v1004
      %v1131 = vadd.f32 %v458, %v1009
      %v1132 = vadd.f32 %v459, %v1012
      %v1133 = vadd.f32 %v460, %v1017
      %v1134 = vadd.f32 %v461, %v1020
      %v1135 = vadd.f32 %v462, %v1025
      %v1136 = vadd.f32 %v463, %v1028
      %v1137 = vadd.f32 %v464, %v1033
      %v1138 = vadd.f32 %v465, %v1036
      %v1139 = vadd.f32 %v466, %v1041
      %v1140 = vadd.f32 %v467, %v1044
      %v1141 = vadd.f32 %v468, %v1049
      %v1142 = vadd.f32 %v469, %v1052
      %v1143 = vadd.f32 %v470, %v1057
      %v1144 = vadd.f32 %v471, %v1060
      %v1145 = vadd.f32 %v472, %v1065
      %v1146 = vadd.f32 %v473, %v1068
      %v1147 = vadd.f32 %v474, %v1073
      %v1148 = vadd.f32 %v475, %v1076
      %v1149 = vadd.f32 %v476, %v1081
      %v1150 = vadd.f32 %v477, %v1084
      %1151 = vst [vmem:[#allocation2] sm:$0xff] %v1087
      %1152 = vst [vmem:[#allocation2 + $0x8] sm:$0xff] %v1088
      %1153 = vst [vmem:[#allocation2 + $0x10] sm:$0xff] %v1089
      %1154 = vst [vmem:[#allocation2 + $0x18] sm:$0xff] %v1090
      %1155 = vst [vmem:[#allocation2 + $0x20] sm:$0xff] %v1091
      %1156 = vst [vmem:[#allocation2 + $0x28] sm:$0xff] %v1092
      %1157 = vst [vmem:[#allocation2 + $0x30] sm:$0xff] %v1093
      %1158 = vst [vmem:[#allocation2 + $0x38] sm:$0xff] %v1094
      %1159 = vst [vmem:[#allocation2 + $0x40] sm:$0xff] %v1095
      %1160 = vst [vmem:[#allocation2 + $0x48] sm:$0xff] %v1096
      %1161 = vst [vmem:[#allocation2 + $0x50] sm:$0xff] %v1097
      %1162 = vst [vmem:[#allocation2 + $0x58] sm:$0xff] %v1098
      %1163 = vst [vmem:[#allocation2 + $0x60] sm:$0xff] %v1099
      %1164 = vst [vmem:[#allocation2 + $0x68] sm:$0xff] %v1100
      %1165 = vst [vmem:[#allocation2 + $0x70] sm:$0xff] %v1101
      %1166 = vst [vmem:[#allocation2 + $0x78] sm:$0xff] %v1102
      %1167 = vst [vmem:[#allocation2 + $0x80] sm:$0xff] %v1103
      %1168 = vst [vmem:[#allocation2 + $0x88] sm:$0xff] %v1104
      %1169 = vst [vmem:[#allocation2 + $0x90] sm:$0xff] %v1105
      %1170 = vst [vmem:[#allocation2 + $0x98] sm:$0xff] %v1106
      %1171 = vst [vmem:[#allocation2 + $0xa0] sm:$0xff] %v1107
      %1172 = vst [vmem:[#allocation2 + $0xa8] sm:$0xff] %v1108
      %1173 = vst [vmem:[#allocation2 + $0xb0] sm:$0xff] %v1109
      %1174 = vst [vmem:[#allocation2 + $0xb8] sm:$0xff] %v1110
      %1175 = vst [vmem:[#allocation2 + $0xc0] sm:$0xff] %v1111
      %1176 = vst [vmem:[#allocation2 + $0xc8] sm:$0xff] %v1112
      %1177 = vst [vmem:[#allocation2 + $0xd0] sm:$0xff] %v1113
      %1178 = vst [vmem:[#allocation2 + $0xd8] sm:$0xff] %v1114
      %1179 = vst [vmem:[#allocation2 + $0xe0] sm:$0xff] %v1115
      %1180 = vst [vmem:[#allocation2 + $0xe8] sm:$0xff] %v1116
      %1181 = vst [vmem:[#allocation2 + $0xf0] sm:$0xff] %v1117
      %1182 = vst [vmem:[#allocation2 + $0xf8] sm:$0xff] %v1118
      %1183 = vst [vmem:[#allocation2 + $0x100] sm:$0xff] %v1119
      %1184 = vst [vmem:[#allocation2 + $0x108] sm:$0xff] %v1120
      %1185 = vst [vmem:[#allocation2 + $0x110] sm:$0xff] %v1121
      %1186 = vst [vmem:[#allocation2 + $0x118] sm:$0xff] %v1122
      %1187 = vst [vmem:[#allocation2 + $0x120] sm:$0xff] %v1123
      %1188 = vst [vmem:[#allocation2 + $0x128] sm:$0xff] %v1124
      %1189 = vst [vmem:[#allocation2 + $0x130] sm:$0xff] %v1125
      %1190 = vst [vmem:[#allocation2 + $0x138] sm:$0xff] %v1126
      %1191 = vst [vmem:[#allocation2 + $0x140] sm:$0xff] %v1127
      %1192 = vst [vmem:[#allocation2 + $0x148] sm:$0xff] %v1128
      %1193 = vst [vmem:[#allocation2 + $0x150] sm:$0xff] %v1129
      %1194 = vst [vmem:[#allocation2 + $0x158] sm:$0xff] %v1130
      %1195 = vst [vmem:[#allocation2 + $0x160] sm:$0xff] %v1131
      %1196 = vst [vmem:[#allocation2 + $0x168] sm:$0xff] %v1132
      %1197 = vst [vmem:[#allocation2 + $0x170] sm:$0xff] %v1133
      %1198 = vst [vmem:[#allocation2 + $0x178] sm:$0xff] %v1134
      %1199 = vst [vmem:[#allocation2 + $0x180] sm:$0xff] %v1135
      %1200 = vst [vmem:[#allocation2 + $0x188] sm:$0xff] %v1136
      %1201 = vst [vmem:[#allocation2 + $0x190] sm:$0xff] %v1137
      %1202 = vst [vmem:[#allocation2 + $0x198] sm:$0xff] %v1138
      %1203 = vst [vmem:[#allocation2 + $0x1a0] sm:$0xff] %v1139
      %1204 = vst [vmem:[#allocation2 + $0x1a8] sm:$0xff] %v1140
      %1205 = vst [vmem:[#allocation2 + $0x1b0] sm:$0xff] %v1141
      %1206 = vst [vmem:[#allocation2 + $0x1b8] sm:$0xff] %v1142
      %1207 = vst [vmem:[#allocation2 + $0x1c0] sm:$0xff] %v1143
      %1208 = vst [vmem:[#allocation2 + $0x1c8] sm:$0xff] %v1144
      %1209 = vst [vmem:[#allocation2 + $0x1d0] sm:$0xff] %v1145
      %1210 = vst [vmem:[#allocation2 + $0x1d8] sm:$0xff] %v1146
      %1211 = vst [vmem:[#allocation2 + $0x1e0] sm:$0xff] %v1147
      %1212 = vst [vmem:[#allocation2 + $0x1e8] sm:$0xff] %v1148
      %1213 = vst [vmem:[#allocation2 + $0x1f0] sm:$0xff] %v1149
      %1214 = vst [vmem:[#allocation2 + $0x1f8] sm:$0xff] %v1150
      // Predicated region
      $region41: #{_lambda_.7} parent=35 // pred_check
        %p1215 = pneg %p346
      $region42: #{_lambda_.7} parent=35 // pred_check_branch
        %1217 = sbr.rel (%p1215) target = $region44
      $region43: #{_lambda_.7} parent=35 // pred_region
        %v1218 = vld [vmem:[#allocation2] sm:$0xff]
        %v1219 = vld [vmem:[#allocation2 + $0x8] sm:$0xff]
        %v1220 = vld [vmem:[#allocation2 + $0x10] sm:$0xff]
        %v1221 = vld [vmem:[#allocation2 + $0x18] sm:$0xff]
        %v1222 = vld [vmem:[#allocation2 + $0x20] sm:$0xff]
        %v1223 = vld [vmem:[#allocation2 + $0x28] sm:$0xff]
        %v1224 = vld [vmem:[#allocation2 + $0x30] sm:$0xff]
        %v1225 = vld [vmem:[#allocation2 + $0x38] sm:$0xff]
        %v1226 = vld [vmem:[#allocation2 + $0x40] sm:$0xff]
        %v1227 = vld [vmem:[#allocation2 + $0x48] sm:$0xff]
        %v1228 = vld [vmem:[#allocation2 + $0x50] sm:$0xff]
        %v1229 = vld [vmem:[#allocation2 + $0x58] sm:$0xff]
        %v1230 = vld [vmem:[#allocation2 + $0x60] sm:$0xff]
        %v1231 = vld [vmem:[#allocation2 + $0x68] sm:$0xff]
        %v1232 = vld [vmem:[#allocation2 + $0x70] sm:$0xff]
        %v1233 = vld [vmem:[#allocation2 + $0x78] sm:$0xff]
        %v1234 = vld [vmem:[#allocation2 + $0x80] sm:$0xff]
        %v1235 = vld [vmem:[#allocation2 + $0x88] sm:$0xff]
        %v1236 = vld [vmem:[#allocation2 + $0x90] sm:$0xff]
        %v1237 = vld [vmem:[#allocation2 + $0x98] sm:$0xff]
        %v1238 = vld [vmem:[#allocation2 + $0xa0] sm:$0xff]
        %v1239 = vld [vmem:[#allocation2 + $0xa8] sm:$0xff]
        %v1240 = vld [vmem:[#allocation2 + $0xb0] sm:$0xff]
        %v1241 = vld [vmem:[#allocation2 + $0xb8] sm:$0xff]
        %v1242 = vld [vmem:[#allocation2 + $0xc0] sm:$0xff]
        %v1243 = vld [vmem:[#allocation2 + $0xc8] sm:$0xff]
        %v1244 = vld [vmem:[#allocation2 + $0xd0] sm:$0xff]
        %v1245 = vld [vmem:[#allocation2 + $0xd8] sm:$0xff]
        %v1246 = vld [vmem:[#allocation2 + $0xe0] sm:$0xff]
        %v1247 = vld [vmem:[#allocation2 + $0xe8] sm:$0xff]
        %v1248 = vld [vmem:[#allocation2 + $0xf0] sm:$0xff]
        %v1249 = vld [vmem:[#allocation2 + $0xf8] sm:$0xff]
        %v1250 = vld [vmem:[#allocation2 + $0x100] sm:$0xff]
        %v1251 = vld [vmem:[#allocation2 + $0x108] sm:$0xff]
        %v1252 = vld [vmem:[#allocation2 + $0x110] sm:$0xff]
        %v1253 = vld [vmem:[#allocation2 + $0x118] sm:$0xff]
        %v1254 = vld [vmem:[#allocation2 + $0x120] sm:$0xff]
        %v1255 = vld [vmem:[#allocation2 + $0x128] sm:$0xff]
        %v1256 = vld [vmem:[#allocation2 + $0x130] sm:$0xff]
        %v1257 = vld [vmem:[#allocation2 + $0x138] sm:$0xff]
        %v1258 = vld [vmem:[#allocation2 + $0x140] sm:$0xff]
        %v1259 = vld [vmem:[#allocation2 + $0x148] sm:$0xff]
        %v1260 = vld [vmem:[#allocation2 + $0x150] sm:$0xff]
        %v1261 = vld [vmem:[#allocation2 + $0x158] sm:$0xff]
        %v1262 = vld [vmem:[#allocation2 + $0x160] sm:$0xff]
        %v1263 = vld [vmem:[#allocation2 + $0x168] sm:$0xff]
        %v1264 = vld [vmem:[#allocation2 + $0x170] sm:$0xff]
        %v1265 = vld [vmem:[#allocation2 + $0x178] sm:$0xff]
        %v1266 = vld [vmem:[#allocation2 + $0x180] sm:$0xff]
        %v1267 = vld [vmem:[#allocation2 + $0x188] sm:$0xff]
        %v1268 = vld [vmem:[#allocation2 + $0x190] sm:$0xff]
        %v1269 = vld [vmem:[#allocation2 + $0x198] sm:$0xff]
        %v1270 = vld [vmem:[#allocation2 + $0x1a0] sm:$0xff]
        %v1271 = vld [vmem:[#allocation2 + $0x1a8] sm:$0xff]
        %v1272 = vld [vmem:[#allocation2 + $0x1b0] sm:$0xff]
        %v1273 = vld [vmem:[#allocation2 + $0x1b8] sm:$0xff]
        %v1274 = vld [vmem:[#allocation2 + $0x1c0] sm:$0xff]
        %v1275 = vld [vmem:[#allocation2 + $0x1c8] sm:$0xff]
        %v1276 = vld [vmem:[#allocation2 + $0x1d0] sm:$0xff]
        %v1277 = vld [vmem:[#allocation2 + $0x1d8] sm:$0xff]
        %v1278 = vld [vmem:[#allocation2 + $0x1e0] sm:$0xff]
        %v1279 = vld [vmem:[#allocation2 + $0x1e8] sm:$0xff]
        %v1280 = vld [vmem:[#allocation2 + $0x1f0] sm:$0xff]
        %v1281 = vld [vmem:[#allocation2 + $0x1f8] sm:$0xff]
        %v1282 = vld [vmem:[%s328] sm:$0x1]
        %v1284 = vlaneseq
        %v1285 = vshrl.u32 %v1284, 7
        %v1286 = vsub.s32 0, %v1285
        %v1287 = vrot.slane %v1282, %v1286
        %v1289 = vmul.f32 %v1218, %v1287
        %v1290 = vmul.f32 %v1219, %v1287
        %v1291 = vmul.f32 %v1220, %v1287
        %v1292 = vmul.f32 %v1221, %v1287
        %v1293 = vmul.f32 %v1222, %v1287
        %v1294 = vmul.f32 %v1223, %v1287
        %v1295 = vmul.f32 %v1224, %v1287
        %v1296 = vmul.f32 %v1225, %v1287
        %v1297 = vmul.f32 %v1226, %v1287
        %v1298 = vmul.f32 %v1227, %v1287
        %v1299 = vmul.f32 %v1228, %v1287
        %v1300 = vmul.f32 %v1229, %v1287
        %v1301 = vmul.f32 %v1230, %v1287
        %v1302 = vmul.f32 %v1231, %v1287
        %v1303 = vmul.f32 %v1232, %v1287
        %v1304 = vmul.f32 %v1233, %v1287
        %v1305 = vmul.f32 %v1234, %v1287
        %v1306 = vmul.f32 %v1235, %v1287
        %v1307 = vmul.f32 %v1236, %v1287
        %v1308 = vmul.f32 %v1237, %v1287
        %v1309 = vmul.f32 %v1238, %v1287
        %v1310 = vmul.f32 %v1239, %v1287
        %v1311 = vmul.f32 %v1240, %v1287
        %v1312 = vmul.f32 %v1241, %v1287
        %v1313 = vmul.f32 %v1242, %v1287
        %v1314 = vmul.f32 %v1243, %v1287
        %v1315 = vmul.f32 %v1244, %v1287
        %v1316 = vmul.f32 %v1245, %v1287
        %v1317 = vmul.f32 %v1246, %v1287
        %v1318 = vmul.f32 %v1247, %v1287
        %v1319 = vmul.f32 %v1248, %v1287
        %v1320 = vmul.f32 %v1249, %v1287
        %v1321 = vmul.f32 %v1250, %v1287
        %v1322 = vmul.f32 %v1251, %v1287
        %v1323 = vmul.f32 %v1252, %v1287
        %v1324 = vmul.f32 %v1253, %v1287
        %v1325 = vmul.f32 %v1254, %v1287
        %v1326 = vmul.f32 %v1255, %v1287
        %v1327 = vmul.f32 %v1256, %v1287
        %v1328 = vmul.f32 %v1257, %v1287
        %v1329 = vmul.f32 %v1258, %v1287
        %v1330 = vmul.f32 %v1259, %v1287
        %v1331 = vmul.f32 %v1260, %v1287
        %v1332 = vmul.f32 %v1261, %v1287
        %v1333 = vmul.f32 %v1262, %v1287
        %v1334 = vmul.f32 %v1263, %v1287
        %v1335 = vmul.f32 %v1264, %v1287
        %v1336 = vmul.f32 %v1265, %v1287
        %v1337 = vmul.f32 %v1266, %v1287
        %v1338 = vmul.f32 %v1267, %v1287
        %v1339 = vmul.f32 %v1268, %v1287
        %v1340 = vmul.f32 %v1269, %v1287
        %v1341 = vmul.f32 %v1270, %v1287
        %v1342 = vmul.f32 %v1271, %v1287
        %v1343 = vmul.f32 %v1272, %v1287
        %v1344 = vmul.f32 %v1273, %v1287
        %v1345 = vmul.f32 %v1274, %v1287
        %v1346 = vmul.f32 %v1275, %v1287
        %v1347 = vmul.f32 %v1276, %v1287
        %v1348 = vmul.f32 %v1277, %v1287
        %v1349 = vmul.f32 %v1278, %v1287
        %v1350 = vmul.f32 %v1279, %v1287
        %v1351 = vmul.f32 %v1280, %v1287
        %v1352 = vmul.f32 %v1281, %v1287
        %v1353 = vld [vmem:[%s331] sm:$0x1]
        %v1355 = vlaneseq
        %v1356 = vshrl.u32 %v1355, 7
        %v1357 = vsub.s32 0, %v1356
        %v1358 = vrot.slane %v1353, %v1357
        %v1360 = vadd.f32 %v1289, %v1358
        %v1361 = vadd.f32 %v1290, %v1358
        %v1362 = vadd.f32 %v1291, %v1358
        %v1363 = vadd.f32 %v1292, %v1358
        %v1364 = vadd.f32 %v1293, %v1358
        %v1365 = vadd.f32 %v1294, %v1358
        %v1366 = vadd.f32 %v1295, %v1358
        %v1367 = vadd.f32 %v1296, %v1358
        %v1368 = vadd.f32 %v1297, %v1358
        %v1369 = vadd.f32 %v1298, %v1358
        %v1370 = vadd.f32 %v1299, %v1358
        %v1371 = vadd.f32 %v1300, %v1358
        %v1372 = vadd.f32 %v1301, %v1358
        %v1373 = vadd.f32 %v1302, %v1358
        %v1374 = vadd.f32 %v1303, %v1358
        %v1375 = vadd.f32 %v1304, %v1358
        %v1376 = vadd.f32 %v1305, %v1358
        %v1377 = vadd.f32 %v1306, %v1358
        %v1378 = vadd.f32 %v1307, %v1358
        %v1379 = vadd.f32 %v1308, %v1358
        %v1380 = vadd.f32 %v1309, %v1358
        %v1381 = vadd.f32 %v1310, %v1358
        %v1382 = vadd.f32 %v1311, %v1358
        %v1383 = vadd.f32 %v1312, %v1358
        %v1384 = vadd.f32 %v1313, %v1358
        %v1385 = vadd.f32 %v1314, %v1358
        %v1386 = vadd.f32 %v1315, %v1358
        %v1387 = vadd.f32 %v1316, %v1358
        %v1388 = vadd.f32 %v1317, %v1358
        %v1389 = vadd.f32 %v1318, %v1358
        %v1390 = vadd.f32 %v1319, %v1358
        %v1391 = vadd.f32 %v1320, %v1358
        %v1392 = vadd.f32 %v1321, %v1358
        %v1393 = vadd.f32 %v1322, %v1358
        %v1394 = vadd.f32 %v1323, %v1358
        %v1395 = vadd.f32 %v1324, %v1358
        %v1396 = vadd.f32 %v1325, %v1358
        %v1397 = vadd.f32 %v1326, %v1358
        %v1398 = vadd.f32 %v1327, %v1358
        %v1399 = vadd.f32 %v1328, %v1358
        %v1400 = vadd.f32 %v1329, %v1358
        %v1401 = vadd.f32 %v1330, %v1358
        %v1402 = vadd.f32 %v1331, %v1358
        %v1403 = vadd.f32 %v1332, %v1358
        %v1404 = vadd.f32 %v1333, %v1358
        %v1405 = vadd.f32 %v1334, %v1358
        %v1406 = vadd.f32 %v1335, %v1358
        %v1407 = vadd.f32 %v1336, %v1358
        %v1408 = vadd.f32 %v1337, %v1358
        %v1409 = vadd.f32 %v1338, %v1358
        %v1410 = vadd.f32 %v1339, %v1358
        %v1411 = vadd.f32 %v1340, %v1358
        %v1412 = vadd.f32 %v1341, %v1358
        %v1413 = vadd.f32 %v1342, %v1358
        %v1414 = vadd.f32 %v1343, %v1358
        %v1415 = vadd.f32 %v1344, %v1358
        %v1416 = vadd.f32 %v1345, %v1358
        %v1417 = vadd.f32 %v1346, %v1358
        %v1418 = vadd.f32 %v1347, %v1358
        %v1419 = vadd.f32 %v1348, %v1358
        %v1420 = vadd.f32 %v1349, %v1358
        %v1421 = vadd.f32 %v1350, %v1358
        %v1422 = vadd.f32 %v1351, %v1358
        %v1423 = vadd.f32 %v1352, %v1358
        %v1424 = vtanh.pop %v1360
        %v1425 = vtanh.pop %v1361
        %v1426 = vtanh.pop %v1362
        %v1427 = vtanh.pop %v1363
        %v1428 = vtanh.pop %v1364
        %v1429 = vtanh.pop %v1365
        %v1430 = vtanh.pop %v1366
        %v1431 = vtanh.pop %v1367
        %v1432 = vtanh.pop %v1368
        %v1433 = vtanh.pop %v1369
        %v1434 = vtanh.pop %v1370
        %v1435 = vtanh.pop %v1371
        %v1436 = vtanh.pop %v1372
        %v1437 = vtanh.pop %v1373
        %v1438 = vtanh.pop %v1374
        %v1439 = vtanh.pop %v1375
        %v1440 = vtanh.pop %v1376
        %v1441 = vtanh.pop %v1377
        %v1442 = vtanh.pop %v1378
        %v1443 = vtanh.pop %v1379
        %v1444 = vtanh.pop %v1380
        %v1445 = vtanh.pop %v1381
        %v1446 = vtanh.pop %v1382
        %v1447 = vtanh.pop %v1383
        %v1448 = vtanh.pop %v1384
        %v1449 = vtanh.pop %v1385
        %v1450 = vtanh.pop %v1386
        %v1451 = vtanh.pop %v1387
        %v1452 = vtanh.pop %v1388
        %v1453 = vtanh.pop %v1389
        %v1454 = vtanh.pop %v1390
        %v1455 = vtanh.pop %v1391
        %v1456 = vtanh.pop %v1392
        %v1457 = vtanh.pop %v1393
        %v1458 = vtanh.pop %v1394
        %v1459 = vtanh.pop %v1395
        %v1460 = vtanh.pop %v1396
        %v1461 = vtanh.pop %v1397
        %v1462 = vtanh.pop %v1398
        %v1463 = vtanh.pop %v1399
        %v1464 = vtanh.pop %v1400
        %v1465 = vtanh.pop %v1401
        %v1466 = vtanh.pop %v1402
        %v1467 = vtanh.pop %v1403
        %v1468 = vtanh.pop %v1404
        %v1469 = vtanh.pop %v1405
        %v1470 = vtanh.pop %v1406
        %v1471 = vtanh.pop %v1407
        %v1472 = vtanh.pop %v1408
        %v1473 = vtanh.pop %v1409
        %v1474 = vtanh.pop %v1410
        %v1475 = vtanh.pop %v1411
        %v1476 = vtanh.pop %v1412
        %v1477 = vtanh.pop %v1413
        %v1478 = vtanh.pop %v1414
        %v1479 = vtanh.pop %v1415
        %v1480 = vtanh.pop %v1416
        %v1481 = vtanh.pop %v1417
        %v1482 = vtanh.pop %v1418
        %v1483 = vtanh.pop %v1419
        %v1484 = vtanh.pop %v1420
        %v1485 = vtanh.pop %v1421
        %v1486 = vtanh.pop %v1422
        %v1487 = vtanh.pop %v1423
        %1488 = vst [vmem:[%s343] sm:$0xff] %v1424
        %1489 = vst [vmem:[%s343 + $0x8] sm:$0xff] %v1425
        %1490 = vst [vmem:[%s343 + $0x10] sm:$0xff] %v1426
        %1491 = vst [vmem:[%s343 + $0x18] sm:$0xff] %v1427
        %1492 = vst [vmem:[%s343 + $0x20] sm:$0xff] %v1428
        %1493 = vst [vmem:[%s343 + $0x28] sm:$0xff] %v1429
        %1494 = vst [vmem:[%s343 + $0x30] sm:$0xff] %v1430
        %1495 = vst [vmem:[%s343 + $0x38] sm:$0xff] %v1431
        %1496 = vst [vmem:[%s343 + $0x40] sm:$0xff] %v1432
        %1497 = vst [vmem:[%s343 + $0x48] sm:$0xff] %v1433
        %1498 = vst [vmem:[%s343 + $0x50] sm:$0xff] %v1434
        %1499 = vst [vmem:[%s343 + $0x58] sm:$0xff] %v1435
        %1500 = vst [vmem:[%s343 + $0x60] sm:$0xff] %v1436
        %1501 = vst [vmem:[%s343 + $0x68] sm:$0xff] %v1437
        %1502 = vst [vmem:[%s343 + $0x70] sm:$0xff] %v1438
        %1503 = vst [vmem:[%s343 + $0x78] sm:$0xff] %v1439
        %1504 = vst [vmem:[%s343 + $0x80] sm:$0xff] %v1440
        %1505 = vst [vmem:[%s343 + $0x88] sm:$0xff] %v1441
        %1506 = vst [vmem:[%s343 + $0x90] sm:$0xff] %v1442
        %1507 = vst [vmem:[%s343 + $0x98] sm:$0xff] %v1443
        %1508 = vst [vmem:[%s343 + $0xa0] sm:$0xff] %v1444
        %1509 = vst [vmem:[%s343 + $0xa8] sm:$0xff] %v1445
        %1510 = vst [vmem:[%s343 + $0xb0] sm:$0xff] %v1446
        %1511 = vst [vmem:[%s343 + $0xb8] sm:$0xff] %v1447
        %1512 = vst [vmem:[%s343 + $0xc0] sm:$0xff] %v1448
        %1513 = vst [vmem:[%s343 + $0xc8] sm:$0xff] %v1449
        %1514 = vst [vmem:[%s343 + $0xd0] sm:$0xff] %v1450
        %1515 = vst [vmem:[%s343 + $0xd8] sm:$0xff] %v1451
        %1516 = vst [vmem:[%s343 + $0xe0] sm:$0xff] %v1452
        %1517 = vst [vmem:[%s343 + $0xe8] sm:$0xff] %v1453
        %1518 = vst [vmem:[%s343 + $0xf0] sm:$0xff] %v1454
        %1519 = vst [vmem:[%s343 + $0xf8] sm:$0xff] %v1455
        %1520 = vst [vmem:[%s343 + $0x100] sm:$0xff] %v1456
        %1521 = vst [vmem:[%s343 + $0x108] sm:$0xff] %v1457
        %1522 = vst [vmem:[%s343 + $0x110] sm:$0xff] %v1458
        %1523 = vst [vmem:[%s343 + $0x118] sm:$0xff] %v1459
        %1524 = vst [vmem:[%s343 + $0x120] sm:$0xff] %v1460
        %1525 = vst [vmem:[%s343 + $0x128] sm:$0xff] %v1461
        %1526 = vst [vmem:[%s343 + $0x130] sm:$0xff] %v1462
        %1527 = vst [vmem:[%s343 + $0x138] sm:$0xff] %v1463
        %1528 = vst [vmem:[%s343 + $0x140] sm:$0xff] %v1464
        %1529 = vst [vmem:[%s343 + $0x148] sm:$0xff] %v1465
        %1530 = vst [vmem:[%s343 + $0x150] sm:$0xff] %v1466
        %1531 = vst [vmem:[%s343 + $0x158] sm:$0xff] %v1467
        %1532 = vst [vmem:[%s343 + $0x160] sm:$0xff] %v1468
        %1533 = vst [vmem:[%s343 + $0x168] sm:$0xff] %v1469
        %1534 = vst [vmem:[%s343 + $0x170] sm:$0xff] %v1470
        %1535 = vst [vmem:[%s343 + $0x178] sm:$0xff] %v1471
        %1536 = vst [vmem:[%s343 + $0x180] sm:$0xff] %v1472
        %1537 = vst [vmem:[%s343 + $0x188] sm:$0xff] %v1473
        %1538 = vst [vmem:[%s343 + $0x190] sm:$0xff] %v1474
        %1539 = vst [vmem:[%s343 + $0x198] sm:$0xff] %v1475
        %1540 = vst [vmem:[%s343 + $0x1a0] sm:$0xff] %v1476
        %1541 = vst [vmem:[%s343 + $0x1a8] sm:$0xff] %v1477
        %1542 = vst [vmem:[%s343 + $0x1b0] sm:$0xff] %v1478
        %1543 = vst [vmem:[%s343 + $0x1b8] sm:$0xff] %v1479
        %1544 = vst [vmem:[%s343 + $0x1c0] sm:$0xff] %v1480
        %1545 = vst [vmem:[%s343 + $0x1c8] sm:$0xff] %v1481
        %1546 = vst [vmem:[%s343 + $0x1d0] sm:$0xff] %v1482
        %1547 = vst [vmem:[%s343 + $0x1d8] sm:$0xff] %v1483
        %1548 = vst [vmem:[%s343 + $0x1e0] sm:$0xff] %v1484
        %1549 = vst [vmem:[%s343 + $0x1e8] sm:$0xff] %v1485
        %1550 = vst [vmem:[%s343 + $0x1f0] sm:$0xff] %v1486
        %1551 = vst [vmem:[%s343 + $0x1f8] sm:$0xff] %v1487
      $region44: #{_lambda_.7} parent=35 // pred_fallthru
        _
      %s1552 = smul.u32 64, %s22
      %p1553 = scmp.lt.s32.totalorder %s21, 3
      %s1554 = scalar_select %p1553, %s21, 3
      %p1555 = scmp.lt.s32.totalorder %s1552, 63
      %s1556 = scalar_select %p1555, %s1552, 63
      %p1557 = scmp.lt.s32.totalorder %s23, 0
      %s1558 = scalar_select %p1557, %s23, 0
      %s1559 = sadd.s32 %s1558, %s1556
      %s1560 = smul.addr %s1554, 64
      %s1561 = sadd.s32 %s1559, %s1560
      %s1562 = smul.addr %s1561, 8
      %s1563 = scalar_lea.vmem %s4, %s1562
      // Predicated region
      $region45: #{_lambda_.7} parent=35 // pred_check
        %p1564 = pneg %p175
      $region46: #{_lambda_.7} parent=35 // pred_check_branch
        %1566 = sbr.rel (%p1564) target = $region48
      $region47: #{_lambda_.7} parent=35 // pred_region
        %s1567 = smul.u32 64, %s22
      $region48: #{_lambda_.7} parent=35 // pred_fallthru
        _
    $region36: #{_lambda_.7} parent=5 // pred_fallthru
      _
    %p1568 = scmp.le.s32.totalorder 2, %s10
    // Predicated region
    $region49: #{_lambda_.7} parent=5 // pred_check
      %p1569 = pneg %p1568
    $region50: #{_lambda_.7} parent=5 // pred_check_branch
      %1571 = sbr.rel (%p1569) target = $region52
    $region51: #{_lambda_.7} parent=5 // pred_region
      %s1572 = ssub.s32 %s10, 2
      // Predicated region
      $region53: #{_lambda_.7} parent=51 // pred_check
        %p1573 = pneg %p181
      $region54: #{_lambda_.7} parent=51 // pred_check_branch
        %1575 = sbr.rel (%p1573) target = $region56
      $region55: #{_lambda_.7} parent=51 // pred_region
        %s1576 = smul.u32 64, %s26
        %p1577 = scmp.lt.s32.totalorder %s25, 3
        %s1578 = scalar_select %p1577, %s25, 3
        %p1579 = scmp.lt.s32.totalorder %s1576, 63
        %s1580 = scalar_select %p1579, %s1576, 63
        %p1581 = scmp.lt.s32.totalorder %s27, 0
        %s1582 = scalar_select %p1581, %s27, 0
        %s1583 = sadd.s32 %s1582, %s1580
        %s1584 = smul.addr %s1578, 64
        %s1585 = sadd.s32 %s1583, %s1584
        %s1586 = smul.addr %s1585, 8
        %s1587 = scalar_lea.vmem %s4, %s1586
      $region56: #{_lambda_.7} parent=51 // pred_fallthru
        _
    $region52: #{_lambda_.7} parent=5 // pred_fallthru
      _
  $region6: #{_lambda_.7} parent=0 // loop_footer
    %s14 = sadd.s32 1, %s10
  $region7: #{_lambda_.7} parent=0 // loop_footer_branch
    %9 = sbr.rel target = $region3
  $region8: #{_lambda_.7} parent=0 // loop_exit
    _

</llo_original>
